<compile_context>
chip_gen: v5e
topology: v5e:2x2
jax: 0.10.0
libtpu: 0.0.40
codegen_flags: <defaults>
</compile_context>

<pallas_src>
import functools

import jax
import jax.numpy as jnp
from jax.experimental import pallas as pl
from jax.experimental.pallas import tpu as pltpu


def _round_up(x, m):
    return pl.cdiv(x, m) * m


# ----------------------------------------------------------------------------
# Pallas kernel 1: fused  out = relu?(x @ w + b)      (used for the 3 convs)
# ----------------------------------------------------------------------------
def _matmul_bias_kernel(x_ref, w_ref, b_ref, o_ref, *, relu):
    acc = jnp.dot(x_ref[...], w_ref[...], preferred_element_type=jnp.float32)
    acc = acc + b_ref[...]
    if relu:
        acc = jnp.maximum(acc, 0.0)
    o_ref[...] = acc.astype(o_ref.dtype)


def matmul_bias(x, w, b2d, *, relu, out_dtype, tm_cap=1024):
    """x: (M, K) bf16, w: (K, N) bf16, b2d: (1, N) f32 -> (M, N) out_dtype."""
    M, K = x.shape
    K2, N = w.shape
    assert K == K2
    tm = min(_round_up(M, 32), tm_cap)          # adaptive row tile
    Mp = _round_up(M, tm)
    if Mp != M:
        x = jnp.pad(x, ((0, Mp - M), (0, 0)))

    out = pl.pallas_call(
        functools.partial(_matmul_bias_kernel, relu=relu),
        out_shape=jax.ShapeDtypeStruct((Mp, N), out_dtype),
        grid=(Mp // tm,),
        in_specs=[
            pl.BlockSpec((tm, K), lambda i: (i, 0)),   # activation row tile
            pl.BlockSpec((K, N), lambda i: (0, 0)),    # full weight (small)
            pl.BlockSpec((1, N), lambda i: (0, 0)),    # bias row
        ],
        out_specs=pl.BlockSpec((tm, N), lambda i: (i, 0)),
        compiler_params=pltpu.CompilerParams(
            dimension_semantics=("parallel",)),
    )(x, w, b2d)
    return out if Mp == M else out[:M]


# ----------------------------------------------------------------------------
# Pallas kernel 2: fused  fc -> ReLU -> (actor|critic) heads in one call
#   out = relu(feat @ fcw + fcb) @ head_w + head_b     (head_w padded to 128 cols)
# ----------------------------------------------------------------------------
def _mlp_heads_kernel(x_ref, fcw_ref, fcb_ref, hw_ref, hb_ref, o_ref):
    h = jnp.dot(x_ref[...], fcw_ref[...], preferred_element_type=jnp.float32)
    h = jnp.maximum(h + fcb_ref[...], 0.0)
    out = jnp.dot(h.astype(hw_ref.dtype), hw_ref[...],
                  preferred_element_type=jnp.float32)
    o_ref[...] = (out + hb_ref[...]).astype(o_ref.dtype)


def mlp_heads(feat, fcw, fcb2d, hw, hb2d, *, tm_cap=256):
    """feat: (M, 1568) bf16 -> (M, n_head) f32 (logits | value | zero padding)."""
    M, K = feat.shape
    Kh, Nh = hw.shape
    Nfc = fcw.shape[1]
    tm = min(_round_up(M, 32), tm_cap)
    Mp = _round_up(M, tm)
    if Mp != M:
        feat = jnp.pad(feat, ((0, Mp - M), (0, 0)))

    out = pl.pallas_call(
        _mlp_heads_kernel,
        out_shape=jax.ShapeDtypeStruct((Mp, Nh), jnp.float32),
        grid=(Mp // tm,),
        in_specs=[
            pl.BlockSpec((tm, K), lambda i: (i, 0)),     # features row tile
            pl.BlockSpec((K, Nfc), lambda i: (0, 0)),    # fc weight (resident)
            pl.BlockSpec((1, Nfc), lambda i: (0, 0)),    # fc bias
            pl.BlockSpec((Kh, Nh), lambda i: (0, 0)),    # fused head weight
            pl.BlockSpec((1, Nh), lambda i: (0, 0)),     # fused head bias
        ],
        out_specs=pl.BlockSpec((tm, Nh), lambda i: (i, 0)),   # lane-dense (128)
        compiler_params=pltpu.CompilerParams(
            dimension_semantics=("parallel",)),
    )(feat, fcw, fcb2d, hw, hb2d)
    return out if Mp == M else out[:M]


# ----------------------------------------------------------------------------
# im2col glue (plain JAX, bf16): NHWC -> (N*OH*OW, KH*KW*C), patch order (kh,kw,c)
# TODO(synk): fold patch extraction into the conv kernel itself (in-kernel
#             strided window reads) to remove the im2col HBM round-trip.
# ----------------------------------------------------------------------------
def im2col(x_nhwc, kh, kw, stride):
    n, h, w, c = x_nhwc.shape
    oh = (h - kh) // stride + 1
    ow = (w - kw) // stride + 1
    patches = []
    for i in range(kh):
        for j in range(kw):
            patches.append(
                x_nhwc[:, i:i + stride * oh:stride, j:j + stride * ow:stride, :])
    p = jnp.stack(patches, axis=3)            # (n, oh, ow, kh*kw, c)
    cols = p.reshape(n * oh * ow, kh * kw * c)
    return cols, (n, oh, ow)


def conv2d_relu(x_nhwc, w_mat, b2d, *, kh, kw, stride):
    """PyTorch-semantics Conv2d (valid padding) + ReLU via im2col + Pallas matmul.

    w_mat is already laid out as (kh*kw*in_c, out_c) bf16 (done outside jit)."""
    cols, (n, oh, ow) = im2col(x_nhwc, kh, kw, stride)
    out = matmul_bias(cols, w_mat, b2d, relu=True, out_dtype=jnp.bfloat16)
    return out.reshape(n, oh, ow, w_mat.shape[1])


# ----------------------------------------------------------------------------
# Parameter init (PyTorch layout) and one-time re-layout for the kernels
# ----------------------------------------------------------------------------
def init_params(key, n_obs, n_acts):
    ks = jax.random.split(key, 12)

    def u(k, shape, fan_in):
        bound = 1.0 / jnp.sqrt(fan_in)
        return jax.random.uniform(k, shape, jnp.float32, -bound, bound)

    return {
        "w1": u(ks[0], (32, n_obs, 8, 8), n_obs * 8 * 8),
        "b1": u(ks[1], (32,), n_obs * 8 * 8),
        "w2": u(ks[2], (64, 32, 4, 4), 32 * 4 * 4),
        "b2": u(ks[3], (64,), 32 * 4 * 4),
        "w3": u(ks[4], (32, 64, 3, 3), 64 * 3 * 3),
        "b3": u(ks[5], (32,), 64 * 3 * 3),
        "fc_w": u(ks[6], (512, 1568), 1568),
        "fc_b": u(ks[7], (512,), 1568),
        "actor_w": u(ks[8], (n_acts, 512), 512),
        "actor_b": u(ks[9], (n_acts,), 512),
        "critic_w": u(ks[10], (1, 512), 512),
        "critic_b": u(ks[11], (1,), 512),
    }


def prepare_params(p, n_acts):
    """One-time (outside jit) re-layout of PyTorch-shaped params for the kernels."""
    def conv_w(w):
        oc, ic, kh, kw = w.shape
        # (oc, ic, kh, kw) -> (kh, kw, ic, oc) -> (kh*kw*ic, oc), matches im2col cols.
        return jnp.transpose(w, (2, 3, 1, 0)).reshape(kh * kw * ic, oc).astype(jnp.bfloat16)

    # fc consumes PyTorch NCHW-flatten features (idx = c*49 + h*7 + w).  We feed
    # NHWC-flatten features (idx = h*7*32 + w*32 + c), so permute fc_w's rows once.
    C, H, W = 32, 7, 7
    fcw_t = p["fc_w"].T                                             # (1568, 512), NCHW row order
    nhwc_to_nchw = (jnp.arange(C)[None, None, :] * (H * W)
                    + jnp.arange(H)[:, None, None] * W
                    + jnp.arange(W)[None, :, None]).reshape(-1)     # (1568,), (h,w,c)-ordered
    fcw_nhwc = fcw_t[nhwc_to_nchw].astype(jnp.bfloat16)

    # Fuse actor + critic into one (512, n_acts+1) matmul, zero-padded to 128
    # output columns so the head kernel's store is lane-dense.
    n_head = max(128, _round_up(n_acts + 1, 128))
    head_w = jnp.concatenate([p["actor_w"].T, p["critic_w"].T], axis=1)   # (512, n_acts+1)
    head_w = jnp.pad(head_w, ((0, 0), (0, n_head - (n_acts + 1)))).astype(jnp.bfloat16)
    head_b = jnp.concatenate([p["actor_b"], p["critic_b"]])
    head_b = jnp.pad(head_b, (0, n_head - (n_acts + 1))).astype(jnp.float32)

    return {
        "w1": conv_w(p["w1"]), "b1": p["b1"].reshape(1, -1).astype(jnp.float32),
        "w2": conv_w(p["w2"]), "b2": p["b2"].reshape(1, -1).astype(jnp.float32),
        "w3": conv_w(p["w3"]), "b3": p["b3"].reshape(1, -1).astype(jnp.float32),
        "fc_w": fcw_nhwc, "fc_b": p["fc_b"].reshape(1, -1).astype(jnp.float32),
        "head_w": head_w, "head_b": head_b.reshape(1, -1),
    }


# ----------------------------------------------------------------------------
# CNNDiscrete forward
# ----------------------------------------------------------------------------
def cnn_discrete_forward(params, s_nchw, sample_key, *, n_acts):
    # NCHW -> NHWC, bf16 operands (f32 accumulation happens inside the kernels).
    x = jnp.transpose(s_nchw, (0, 2, 3, 1)).astype(jnp.bfloat16)

    x = conv2d_relu(x, params["w1"], params["b1"], kh=8, kw=8, stride=4)  # (N,20,20,32)
    x = conv2d_relu(x, params["w2"], params["b2"], kh=4, kw=4, stride=2)  # (N, 9, 9,64)
    x = conv2d_relu(x, params["w3"], params["b3"], kh=3, kw=3, stride=1)  # (N, 7, 7,32)

    # NHWC flatten (fc_w rows were pre-permuted to match PyTorch's NCHW flatten).
    n = x.shape[0]
    feat = x.reshape(n, -1)                                               # (N, 1568) bf16

    # Fused Linear(1568,512)+ReLU -> [actor | critic | zero-pad] in one pallas_call.
    out = mlp_heads(feat, params["fc_w"], params["fc_b"],
                    params["head_w"], params["head_b"])                   # (N, 128) f32
    logits = out[:, :n_acts]
    v = out[:, n_acts:n_acts + 1]

    # Categorical(logits): sample + log_prob  (glue, tiny).
    log_probs_all = logits - jax.scipy.special.logsumexp(
        logits, axis=-1, keepdims=True)
    a = jax.random.categorical(sample_key, logits, axis=-1)
    log_p = jnp.take_along_axis(log_probs_all, a[:, None], axis=-1)[:, 0]

    return a, log_p, v


if __name__ == "__main__":
    n_obs, n_acts, batch = 4, 6, 2
    key = jax.random.PRNGKey(0)
    k_param, k_input, k_sample = jax.random.split(key, 3)

    torch_layout_params = init_params(k_param, n_obs, n_acts)
    params = prepare_params(torch_layout_params, n_acts)   # one-time re-layout, outside jit

    # Linear(1568, 512) pins the spatial size to 84x84 (Atari standard).
    s = jax.random.normal(k_input, (batch, n_obs, 84, 84), jnp.float32)

    fwd = jax.jit(lambda p, x: cnn_discrete_forward(p, x, k_sample, n_acts=n_acts))
    a, log_p, v = fwd(params, s)
    jax.block_until_ready((a, log_p, v))

    assert a.shape == (batch,)
    assert log_p.shape == (batch,)
    assert v.shape == (batch, 1)
    print("KERNEL_OK")
</pallas_src>

<mosaic_0001>
module attributes {stable_mosaic.version = 11 : i64} {
  func.func @_matmul_bias_kernel(%arg0: i32, %arg1: memref<800x256xbf16, #tpu.memory_space<vmem>>, %arg2: memref<256x32xbf16, #tpu.memory_space<vmem>>, %arg3: memref<1x32xf32, #tpu.memory_space<vmem>>, %arg4: memref<800x32xbf16, #tpu.memory_space<vmem>>) attributes {dimension_semantics = [#tpu.dimension_semantics<parallel>], iteration_bounds = array<i64: 1>, scalar_prefetch = 0 : i64, scratch_operands = 0 : i64, tpu.core_type = #tpu.core_type<tc>, window_params = [{transform_indices = @transform_0, window_bounds = array<i64: 800, 256>}, {pipeline_mode = #tpu.pipeline_mode<synchronous>, transform_indices = @transform_1, window_bounds = array<i64: 256, 32>}, {pipeline_mode = #tpu.pipeline_mode<synchronous>, transform_indices = @transform_2, window_bounds = array<i64: 1, 32>}, {transform_indices = @transform_3, window_bounds = array<i64: 800, 32>}]} {
    %c0 = arith.constant 0 : index
    %c0_0 = arith.constant 0 : index
    %0 = vector.load %arg1[%c0, %c0_0] : memref<800x256xbf16, #tpu.memory_space<vmem>>, vector<800x256xbf16>
    %c0_1 = arith.constant 0 : index
    %c0_2 = arith.constant 0 : index
    %1 = vector.load %arg2[%c0_1, %c0_2] : memref<256x32xbf16, #tpu.memory_space<vmem>>, vector<256x32xbf16>
    %cst = arith.constant dense<0.000000e+00> : vector<800x32xf32>
    %2 = tpu.matmul %0, %1, %cst {dimension_numbers = #tpu.dot_dimension_numbers<[1], [0], [0], [1], [0, 0, 1, 1], [], []>} : vector<800x256xbf16>, vector<256x32xbf16>, vector<800x32xf32> -> vector<800x32xf32>
    %c0_3 = arith.constant 0 : index
    %c0_4 = arith.constant 0 : index
    %3 = vector.load %arg3[%c0_3, %c0_4] : memref<1x32xf32, #tpu.memory_space<vmem>>, vector<1x32xf32>
    %4 = vector.broadcast %3 : vector<1x32xf32> to vector<800x32xf32>
    %5 = arith.addf %2, %4 : vector<800x32xf32>
    %cst_5 = arith.constant 0.000000e+00 : f32
    %6 = vector.broadcast %cst_5 : f32 to vector<800x32xf32>
    %7 = arith.maximumf %5, %6 : vector<800x32xf32>
    %8 = arith.truncf %7 : vector<800x32xf32> to vector<800x32xbf16>
    %c0_6 = arith.constant 0 : index
    %c0_7 = arith.constant 0 : index
    %9 = vector.load %arg4[%c0_6, %c0_7] : memref<800x32xbf16, #tpu.memory_space<vmem>>, vector<800x32xbf16>
    tpu.vector_store %arg4[%c0_6, %c0_7], %8 {strides = array<i32>} : memref<800x32xbf16, #tpu.memory_space<vmem>>, vector<800x32xbf16>,
    return
  }
  func.func @transform_0(%arg0: i32) -> (i32, i32) {
    %c0_i32 = arith.constant 0 : i32
    %c0_i32_0 = arith.constant 0 : i32
    return %arg0, %c0_i32 : i32, i32
  }
  func.func @transform_1(%arg0: i32) -> (i32, i32) {
    %c0_i32 = arith.constant 0 : i32
    %c0_i32_0 = arith.constant 0 : i32
    %c0_i32_1 = arith.constant 0 : i32
    return %c0_i32, %c0_i32_0 : i32, i32
  }
  func.func @transform_2(%arg0: i32) -> (i32, i32) {
    %c0_i32 = arith.constant 0 : i32
    %c0_i32_0 = arith.constant 0 : i32
    %c0_i32_1 = arith.constant 0 : i32
    return %c0_i32, %c0_i32_0 : i32, i32
  }
  func.func @transform_3(%arg0: i32) -> (i32, i32) {
    %c0_i32 = arith.constant 0 : i32
    %c0_i32_0 = arith.constant 0 : i32
    return %arg0, %c0_i32 : i32, i32
  }
}

module attributes {stable_mosaic.version = 11 : i64} {
  func.func @_matmul_bias_kernel(%arg0: i32, %arg1: memref<192x512xbf16, #tpu.memory_space<vmem>>, %arg2: memref<512x64xbf16, #tpu.memory_space<vmem>>, %arg3: memref<1x64xf32, #tpu.memory_space<vmem>>, %arg4: memref<192x64xbf16, #tpu.memory_space<vmem>>) attributes {dimension_semantics = [#tpu.dimension_semantics<parallel>], iteration_bounds = array<i64: 1>, scalar_prefetch = 0 : i64, scratch_operands = 0 : i64, tpu.core_type = #tpu.core_type<tc>, window_params = [{transform_indices = @transform_0, window_bounds = array<i64: 192, 512>}, {pipeline_mode = #tpu.pipeline_mode<synchronous>, transform_indices = @transform_1, window_bounds = array<i64: 512, 64>}, {pipeline_mode = #tpu.pipeline_mode<synchronous>, transform_indices = @transform_2, window_bounds = array<i64: 1, 64>}, {transform_indices = @transform_3, window_bounds = array<i64: 192, 64>}]} {
    %c0 = arith.constant 0 : index
    %c0_0 = arith.constant 0 : index
    %0 = vector.load %arg1[%c0, %c0_0] : memref<192x512xbf16, #tpu.memory_space<vmem>>, vector<192x512xbf16>
    %c0_1 = arith.constant 0 : index
    %c0_2 = arith.constant 0 : index
    %1 = vector.load %arg2[%c0_1, %c0_2] : memref<512x64xbf16, #tpu.memory_space<vmem>>, vector<512x64xbf16>
    %cst = arith.constant dense<0.000000e+00> : vector<192x64xf32>
    %2 = tpu.matmul %0, %1, %cst {dimension_numbers = #tpu.dot_dimension_numbers<[1], [0], [0], [1], [0, 0, 1, 1], [], []>} : vector<192x512xbf16>, vector<512x64xbf16>, vector<192x64xf32> -> vector<192x64xf32>
    %c0_3 = arith.constant 0 : index
    %c0_4 = arith.constant 0 : index
    %3 = vector.load %arg3[%c0_3, %c0_4] : memref<1x64xf32, #tpu.memory_space<vmem>>, vector<1x64xf32>
    %4 = vector.broadcast %3 : vector<1x64xf32> to vector<192x64xf32>
    %5 = arith.addf %2, %4 : vector<192x64xf32>
    %cst_5 = arith.constant 0.000000e+00 : f32
    %6 = vector.broadcast %cst_5 : f32 to vector<192x64xf32>
    %7 = arith.maximumf %5, %6 : vector<192x64xf32>
    %8 = arith.truncf %7 : vector<192x64xf32> to vector<192x64xbf16>
    %c0_6 = arith.constant 0 : index
    %c0_7 = arith.constant 0 : index
    %9 = vector.load %arg4[%c0_6, %c0_7] : memref<192x64xbf16, #tpu.memory_space<vmem>>, vector<192x64xbf16>
    tpu.vector_store %arg4[%c0_6, %c0_7], %8 {strides = array<i32>} : memref<192x64xbf16, #tpu.memory_space<vmem>>, vector<192x64xbf16>,
    return
  }
  func.func @transform_0(%arg0: i32) -> (i32, i32) {
    %c0_i32 = arith.constant 0 : i32
    %c0_i32_0 = arith.constant 0 : i32
    return %arg0, %c0_i32 : i32, i32
  }
  func.func @transform_1(%arg0: i32) -> (i32, i32) {
    %c0_i32 = arith.constant 0 : i32
    %c0_i32_0 = arith.constant 0 : i32
    %c0_i32_1 = arith.constant 0 : i32
    return %c0_i32, %c0_i32_0 : i32, i32
  }
  func.func @transform_2(%arg0: i32) -> (i32, i32) {
    %c0_i32 = arith.constant 0 : i32
    %c0_i32_0 = arith.constant 0 : i32
    %c0_i32_1 = arith.constant 0 : i32
    return %c0_i32, %c0_i32_0 : i32, i32
  }
  func.func @transform_3(%arg0: i32) -> (i32, i32) {
    %c0_i32 = arith.constant 0 : i32
    %c0_i32_0 = arith.constant 0 : i32
    return %arg0, %c0_i32 : i32, i32
  }
}

module attributes {stable_mosaic.version = 11 : i64} {
  func.func @_matmul_bias_kernel(%arg0: i32, %arg1: memref<128x576xbf16, #tpu.memory_space<vmem>>, %arg2: memref<576x32xbf16, #tpu.memory_space<vmem>>, %arg3: memref<1x32xf32, #tpu.memory_space<vmem>>, %arg4: memref<128x32xbf16, #tpu.memory_space<vmem>>) attributes {dimension_semantics = [#tpu.dimension_semantics<parallel>], iteration_bounds = array<i64: 1>, scalar_prefetch = 0 : i64, scratch_operands = 0 : i64, tpu.core_type = #tpu.core_type<tc>, window_params = [{transform_indices = @transform_0, window_bounds = array<i64: 128, 576>}, {pipeline_mode = #tpu.pipeline_mode<synchronous>, transform_indices = @transform_1, window_bounds = array<i64: 576, 32>}, {pipeline_mode = #tpu.pipeline_mode<synchronous>, transform_indices = @transform_2, window_bounds = array<i64: 1, 32>}, {transform_indices = @transform_3, window_bounds = array<i64: 128, 32>}]} {
    %c0 = arith.constant 0 : index
    %c0_0 = arith.constant 0 : index
    %0 = vector.load %arg1[%c0, %c0_0] : memref<128x576xbf16, #tpu.memory_space<vmem>>, vector<128x576xbf16>
    %c0_1 = arith.constant 0 : index
    %c0_2 = arith.constant 0 : index
    %1 = vector.load %arg2[%c0_1, %c0_2] : memref<576x32xbf16, #tpu.memory_space<vmem>>, vector<576x32xbf16>
    %cst = arith.constant dense<0.000000e+00> : vector<128x32xf32>
    %2 = tpu.matmul %0, %1, %cst {dimension_numbers = #tpu.dot_dimension_numbers<[1], [0], [0], [1], [0, 0, 1, 1], [], []>} : vector<128x576xbf16>, vector<576x32xbf16>, vector<128x32xf32> -> vector<128x32xf32>
    %c0_3 = arith.constant 0 : index
    %c0_4 = arith.constant 0 : index
    %3 = vector.load %arg3[%c0_3, %c0_4] : memref<1x32xf32, #tpu.memory_space<vmem>>, vector<1x32xf32>
    %4 = vector.broadcast %3 : vector<1x32xf32> to vector<128x32xf32>
    %5 = arith.addf %2, %4 : vector<128x32xf32>
    %cst_5 = arith.constant 0.000000e+00 : f32
    %6 = vector.broadcast %cst_5 : f32 to vector<128x32xf32>
    %7 = arith.maximumf %5, %6 : vector<128x32xf32>
    %8 = arith.truncf %7 : vector<128x32xf32> to vector<128x32xbf16>
    %c0_6 = arith.constant 0 : index
    %c0_7 = arith.constant 0 : index
    %9 = vector.load %arg4[%c0_6, %c0_7] : memref<128x32xbf16, #tpu.memory_space<vmem>>, vector<128x32xbf16>
    tpu.vector_store %arg4[%c0_6, %c0_7], %8 {strides = array<i32>} : memref<128x32xbf16, #tpu.memory_space<vmem>>, vector<128x32xbf16>,
    return
  }
  func.func @transform_0(%arg0: i32) -> (i32, i32) {
    %c0_i32 = arith.constant 0 : i32
    %c0_i32_0 = arith.constant 0 : i32
    return %arg0, %c0_i32 : i32, i32
  }
  func.func @transform_1(%arg0: i32) -> (i32, i32) {
    %c0_i32 = arith.constant 0 : i32
    %c0_i32_0 = arith.constant 0 : i32
    %c0_i32_1 = arith.constant 0 : i32
    return %c0_i32, %c0_i32_0 : i32, i32
  }
  func.func @transform_2(%arg0: i32) -> (i32, i32) {
    %c0_i32 = arith.constant 0 : i32
    %c0_i32_0 = arith.constant 0 : i32
    %c0_i32_1 = arith.constant 0 : i32
    return %c0_i32, %c0_i32_0 : i32, i32
  }
  func.func @transform_3(%arg0: i32) -> (i32, i32) {
    %c0_i32 = arith.constant 0 : i32
    %c0_i32_0 = arith.constant 0 : i32
    return %arg0, %c0_i32 : i32, i32
  }
}

module attributes {stable_mosaic.version = 11 : i64} {
  func.func @_mlp_heads_kernel(%arg0: i32, %arg1: memref<32x1568xbf16, #tpu.memory_space<vmem>>, %arg2: memref<1568x512xbf16, #tpu.memory_space<vmem>>, %arg3: memref<1x512xf32, #tpu.memory_space<vmem>>, %arg4: memref<512x128xbf16, #tpu.memory_space<vmem>>, %arg5: memref<1x128xf32, #tpu.memory_space<vmem>>, %arg6: memref<32x128xf32, #tpu.memory_space<vmem>>) attributes {dimension_semantics = [#tpu.dimension_semantics<parallel>], iteration_bounds = array<i64: 1>, scalar_prefetch = 0 : i64, scratch_operands = 0 : i64, tpu.core_type = #tpu.core_type<tc>, window_params = [{transform_indices = @transform_0, window_bounds = array<i64: 32, 1568>}, {pipeline_mode = #tpu.pipeline_mode<synchronous>, transform_indices = @transform_1, window_bounds = array<i64: 1568, 512>}, {pipeline_mode = #tpu.pipeline_mode<synchronous>, transform_indices = @transform_2, window_bounds = array<i64: 1, 512>}, {pipeline_mode = #tpu.pipeline_mode<synchronous>, transform_indices = @transform_3, window_bounds = array<i64: 512, 128>}, {pipeline_mode = #tpu.pipeline_mode<synchronous>, transform_indices = @transform_4, window_bounds = array<i64: 1, 128>}, {transform_indices = @transform_5, window_bounds = array<i64: 32, 128>}]} {
    %c0 = arith.constant 0 : index
    %c0_0 = arith.constant 0 : index
    %0 = vector.load %arg1[%c0, %c0_0] : memref<32x1568xbf16, #tpu.memory_space<vmem>>, vector<32x1568xbf16>
    %c0_1 = arith.constant 0 : index
    %c0_2 = arith.constant 0 : index
    %1 = vector.load %arg2[%c0_1, %c0_2] : memref<1568x512xbf16, #tpu.memory_space<vmem>>, vector<1568x512xbf16>
    %cst = arith.constant dense<0.000000e+00> : vector<32x512xf32>
    %2 = tpu.matmul %0, %1, %cst {dimension_numbers = #tpu.dot_dimension_numbers<[1], [0], [0], [1], [0, 0, 1, 1], [], []>} : vector<32x1568xbf16>, vector<1568x512xbf16>, vector<32x512xf32> -> vector<32x512xf32>
    %c0_3 = arith.constant 0 : index
    %c0_4 = arith.constant 0 : index
    %3 = vector.load %arg3[%c0_3, %c0_4] : memref<1x512xf32, #tpu.memory_space<vmem>>, vector<1x512xf32>
    %4 = vector.broadcast %3 : vector<1x512xf32> to vector<32x512xf32>
    %5 = arith.addf %2, %4 : vector<32x512xf32>
    %cst_5 = arith.constant 0.000000e+00 : f32
    %6 = vector.broadcast %cst_5 : f32 to vector<32x512xf32>
    %7 = arith.maximumf %5, %6 : vector<32x512xf32>
    %8 = arith.truncf %7 : vector<32x512xf32> to vector<32x512xbf16>
    %c0_6 = arith.constant 0 : index
    %c0_7 = arith.constant 0 : index
    %9 = vector.load %arg4[%c0_6, %c0_7] : memref<512x128xbf16, #tpu.memory_space<vmem>>, vector<512x128xbf16>
    %cst_8 = arith.constant dense<0.000000e+00> : vector<32x128xf32>
    %10 = tpu.matmul %8, %9, %cst_8 {dimension_numbers = #tpu.dot_dimension_numbers<[1], [0], [0], [1], [0, 0, 1, 1], [], []>} : vector<32x512xbf16>, vector<512x128xbf16>, vector<32x128xf32> -> vector<32x128xf32>
    %c0_9 = arith.constant 0 : index
    %c0_10 = arith.constant 0 : index
    %11 = vector.load %arg5[%c0_9, %c0_10] : memref<1x128xf32, #tpu.memory_space<vmem>>, vector<1x128xf32>
    %12 = vector.broadcast %11 : vector<1x128xf32> to vector<32x128xf32>
    %13 = arith.addf %10, %12 : vector<32x128xf32>
    %c0_11 = arith.constant 0 : index
    %c0_12 = arith.constant 0 : index
    %14 = vector.load %arg6[%c0_11, %c0_12] : memref<32x128xf32, #tpu.memory_space<vmem>>, vector<32x128xf32>
    tpu.vector_store %arg6[%c0_11, %c0_12], %13 {strides = array<i32>} : memref<32x128xf32, #tpu.memory_space<vmem>>, vector<32x128xf32>,
    return
  }
  func.func @transform_0(%arg0: i32) -> (i32, i32) {
    %c0_i32 = arith.constant 0 : i32
    %c0_i32_0 = arith.constant 0 : i32
    return %arg0, %c0_i32 : i32, i32
  }
  func.func @transform_1(%arg0: i32) -> (i32, i32) {
    %c0_i32 = arith.constant 0 : i32
    %c0_i32_0 = arith.constant 0 : i32
    %c0_i32_1 = arith.constant 0 : i32
    return %c0_i32, %c0_i32_0 : i32, i32
  }
  func.func @transform_2(%arg0: i32) -> (i32, i32) {
    %c0_i32 = arith.constant 0 : i32
    %c0_i32_0 = arith.constant 0 : i32
    %c0_i32_1 = arith.constant 0 : i32
    return %c0_i32, %c0_i32_0 : i32, i32
  }
  func.func @transform_3(%arg0: i32) -> (i32, i32) {
    %c0_i32 = arith.constant 0 : i32
    %c0_i32_0 = arith.constant 0 : i32
    %c0_i32_1 = arith.constant 0 : i32
    return %c0_i32, %c0_i32_0 : i32, i32
  }
  func.func @transform_4(%arg0: i32) -> (i32, i32) {
    %c0_i32 = arith.constant 0 : i32
    %c0_i32_0 = arith.constant 0 : i32
    %c0_i32_1 = arith.constant 0 : i32
    return %c0_i32, %c0_i32_0 : i32, i32
  }
  func.func @transform_5(%arg0: i32) -> (i32, i32) {
    %c0_i32 = arith.constant 0 : i32
    %c0_i32_0 = arith.constant 0 : i32
    return %arg0, %c0_i32 : i32, i32
  }
}

</mosaic_0001>

<llo_original>
// kernel: _lambda_.4
$region0: #{_lambda_.4}
  #allocation0 [shape = 'u32[]', space=smem, size = 0x4, offset = 0x4, fixed_abs, tag = 'smem constant byte address 0x4 - core index']
  #allocation1 [shape = 'u32[72,128]{1,0:T(1,128)}', space=vmem, size = 0x9000, scoped, tag = 'internal scratch']
  %s0 = inlined_call_operand.vmem [shape: bf16[800,256], index: 0, kind: input, shape index: {}]
  %s1 = inlined_call_operand.vmem [shape: bf16[256,32], index: 1, kind: input, shape index: {}]
  %s2 = inlined_call_operand.vmem [shape: f32[1,32], index: 2, kind: input, shape index: {}]
  %s3 = inlined_call_operand.vmem [shape: bf16[800,32], index: 3, kind: output, shape index: {}]
  %s4 = sld [smem:[#allocation0]]
  $region22: #{_lambda_.4} parent=0
    _
  %s6 = ssub.s32 1, %s4
  %s7 = scalar_select 0, %s6, %s4
  // Predicated region
  $region2: #{_lambda_.4} parent=0 // pred_check
    _
  $region3: #{_lambda_.4} parent=0 // pred_check_branch
    %9 = sbr.rel (0) target = $region5
  $region4: #{_lambda_.4} parent=0 // pred_region
    _
  $region5: #{_lambda_.4} parent=0 // pred_fallthru
    _
  // Predicated region
  $region6: #{_lambda_.4} parent=0 // pred_check
    _
  $region7: #{_lambda_.4} parent=0 // pred_check_branch
    %11 = sbr.rel (0) target = $region9
  $region8: #{_lambda_.4} parent=0 // pred_region
    _
  $region9: #{_lambda_.4} parent=0 // pred_fallthru
    _
  // Predicated region
  $region10: #{_lambda_.4} parent=0 // pred_check
    _
  $region11: #{_lambda_.4} parent=0 // pred_check_branch
    %13 = sbr.rel (0) target = $region13
  $region12: #{_lambda_.4} parent=0 // pred_region
    _
  $region13: #{_lambda_.4} parent=0 // pred_fallthru
    _
  %v14 = vld [vmem:[%s0] sm:$0xff]
  %v15 = vld [vmem:[%s0 + $0x8] sm:$0xff]
  %v16 = vld [vmem:[%s0 + $0x10] sm:$0xff]
  %v17 = vld [vmem:[%s0 + $0x18] sm:$0xff]
  %v18 = vld [vmem:[%s0 + $0x20] sm:$0xff]
  %v19 = vld [vmem:[%s0 + $0x28] sm:$0xff]
  %v20 = vld [vmem:[%s0 + $0x30] sm:$0xff]
  %v21 = vld [vmem:[%s0 + $0x38] sm:$0xff]
  %v22 = vld [vmem:[%s0 + $0x40] sm:$0xff]
  %v23 = vld [vmem:[%s0 + $0x48] sm:$0xff]
  %v24 = vld [vmem:[%s0 + $0x50] sm:$0xff]
  %v25 = vld [vmem:[%s0 + $0x58] sm:$0xff]
  %v26 = vld [vmem:[%s0 + $0x60] sm:$0xff]
  %v27 = vld [vmem:[%s0 + $0x68] sm:$0xff]
  %v28 = vld [vmem:[%s0 + $0x70] sm:$0xff]
  %v29 = vld [vmem:[%s0 + $0x78] sm:$0xff]
  %v30 = vld [vmem:[%s0 + $0x80] sm:$0xff]
  %v31 = vld [vmem:[%s0 + $0x88] sm:$0xff]
  %v32 = vld [vmem:[%s0 + $0x90] sm:$0xff]
  %v33 = vld [vmem:[%s0 + $0x98] sm:$0xff]
  %v34 = vld [vmem:[%s0 + $0xa0] sm:$0xff]
  %v35 = vld [vmem:[%s0 + $0xa8] sm:$0xff]
  %v36 = vld [vmem:[%s0 + $0xb0] sm:$0xff]
  %v37 = vld [vmem:[%s0 + $0xb8] sm:$0xff]
  %v38 = vld [vmem:[%s0 + $0xc0] sm:$0xff]
  %v39 = vld [vmem:[%s0 + $0xc8] sm:$0xff]
  %v40 = vld [vmem:[%s0 + $0xd0] sm:$0xff]
  %v41 = vld [vmem:[%s0 + $0xd8] sm:$0xff]
  %v42 = vld [vmem:[%s0 + $0xe0] sm:$0xff]
  %v43 = vld [vmem:[%s0 + $0xe8] sm:$0xff]
  %v44 = vld [vmem:[%s0 + $0xf0] sm:$0xff]
  %v45 = vld [vmem:[%s0 + $0xf8] sm:$0xff]
  %v46 = vld [vmem:[%s0 + $0x100] sm:$0xff]
  %v47 = vld [vmem:[%s0 + $0x108] sm:$0xff]
  %v48 = vld [vmem:[%s0 + $0x110] sm:$0xff]
  %v49 = vld [vmem:[%s0 + $0x118] sm:$0xff]
  %v50 = vld [vmem:[%s0 + $0x120] sm:$0xff]
  %v51 = vld [vmem:[%s0 + $0x128] sm:$0xff]
  %v52 = vld [vmem:[%s0 + $0x130] sm:$0xff]
  %v53 = vld [vmem:[%s0 + $0x138] sm:$0xff]
  %v54 = vld [vmem:[%s0 + $0x140] sm:$0xff]
  %v55 = vld [vmem:[%s0 + $0x148] sm:$0xff]
  %v56 = vld [vmem:[%s0 + $0x150] sm:$0xff]
  %v57 = vld [vmem:[%s0 + $0x158] sm:$0xff]
  %v58 = vld [vmem:[%s0 + $0x160] sm:$0xff]
  %v59 = vld [vmem:[%s0 + $0x168] sm:$0xff]
  %v60 = vld [vmem:[%s0 + $0x170] sm:$0xff]
  %v61 = vld [vmem:[%s0 + $0x178] sm:$0xff]
  %v62 = vld [vmem:[%s0 + $0x180] sm:$0xff]
  %v63 = vld [vmem:[%s0 + $0x188] sm:$0xff]
  %v64 = vld [vmem:[%s0 + $0x190] sm:$0xff]
  %v65 = vld [vmem:[%s0 + $0x198] sm:$0xff]
  %v66 = vld [vmem:[%s0 + $0x1a0] sm:$0xff]
  %v67 = vld [vmem:[%s0 + $0x1a8] sm:$0xff]
  %v68 = vld [vmem:[%s0 + $0x1b0] sm:$0xff]
  %v69 = vld [vmem:[%s0 + $0x1b8] sm:$0xff]
  %v70 = vld [vmem:[%s0 + $0x1c0] sm:$0xff]
  %v71 = vld [vmem:[%s0 + $0x1c8] sm:$0xff]
  %v72 = vld [vmem:[%s0 + $0x1d0] sm:$0xff]
  %v73 = vld [vmem:[%s0 + $0x1d8] sm:$0xff]
  %v74 = vld [vmem:[%s0 + $0x1e0] sm:$0xff]
  %v75 = vld [vmem:[%s0 + $0x1e8] sm:$0xff]
  %v76 = vld [vmem:[%s0 + $0x1f0] sm:$0xff]
  %v77 = vld [vmem:[%s0 + $0x1f8] sm:$0xff]
  %v78 = vld [vmem:[%s0 + $0x200] sm:$0xff]
  %v79 = vld [vmem:[%s0 + $0x208] sm:$0xff]
  %v80 = vld [vmem:[%s0 + $0x210] sm:$0xff]
  %v81 = vld [vmem:[%s0 + $0x218] sm:$0xff]
  %v82 = vld [vmem:[%s0 + $0x220] sm:$0xff]
  %v83 = vld [vmem:[%s0 + $0x228] sm:$0xff]
  %v84 = vld [vmem:[%s0 + $0x230] sm:$0xff]
  %v85 = vld [vmem:[%s0 + $0x238] sm:$0xff]
  %v86 = vld [vmem:[%s0 + $0x240] sm:$0xff]
  %v87 = vld [vmem:[%s0 + $0x248] sm:$0xff]
  %v88 = vld [vmem:[%s0 + $0x250] sm:$0xff]
  %v89 = vld [vmem:[%s0 + $0x258] sm:$0xff]
  %v90 = vld [vmem:[%s0 + $0x260] sm:$0xff]
  %v91 = vld [vmem:[%s0 + $0x268] sm:$0xff]
  %v92 = vld [vmem:[%s0 + $0x270] sm:$0xff]
  %v93 = vld [vmem:[%s0 + $0x278] sm:$0xff]
  %v94 = vld [vmem:[%s0 + $0x280] sm:$0xff]
  %v95 = vld [vmem:[%s0 + $0x288] sm:$0xff]
  %v96 = vld [vmem:[%s0 + $0x290] sm:$0xff]
  %v97 = vld [vmem:[%s0 + $0x298] sm:$0xff]
  %v98 = vld [vmem:[%s0 + $0x2a0] sm:$0xff]
  %v99 = vld [vmem:[%s0 + $0x2a8] sm:$0xff]
  %v100 = vld [vmem:[%s0 + $0x2b0] sm:$0xff]
  %v101 = vld [vmem:[%s0 + $0x2b8] sm:$0xff]
  %v102 = vld [vmem:[%s0 + $0x2c0] sm:$0xff]
  %v103 = vld [vmem:[%s0 + $0x2c8] sm:$0xff]
  %v104 = vld [vmem:[%s0 + $0x2d0] sm:$0xff]
  %v105 = vld [vmem:[%s0 + $0x2d8] sm:$0xff]
  %v106 = vld [vmem:[%s0 + $0x2e0] sm:$0xff]
  %v107 = vld [vmem:[%s0 + $0x2e8] sm:$0xff]
  %v108 = vld [vmem:[%s0 + $0x2f0] sm:$0xff]
  %v109 = vld [vmem:[%s0 + $0x2f8] sm:$0xff]
  %v110 = vld [vmem:[%s0 + $0x300] sm:$0xff]
  %v111 = vld [vmem:[%s0 + $0x308] sm:$0xff]
  %v112 = vld [vmem:[%s0 + $0x310] sm:$0xff]
  %v113 = vld [vmem:[%s0 + $0x318] sm:$0xff]
  %v114 = vld [vmem:[%s1] sm:$0xf]
  %v115 = vld [vmem:[%s1 + $0x4] sm:$0xf]
  %v116 = vld [vmem:[%s1 + $0x8] sm:$0xf]
  %v117 = vld [vmem:[%s1 + $0xc] sm:$0xf]
  %v118 = vld [vmem:[%s1 + $0x10] sm:$0xf]
  %v119 = vld [vmem:[%s1 + $0x14] sm:$0xf]
  %v120 = vld [vmem:[%s1 + $0x18] sm:$0xf]
  %v121 = vld [vmem:[%s1 + $0x1c] sm:$0xf]
  %v122 = vld [vmem:[%s1 + $0x20] sm:$0xf]
  %v123 = vld [vmem:[%s1 + $0x24] sm:$0xf]
  %v124 = vld [vmem:[%s1 + $0x28] sm:$0xf]
  %v125 = vld [vmem:[%s1 + $0x2c] sm:$0xf]
  %v126 = vld [vmem:[%s1 + $0x30] sm:$0xf]
  %v127 = vld [vmem:[%s1 + $0x34] sm:$0xf]
  %v128 = vld [vmem:[%s1 + $0x38] sm:$0xf]
  %v129 = vld [vmem:[%s1 + $0x3c] sm:$0xf]
  %v130 = vld [vmem:[%s1 + $0x40] sm:$0xf]
  %v131 = vld [vmem:[%s1 + $0x44] sm:$0xf]
  %v132 = vld [vmem:[%s1 + $0x48] sm:$0xf]
  %v133 = vld [vmem:[%s1 + $0x4c] sm:$0xf]
  %v134 = vld [vmem:[%s1 + $0x50] sm:$0xf]
  %v135 = vld [vmem:[%s1 + $0x54] sm:$0xf]
  %v136 = vld [vmem:[%s1 + $0x58] sm:$0xf]
  %v137 = vld [vmem:[%s1 + $0x5c] sm:$0xf]
  %v138 = vld [vmem:[%s1 + $0x60] sm:$0xf]
  %v139 = vld [vmem:[%s1 + $0x64] sm:$0xf]
  %v140 = vld [vmem:[%s1 + $0x68] sm:$0xf]
  %v141 = vld [vmem:[%s1 + $0x6c] sm:$0xf]
  %v142 = vld [vmem:[%s1 + $0x70] sm:$0xf]
  %v143 = vld [vmem:[%s1 + $0x74] sm:$0xf]
  %v144 = vld [vmem:[%s1 + $0x78] sm:$0xf]
  %v145 = vld [vmem:[%s1 + $0x7c] sm:$0xf]
  %v146 = vld [vmem:[%s2] sm:$0x1]
  %v148 = vperm.slane %v146, 0
  %v250 = vunpack.c.l.b16 %v14
  %v251 = vunpack.c.h.b16 %v14
  %v252 = vunpack.c.l.b16 %v15
  %v253 = vunpack.c.h.b16 %v15
  %v254 = vunpack.c.l.b16 %v16
  %v255 = vunpack.c.h.b16 %v16
  %v256 = vunpack.c.l.b16 %v17
  %v257 = vunpack.c.h.b16 %v17
  %v258 = vunpack.c.l.b16 %v18
  %v259 = vunpack.c.h.b16 %v18
  %v260 = vunpack.c.l.b16 %v19
  %v261 = vunpack.c.h.b16 %v19
  %v262 = vunpack.c.l.b16 %v20
  %v263 = vunpack.c.h.b16 %v20
  %v264 = vunpack.c.l.b16 %v21
  %v265 = vunpack.c.h.b16 %v21
  %v266 = vunpack.c.l.b16 %v22
  %v267 = vunpack.c.h.b16 %v22
  %v268 = vunpack.c.l.b16 %v23
  %v269 = vunpack.c.h.b16 %v23
  %v270 = vunpack.c.l.b16 %v24
  %v271 = vunpack.c.h.b16 %v24
  %v272 = vunpack.c.l.b16 %v25
  %v273 = vunpack.c.h.b16 %v25
  %v274 = vunpack.c.l.b16 %v26
  %v275 = vunpack.c.h.b16 %v26
  %v276 = vunpack.c.l.b16 %v27
  %v277 = vunpack.c.h.b16 %v27
  %v278 = vunpack.c.l.b16 %v28
  %v279 = vunpack.c.h.b16 %v28
  %v280 = vunpack.c.l.b16 %v29
  %v281 = vunpack.c.h.b16 %v29
  %v282 = vunpack.c.l.b16 %v30
  %v283 = vunpack.c.h.b16 %v30
  %v284 = vunpack.c.l.b16 %v31
  %v285 = vunpack.c.h.b16 %v31
  %v286 = vunpack.c.l.b16 %v32
  %v287 = vunpack.c.h.b16 %v32
  %v288 = vunpack.c.l.b16 %v33
  %v289 = vunpack.c.h.b16 %v33
  %v290 = vunpack.c.l.b16 %v34
  %v291 = vunpack.c.h.b16 %v34
  %v292 = vunpack.c.l.b16 %v35
  %v293 = vunpack.c.h.b16 %v35
  %v294 = vunpack.c.l.b16 %v36
  %v295 = vunpack.c.h.b16 %v36
  %v296 = vunpack.c.l.b16 %v37
  %v297 = vunpack.c.h.b16 %v37
  %v298 = vunpack.c.l.b16 %v38
  %v299 = vunpack.c.h.b16 %v38
  %v300 = vunpack.c.l.b16 %v39
  %v301 = vunpack.c.h.b16 %v39
  %v302 = vunpack.c.l.b16 %v40
  %v303 = vunpack.c.h.b16 %v40
  %v304 = vunpack.c.l.b16 %v41
  %v305 = vunpack.c.h.b16 %v41
  %v306 = vunpack.c.l.b16 %v42
  %v307 = vunpack.c.h.b16 %v42
  %v308 = vunpack.c.l.b16 %v43
  %v309 = vunpack.c.h.b16 %v43
  %v310 = vunpack.c.l.b16 %v44
  %v311 = vunpack.c.h.b16 %v44
  %v312 = vunpack.c.l.b16 %v45
  %v313 = vunpack.c.h.b16 %v45
  %v314 = vunpack.c.l.b16 %v46
  %v315 = vunpack.c.h.b16 %v46
  %v316 = vunpack.c.l.b16 %v47
  %v317 = vunpack.c.h.b16 %v47
  %v318 = vunpack.c.l.b16 %v48
  %v319 = vunpack.c.h.b16 %v48
  %v320 = vunpack.c.l.b16 %v49
  %v321 = vunpack.c.h.b16 %v49
  %v322 = vunpack.c.l.b16 %v50
  %v323 = vunpack.c.h.b16 %v50
  %v324 = vunpack.c.l.b16 %v51
  %v325 = vunpack.c.h.b16 %v51
  %v326 = vunpack.c.l.b16 %v52
  %v327 = vunpack.c.h.b16 %v52
  %v328 = vunpack.c.l.b16 %v53
  %v329 = vunpack.c.h.b16 %v53
  %v330 = vunpack.c.l.b16 %v54
  %v331 = vunpack.c.h.b16 %v54
  %v332 = vunpack.c.l.b16 %v55
  %v333 = vunpack.c.h.b16 %v55
  %v334 = vunpack.c.l.b16 %v56
  %v335 = vunpack.c.h.b16 %v56
  %v336 = vunpack.c.l.b16 %v57
  %v337 = vunpack.c.h.b16 %v57
  %v338 = vunpack.c.l.b16 %v58
  %v339 = vunpack.c.h.b16 %v58
  %v340 = vunpack.c.l.b16 %v59
  %v341 = vunpack.c.h.b16 %v59
  %v342 = vunpack.c.l.b16 %v60
  %v343 = vunpack.c.h.b16 %v60
  %v344 = vunpack.c.l.b16 %v61
  %v345 = vunpack.c.h.b16 %v61
  %v346 = vunpack.c.l.b16 %v62
  %v347 = vunpack.c.h.b16 %v62
  %v348 = vunpack.c.l.b16 %v63
  %v349 = vunpack.c.h.b16 %v63
  %v350 = vunpack.c.l.b16 %v64
  %v351 = vunpack.c.h.b16 %v64
  %v352 = vunpack.c.l.b16 %v65
  %v353 = vunpack.c.h.b16 %v65
  %v354 = vunpack.c.l.b16 %v66
  %v355 = vunpack.c.h.b16 %v66
  %v356 = vunpack.c.l.b16 %v67
  %v357 = vunpack.c.h.b16 %v67
  %v358 = vunpack.c.l.b16 %v68
  %v359 = vunpack.c.h.b16 %v68
  %v360 = vunpack.c.l.b16 %v69
  %v361 = vunpack.c.h.b16 %v69
  %v362 = vunpack.c.l.b16 %v70
  %v363 = vunpack.c.h.b16 %v70
  %v364 = vunpack.c.l.b16 %v71
  %v365 = vunpack.c.h.b16 %v71
  %v366 = vunpack.c.l.b16 %v72
  %v367 = vunpack.c.h.b16 %v72
  %v368 = vunpack.c.l.b16 %v73
  %v369 = vunpack.c.h.b16 %v73
  %v370 = vunpack.c.l.b16 %v74
  %v371 = vunpack.c.h.b16 %v74
  %v372 = vunpack.c.l.b16 %v75
  %v373 = vunpack.c.h.b16 %v75
  %v374 = vunpack.c.l.b16 %v76
  %v375 = vunpack.c.h.b16 %v76
  %v376 = vunpack.c.l.b16 %v77
  %v377 = vunpack.c.h.b16 %v77
  %v378 = vunpack.c.l.b16 %v78
  %v379 = vunpack.c.h.b16 %v78
  %v380 = vunpack.c.l.b16 %v79
  %v381 = vunpack.c.h.b16 %v79
  %v382 = vunpack.c.l.b16 %v80
  %v383 = vunpack.c.h.b16 %v80
  %v384 = vunpack.c.l.b16 %v81
  %v385 = vunpack.c.h.b16 %v81
  %v386 = vunpack.c.l.b16 %v82
  %v387 = vunpack.c.h.b16 %v82
  %v388 = vunpack.c.l.b16 %v83
  %v389 = vunpack.c.h.b16 %v83
  %v390 = vunpack.c.l.b16 %v84
  %v391 = vunpack.c.h.b16 %v84
  %v392 = vunpack.c.l.b16 %v85
  %v393 = vunpack.c.h.b16 %v85
  %v394 = vunpack.c.l.b16 %v86
  %v395 = vunpack.c.h.b16 %v86
  %v396 = vunpack.c.l.b16 %v87
  %v397 = vunpack.c.h.b16 %v87
  %v398 = vunpack.c.l.b16 %v88
  %v399 = vunpack.c.h.b16 %v88
  %v400 = vunpack.c.l.b16 %v89
  %v401 = vunpack.c.h.b16 %v89
  %v402 = vunpack.c.l.b16 %v90
  %v403 = vunpack.c.h.b16 %v90
  %v404 = vunpack.c.l.b16 %v91
  %v405 = vunpack.c.h.b16 %v91
  %v406 = vunpack.c.l.b16 %v92
  %v407 = vunpack.c.h.b16 %v92
  %v408 = vunpack.c.l.b16 %v93
  %v409 = vunpack.c.h.b16 %v93
  %v410 = vunpack.c.l.b16 %v94
  %v411 = vunpack.c.h.b16 %v94
  %v412 = vunpack.c.l.b16 %v95
  %v413 = vunpack.c.h.b16 %v95
  %v414 = vunpack.c.l.b16 %v96
  %v415 = vunpack.c.h.b16 %v96
  %v416 = vunpack.c.l.b16 %v97
  %v417 = vunpack.c.h.b16 %v97
  %v418 = vunpack.c.l.b16 %v98
  %v419 = vunpack.c.h.b16 %v98
  %v420 = vunpack.c.l.b16 %v99
  %v421 = vunpack.c.h.b16 %v99
  %v422 = vunpack.c.l.b16 %v100
  %v423 = vunpack.c.h.b16 %v100
  %v424 = vunpack.c.l.b16 %v101
  %v425 = vunpack.c.h.b16 %v101
  %v426 = vunpack.c.l.b16 %v102
  %v427 = vunpack.c.h.b16 %v102
  %v428 = vunpack.c.l.b16 %v103
  %v429 = vunpack.c.h.b16 %v103
  %v430 = vunpack.c.l.b16 %v104
  %v431 = vunpack.c.h.b16 %v104
  %v432 = vunpack.c.l.b16 %v105
  %v433 = vunpack.c.h.b16 %v105
  %v434 = vunpack.c.l.b16 %v106
  %v435 = vunpack.c.h.b16 %v106
  %v436 = vunpack.c.l.b16 %v107
  %v437 = vunpack.c.h.b16 %v107
  %v438 = vunpack.c.l.b16 %v108
  %v439 = vunpack.c.h.b16 %v108
  %v440 = vunpack.c.l.b16 %v109
  %v441 = vunpack.c.h.b16 %v109
  %v442 = vunpack.c.l.b16 %v110
  %v443 = vunpack.c.h.b16 %v110
  %v444 = vunpack.c.l.b16 %v111
  %v445 = vunpack.c.h.b16 %v111
  %v446 = vunpack.c.l.b16 %v112
  %v447 = vunpack.c.h.b16 %v112
  %v448 = vunpack.c.l.b16 %v113
  %v449 = vunpack.c.h.b16 %v113
  %v450 = vpack.c.b16 %v252, %v250
  %v451 = vpack.c.b16 %v253, %v251
  %v452 = vpack.c.b16 %v256, %v254
  %v453 = vpack.c.b16 %v257, %v255
  %v454 = vpack.c.b16 %v260, %v258
  %v455 = vpack.c.b16 %v261, %v259
  %v456 = vpack.c.b16 %v264, %v262
  %v457 = vpack.c.b16 %v265, %v263
  %v458 = vpack.c.b16 %v268, %v266
  %v459 = vpack.c.b16 %v269, %v267
  %v460 = vpack.c.b16 %v272, %v270
  %v461 = vpack.c.b16 %v273, %v271
  %v462 = vpack.c.b16 %v276, %v274
  %v463 = vpack.c.b16 %v277, %v275
  %v464 = vpack.c.b16 %v280, %v278
  %v465 = vpack.c.b16 %v281, %v279
  %v466 = vpack.c.b16 %v284, %v282
  %v467 = vpack.c.b16 %v285, %v283
  %v468 = vpack.c.b16 %v288, %v286
  %v469 = vpack.c.b16 %v289, %v287
  %v470 = vpack.c.b16 %v292, %v290
  %v471 = vpack.c.b16 %v293, %v291
  %v472 = vpack.c.b16 %v296, %v294
  %v473 = vpack.c.b16 %v297, %v295
  %v474 = vpack.c.b16 %v300, %v298
  %v475 = vpack.c.b16 %v301, %v299
  %v476 = vpack.c.b16 %v304, %v302
  %v477 = vpack.c.b16 %v305, %v303
  %v478 = vpack.c.b16 %v308, %v306
  %v479 = vpack.c.b16 %v309, %v307
  %v480 = vpack.c.b16 %v312, %v310
  %v481 = vpack.c.b16 %v313, %v311
  %v482 = vpack.c.b16 %v316, %v314
  %v483 = vpack.c.b16 %v317, %v315
  %v484 = vpack.c.b16 %v320, %v318
  %v485 = vpack.c.b16 %v321, %v319
  %v486 = vpack.c.b16 %v324, %v322
  %v487 = vpack.c.b16 %v325, %v323
  %v488 = vpack.c.b16 %v328, %v326
  %v489 = vpack.c.b16 %v329, %v327
  %v490 = vpack.c.b16 %v332, %v330
  %v491 = vpack.c.b16 %v333, %v331
  %v492 = vpack.c.b16 %v336, %v334
  %v493 = vpack.c.b16 %v337, %v335
  %v494 = vpack.c.b16 %v340, %v338
  %v495 = vpack.c.b16 %v341, %v339
  %v496 = vpack.c.b16 %v344, %v342
  %v497 = vpack.c.b16 %v345, %v343
  %v498 = vpack.c.b16 %v348, %v346
  %v499 = vpack.c.b16 %v349, %v347
  %v500 = vpack.c.b16 %v352, %v350
  %v501 = vpack.c.b16 %v353, %v351
  %v502 = vpack.c.b16 %v356, %v354
  %v503 = vpack.c.b16 %v357, %v355
  %v504 = vpack.c.b16 %v360, %v358
  %v505 = vpack.c.b16 %v361, %v359
  %v506 = vpack.c.b16 %v364, %v362
  %v507 = vpack.c.b16 %v365, %v363
  %v508 = vpack.c.b16 %v368, %v366
  %v509 = vpack.c.b16 %v369, %v367
  %v510 = vpack.c.b16 %v372, %v370
  %v511 = vpack.c.b16 %v373, %v371
  %v512 = vpack.c.b16 %v376, %v374
  %v513 = vpack.c.b16 %v377, %v375
  %v514 = vpack.c.b16 %v380, %v378
  %v515 = vpack.c.b16 %v381, %v379
  %v516 = vpack.c.b16 %v384, %v382
  %v517 = vpack.c.b16 %v385, %v383
  %v518 = vpack.c.b16 %v388, %v386
  %v519 = vpack.c.b16 %v389, %v387
  %v520 = vpack.c.b16 %v392, %v390
  %v521 = vpack.c.b16 %v393, %v391
  %v522 = vpack.c.b16 %v396, %v394
  %v523 = vpack.c.b16 %v397, %v395
  %v524 = vpack.c.b16 %v400, %v398
  %v525 = vpack.c.b16 %v401, %v399
  %v526 = vpack.c.b16 %v404, %v402
  %v527 = vpack.c.b16 %v405, %v403
  %v528 = vpack.c.b16 %v408, %v406
  %v529 = vpack.c.b16 %v409, %v407
  %v530 = vpack.c.b16 %v412, %v410
  %v531 = vpack.c.b16 %v413, %v411
  %v532 = vpack.c.b16 %v416, %v414
  %v533 = vpack.c.b16 %v417, %v415
  %v534 = vpack.c.b16 %v420, %v418
  %v535 = vpack.c.b16 %v421, %v419
  %v536 = vpack.c.b16 %v424, %v422
  %v537 = vpack.c.b16 %v425, %v423
  %v538 = vpack.c.b16 %v428, %v426
  %v539 = vpack.c.b16 %v429, %v427
  %v540 = vpack.c.b16 %v432, %v430
  %v541 = vpack.c.b16 %v433, %v431
  %v542 = vpack.c.b16 %v436, %v434
  %v543 = vpack.c.b16 %v437, %v435
  %v544 = vpack.c.b16 %v440, %v438
  %v545 = vpack.c.b16 %v441, %v439
  %v546 = vpack.c.b16 %v444, %v442
  %v547 = vpack.c.b16 %v445, %v443
  %v548 = vpack.c.b16 %v448, %v446
  %v549 = vpack.c.b16 %v449, %v447
  %v682 = vunpack.c.l.b16 %v114
  %v683 = vunpack.c.l.b16 %v115
  %v684 = vunpack.c.l.b16 %v116
  %v685 = vunpack.c.l.b16 %v117
  %v686 = vunpack.c.l.b16 %v118
  %v687 = vunpack.c.l.b16 %v119
  %v688 = vunpack.c.l.b16 %v120
  %v689 = vunpack.c.l.b16 %v121
  %v690 = vunpack.c.l.b16 %v122
  %v691 = vunpack.c.l.b16 %v123
  %v692 = vunpack.c.l.b16 %v124
  %v693 = vunpack.c.l.b16 %v125
  %v694 = vunpack.c.l.b16 %v126
  %v695 = vunpack.c.l.b16 %v127
  %v696 = vunpack.c.l.b16 %v128
  %v697 = vunpack.c.l.b16 %v129
  %v698 = vunpack.c.l.b16 %v130
  %v699 = vunpack.c.l.b16 %v131
  %v700 = vunpack.c.l.b16 %v132
  %v701 = vunpack.c.l.b16 %v133
  %v702 = vunpack.c.l.b16 %v134
  %v703 = vunpack.c.l.b16 %v135
  %v704 = vunpack.c.l.b16 %v136
  %v705 = vunpack.c.l.b16 %v137
  %v706 = vunpack.c.l.b16 %v138
  %v707 = vunpack.c.l.b16 %v139
  %v708 = vunpack.c.l.b16 %v140
  %v709 = vunpack.c.l.b16 %v141
  %v710 = vunpack.c.l.b16 %v142
  %v711 = vunpack.c.l.b16 %v143
  %v712 = vunpack.c.l.b16 %v144
  %v713 = vunpack.c.l.b16 %v145
  %v714 = vpack.c.b16 %v683, %v682
  %v715 = vpack.c.b16 %v685, %v684
  %v716 = vpack.c.b16 %v687, %v686
  %v717 = vpack.c.b16 %v689, %v688
  %v718 = vpack.c.b16 %v691, %v690
  %v719 = vpack.c.b16 %v693, %v692
  %v720 = vpack.c.b16 %v695, %v694
  %v721 = vpack.c.b16 %v697, %v696
  %v722 = vpack.c.b16 %v699, %v698
  %v723 = vpack.c.b16 %v701, %v700
  %v724 = vpack.c.b16 %v703, %v702
  %v725 = vpack.c.b16 %v705, %v704
  %v726 = vpack.c.b16 %v707, %v706
  %v727 = vpack.c.b16 %v709, %v708
  %v728 = vpack.c.b16 %v711, %v710
  %v729 = vpack.c.b16 %v713, %v712
  %746 = vmatpush.bf16.msra.mxu0 %v721
  %747 = vmatpush.bf16.msra.mxu0 %v720
  %748 = vmatpush.bf16.msra.mxu0 %v719
  %749 = vmatpush.bf16.msra.mxu0 %v718
  %750 = vmatpush.bf16.msra.mxu0 %v717
  %751 = vmatpush.bf16.msra.mxu0 %v716
  %752 = vmatpush.bf16.msra.mxu0 %v715
  %753 = vmatpush.bf16.msra.mxu0 %v714
  %754 = vmatmul.bf16.gmra.mxu0 %v450
  %v755 = vpop.f32.mrf.mxu0
  %v756 = vadd.f32 %v148, %v755
  %v757 = vpop.f32.mrf.mxu0
  %v758 = vadd.f32 %v148, %v757
  %759 = vmatmul.bf16.gmra.mxu0 %v452
  %v760 = vpop.f32.mrf.mxu0
  %v761 = vadd.f32 %v148, %v760
  %v762 = vpop.f32.mrf.mxu0
  %v763 = vadd.f32 %v148, %v762
  %764 = vmatmul.bf16.gmra.mxu0 %v454
  %v765 = vpop.f32.mrf.mxu0
  %v766 = vadd.f32 %v148, %v765
  %v767 = vpop.f32.mrf.mxu0
  %v768 = vadd.f32 %v148, %v767
  %769 = vmatmul.bf16.gmra.mxu0 %v456
  %v770 = vpop.f32.mrf.mxu0
  %v771 = vadd.f32 %v148, %v770
  %v772 = vpop.f32.mrf.mxu0
  %v773 = vadd.f32 %v148, %v772
  %774 = vmatmul.bf16.gmra.mxu0 %v458
  %v775 = vpop.f32.mrf.mxu0
  %v776 = vadd.f32 %v148, %v775
  %v777 = vpop.f32.mrf.mxu0
  %v778 = vadd.f32 %v148, %v777
  %779 = vmatmul.bf16.gmra.mxu0 %v460
  %v780 = vpop.f32.mrf.mxu0
  %v781 = vadd.f32 %v148, %v780
  %v782 = vpop.f32.mrf.mxu0
  %v783 = vadd.f32 %v148, %v782
  %784 = vmatmul.bf16.gmra.mxu0 %v462
  %v785 = vpop.f32.mrf.mxu0
  %v786 = vadd.f32 %v148, %v785
  %v787 = vpop.f32.mrf.mxu0
  %v788 = vadd.f32 %v148, %v787
  %789 = vmatmul.bf16.gmra.mxu0 %v464
  %v790 = vpop.f32.mrf.mxu0
  %v791 = vadd.f32 %v148, %v790
  %v792 = vpop.f32.mrf.mxu0
  %v793 = vadd.f32 %v148, %v792
  %794 = vmatmul.bf16.gmra.mxu0 %v466
  %v795 = vpop.f32.mrf.mxu0
  %v796 = vadd.f32 %v148, %v795
  %v797 = vpop.f32.mrf.mxu0
  %v798 = vadd.f32 %v148, %v797
  %799 = vmatmul.bf16.gmra.mxu0 %v468
  %v800 = vpop.f32.mrf.mxu0
  %v801 = vadd.f32 %v148, %v800
  %v802 = vpop.f32.mrf.mxu0
  %v803 = vadd.f32 %v148, %v802
  %804 = vmatmul.bf16.gmra.mxu0 %v470
  %v805 = vpop.f32.mrf.mxu0
  %v806 = vadd.f32 %v148, %v805
  %v807 = vpop.f32.mrf.mxu0
  %v808 = vadd.f32 %v148, %v807
  %809 = vmatmul.bf16.gmra.mxu0 %v472
  %v810 = vpop.f32.mrf.mxu0
  %v811 = vadd.f32 %v148, %v810
  %v812 = vpop.f32.mrf.mxu0
  %v813 = vadd.f32 %v148, %v812
  %814 = vmatmul.bf16.gmra.mxu0 %v474
  %v815 = vpop.f32.mrf.mxu0
  %v816 = vadd.f32 %v148, %v815
  %v817 = vpop.f32.mrf.mxu0
  %v818 = vadd.f32 %v148, %v817
  %819 = vmatmul.bf16.gmra.mxu0 %v476
  %v820 = vpop.f32.mrf.mxu0
  %v821 = vadd.f32 %v148, %v820
  %v822 = vpop.f32.mrf.mxu0
  %v823 = vadd.f32 %v148, %v822
  %824 = vmatmul.bf16.gmra.mxu0 %v478
  %v825 = vpop.f32.mrf.mxu0
  %v826 = vadd.f32 %v148, %v825
  %v827 = vpop.f32.mrf.mxu0
  %v828 = vadd.f32 %v148, %v827
  %829 = vmatmul.bf16.gmra.mxu0 %v480
  %v830 = vpop.f32.mrf.mxu0
  %v831 = vadd.f32 %v148, %v830
  %v832 = vpop.f32.mrf.mxu0
  %v833 = vadd.f32 %v148, %v832
  %834 = vmatmul.bf16.gmra.mxu0 %v482
  %v835 = vpop.f32.mrf.mxu0
  %v836 = vadd.f32 %v148, %v835
  %v837 = vpop.f32.mrf.mxu0
  %v838 = vadd.f32 %v148, %v837
  %839 = vmatmul.bf16.gmra.mxu0 %v484
  %v840 = vpop.f32.mrf.mxu0
  %v841 = vadd.f32 %v148, %v840
  %v842 = vpop.f32.mrf.mxu0
  %v843 = vadd.f32 %v148, %v842
  %844 = vmatmul.bf16.gmra.mxu0 %v486
  %v845 = vpop.f32.mrf.mxu0
  %v846 = vadd.f32 %v148, %v845
  %v847 = vpop.f32.mrf.mxu0
  %v848 = vadd.f32 %v148, %v847
  %849 = vmatmul.bf16.gmra.mxu0 %v488
  %v850 = vpop.f32.mrf.mxu0
  %v851 = vadd.f32 %v148, %v850
  %v852 = vpop.f32.mrf.mxu0
  %v853 = vadd.f32 %v148, %v852
  %854 = vmatmul.bf16.gmra.mxu0 %v490
  %v855 = vpop.f32.mrf.mxu0
  %v856 = vadd.f32 %v148, %v855
  %v857 = vpop.f32.mrf.mxu0
  %v858 = vadd.f32 %v148, %v857
  %859 = vmatmul.bf16.gmra.mxu0 %v492
  %v860 = vpop.f32.mrf.mxu0
  %v861 = vadd.f32 %v148, %v860
  %v862 = vpop.f32.mrf.mxu0
  %v863 = vadd.f32 %v148, %v862
  %864 = vmatmul.bf16.gmra.mxu0 %v494
  %v865 = vpop.f32.mrf.mxu0
  %v866 = vadd.f32 %v148, %v865
  %v867 = vpop.f32.mrf.mxu0
  %v868 = vadd.f32 %v148, %v867
  %869 = vmatmul.bf16.gmra.mxu0 %v496
  %v870 = vpop.f32.mrf.mxu0
  %v871 = vadd.f32 %v148, %v870
  %v872 = vpop.f32.mrf.mxu0
  %v873 = vadd.f32 %v148, %v872
  %874 = vmatmul.bf16.gmra.mxu0 %v498
  %v875 = vpop.f32.mrf.mxu0
  %v876 = vadd.f32 %v148, %v875
  %v877 = vpop.f32.mrf.mxu0
  %v878 = vadd.f32 %v148, %v877
  %879 = vmatmul.bf16.gmra.mxu0 %v500
  %v880 = vpop.f32.mrf.mxu0
  %v881 = vadd.f32 %v148, %v880
  %v882 = vpop.f32.mrf.mxu0
  %v883 = vadd.f32 %v148, %v882
  %884 = vmatmul.bf16.gmra.mxu0 %v502
  %v885 = vpop.f32.mrf.mxu0
  %v886 = vadd.f32 %v148, %v885
  %v887 = vpop.f32.mrf.mxu0
  %v888 = vadd.f32 %v148, %v887
  %889 = vmatmul.bf16.gmra.mxu0 %v504
  %v890 = vpop.f32.mrf.mxu0
  %v891 = vadd.f32 %v148, %v890
  %v892 = vpop.f32.mrf.mxu0
  %v893 = vadd.f32 %v148, %v892
  %894 = vmatmul.bf16.gmra.mxu0 %v506
  %v895 = vpop.f32.mrf.mxu0
  %v896 = vadd.f32 %v148, %v895
  %v897 = vpop.f32.mrf.mxu0
  %v898 = vadd.f32 %v148, %v897
  %899 = vmatmul.bf16.gmra.mxu0 %v508
  %v900 = vpop.f32.mrf.mxu0
  %v901 = vadd.f32 %v148, %v900
  %v902 = vpop.f32.mrf.mxu0
  %v903 = vadd.f32 %v148, %v902
  %904 = vmatmul.bf16.gmra.mxu0 %v510
  %v905 = vpop.f32.mrf.mxu0
  %v906 = vadd.f32 %v148, %v905
  %v907 = vpop.f32.mrf.mxu0
  %v908 = vadd.f32 %v148, %v907
  %909 = vmatmul.bf16.gmra.mxu0 %v512
  %v910 = vpop.f32.mrf.mxu0
  %v911 = vadd.f32 %v148, %v910
  %v912 = vpop.f32.mrf.mxu0
  %v913 = vadd.f32 %v148, %v912
  %914 = vmatmul.bf16.gmra.mxu0 %v514
  %v915 = vpop.f32.mrf.mxu0
  %v916 = vadd.f32 %v148, %v915
  %v917 = vpop.f32.mrf.mxu0
  %v918 = vadd.f32 %v148, %v917
  %919 = vmatmul.bf16.gmra.mxu0 %v516
  %v920 = vpop.f32.mrf.mxu0
  %v921 = vadd.f32 %v148, %v920
  %v922 = vpop.f32.mrf.mxu0
  %v923 = vadd.f32 %v148, %v922
  %924 = vmatmul.bf16.gmra.mxu0 %v518
  %v925 = vpop.f32.mrf.mxu0
  %v926 = vadd.f32 %v148, %v925
  %v927 = vpop.f32.mrf.mxu0
  %v928 = vadd.f32 %v148, %v927
  %929 = vmatmul.bf16.gmra.mxu0 %v520
  %v930 = vpop.f32.mrf.mxu0
  %v931 = vadd.f32 %v148, %v930
  %v932 = vpop.f32.mrf.mxu0
  %v933 = vadd.f32 %v148, %v932
  %934 = vmatmul.bf16.gmra.mxu0 %v522
  %v935 = vpop.f32.mrf.mxu0
  %v936 = vadd.f32 %v148, %v935
  %v937 = vpop.f32.mrf.mxu0
  %v938 = vadd.f32 %v148, %v937
  %939 = vmatmul.bf16.gmra.mxu0 %v524
  %v940 = vpop.f32.mrf.mxu0
  %v941 = vadd.f32 %v148, %v940
  %v942 = vpop.f32.mrf.mxu0
  %v943 = vadd.f32 %v148, %v942
  %944 = vmatmul.bf16.gmra.mxu0 %v526
  %v945 = vpop.f32.mrf.mxu0
  %v946 = vadd.f32 %v148, %v945
  %v947 = vpop.f32.mrf.mxu0
  %v948 = vadd.f32 %v148, %v947
  %949 = vmatmul.bf16.gmra.mxu0 %v528
  %v950 = vpop.f32.mrf.mxu0
  %v951 = vadd.f32 %v148, %v950
  %v952 = vpop.f32.mrf.mxu0
  %v953 = vadd.f32 %v148, %v952
  %954 = vmatmul.bf16.gmra.mxu0 %v530
  %v955 = vpop.f32.mrf.mxu0
  %v956 = vadd.f32 %v148, %v955
  %v957 = vpop.f32.mrf.mxu0
  %v958 = vadd.f32 %v148, %v957
  %959 = vmatmul.bf16.gmra.mxu0 %v532
  %v960 = vpop.f32.mrf.mxu0
  %v961 = vadd.f32 %v148, %v960
  %v962 = vpop.f32.mrf.mxu0
  %v963 = vadd.f32 %v148, %v962
  %964 = vmatmul.bf16.gmra.mxu0 %v534
  %v965 = vpop.f32.mrf.mxu0
  %v966 = vadd.f32 %v148, %v965
  %v967 = vpop.f32.mrf.mxu0
  %v968 = vadd.f32 %v148, %v967
  %969 = vmatmul.bf16.gmra.mxu0 %v536
  %v970 = vpop.f32.mrf.mxu0
  %v971 = vadd.f32 %v148, %v970
  %v972 = vpop.f32.mrf.mxu0
  %v973 = vadd.f32 %v148, %v972
  %974 = vmatmul.bf16.gmra.mxu0 %v538
  %v975 = vpop.f32.mrf.mxu0
  %v976 = vadd.f32 %v148, %v975
  %v977 = vpop.f32.mrf.mxu0
  %v978 = vadd.f32 %v148, %v977
  %979 = vmatmul.bf16.gmra.mxu0 %v540
  %v980 = vpop.f32.mrf.mxu0
  %v981 = vadd.f32 %v148, %v980
  %v982 = vpop.f32.mrf.mxu0
  %v983 = vadd.f32 %v148, %v982
  %984 = vmatmul.bf16.gmra.mxu0 %v542
  %v985 = vpop.f32.mrf.mxu0
  %v986 = vadd.f32 %v148, %v985
  %v987 = vpop.f32.mrf.mxu0
  %v988 = vadd.f32 %v148, %v987
  %989 = vmatmul.bf16.gmra.mxu0 %v544
  %v990 = vpop.f32.mrf.mxu0
  %v991 = vadd.f32 %v148, %v990
  %v992 = vpop.f32.mrf.mxu0
  %v993 = vadd.f32 %v148, %v992
  %994 = vmatmul.bf16.gmra.mxu0 %v546
  %v995 = vpop.f32.mrf.mxu0
  %v996 = vadd.f32 %v148, %v995
  %v997 = vpop.f32.mrf.mxu0
  %v998 = vadd.f32 %v148, %v997
  %999 = vmatmul.bf16.gmra.mxu0 %v548
  %v1000 = vpop.f32.mrf.mxu0
  %v1001 = vadd.f32 %v148, %v1000
  %v1002 = vpop.f32.mrf.mxu0
  %v1003 = vadd.f32 %v148, %v1002
  %1004 = vdwg.mxu0
  %1005 = vmatpush.bf16.msra.mxu0 %v729
  %1006 = vmatpush.bf16.msra.mxu0 %v728
  %1007 = vmatpush.bf16.msra.mxu0 %v727
  %1008 = vmatpush.bf16.msra.mxu0 %v726
  %1009 = vmatpush.bf16.msra.mxu0 %v725
  %1010 = vmatpush.bf16.msra.mxu0 %v724
  %1011 = vmatpush.bf16.msra.mxu0 %v723
  %1012 = vmatpush.bf16.msra.mxu0 %v722
  %1013 = vmatmul.bf16.gmra.mxu0 %v451
  %v1014 = vpop.f32.mrf.mxu0
  %v1015 = vadd.f32 %v756, %v1014
  %v1016 = vpop.f32.mrf.mxu0
  %v1017 = vadd.f32 %v758, %v1016
  %1018 = vmatmul.bf16.gmra.mxu0 %v453
  %v1019 = vpop.f32.mrf.mxu0
  %v1020 = vadd.f32 %v761, %v1019
  %v1021 = vpop.f32.mrf.mxu0
  %v1022 = vadd.f32 %v763, %v1021
  %1023 = vmatmul.bf16.gmra.mxu0 %v455
  %v1024 = vpop.f32.mrf.mxu0
  %v1025 = vadd.f32 %v766, %v1024
  %v1026 = vpop.f32.mrf.mxu0
  %v1027 = vadd.f32 %v768, %v1026
  %1028 = vmatmul.bf16.gmra.mxu0 %v457
  %v1029 = vpop.f32.mrf.mxu0
  %v1030 = vadd.f32 %v771, %v1029
  %v1031 = vpop.f32.mrf.mxu0
  %v1032 = vadd.f32 %v773, %v1031
  %1033 = vmatmul.bf16.gmra.mxu0 %v459
  %v1034 = vpop.f32.mrf.mxu0
  %v1035 = vadd.f32 %v776, %v1034
  %v1036 = vpop.f32.mrf.mxu0
  %v1037 = vadd.f32 %v778, %v1036
  %1038 = vmatmul.bf16.gmra.mxu0 %v461
  %v1039 = vpop.f32.mrf.mxu0
  %v1040 = vadd.f32 %v781, %v1039
  %v1041 = vpop.f32.mrf.mxu0
  %v1042 = vadd.f32 %v783, %v1041
  %1043 = vmatmul.bf16.gmra.mxu0 %v463
  %v1044 = vpop.f32.mrf.mxu0
  %v1045 = vadd.f32 %v786, %v1044
  %v1046 = vpop.f32.mrf.mxu0
  %v1047 = vadd.f32 %v788, %v1046
  %1048 = vmatmul.bf16.gmra.mxu0 %v465
  %v1049 = vpop.f32.mrf.mxu0
  %v1050 = vadd.f32 %v791, %v1049
  %v1051 = vpop.f32.mrf.mxu0
  %v1052 = vadd.f32 %v793, %v1051
  %1053 = vmatmul.bf16.gmra.mxu0 %v467
  %v1054 = vpop.f32.mrf.mxu0
  %v1055 = vadd.f32 %v796, %v1054
  %v1056 = vpop.f32.mrf.mxu0
  %v1057 = vadd.f32 %v798, %v1056
  %1058 = vmatmul.bf16.gmra.mxu0 %v469
  %v1059 = vpop.f32.mrf.mxu0
  %v1060 = vadd.f32 %v801, %v1059
  %v1061 = vpop.f32.mrf.mxu0
  %v1062 = vadd.f32 %v803, %v1061
  %1063 = vmatmul.bf16.gmra.mxu0 %v471
  %v1064 = vpop.f32.mrf.mxu0
  %v1065 = vadd.f32 %v806, %v1064
  %v1066 = vpop.f32.mrf.mxu0
  %v1067 = vadd.f32 %v808, %v1066
  %1068 = vmatmul.bf16.gmra.mxu0 %v473
  %v1069 = vpop.f32.mrf.mxu0
  %v1070 = vadd.f32 %v811, %v1069
  %v1071 = vpop.f32.mrf.mxu0
  %v1072 = vadd.f32 %v813, %v1071
  %1073 = vmatmul.bf16.gmra.mxu0 %v475
  %v1074 = vpop.f32.mrf.mxu0
  %v1075 = vadd.f32 %v816, %v1074
  %v1076 = vpop.f32.mrf.mxu0
  %v1077 = vadd.f32 %v818, %v1076
  %1078 = vmatmul.bf16.gmra.mxu0 %v477
  %v1079 = vpop.f32.mrf.mxu0
  %v1080 = vadd.f32 %v821, %v1079
  %v1081 = vpop.f32.mrf.mxu0
  %v1082 = vadd.f32 %v823, %v1081
  %1083 = vmatmul.bf16.gmra.mxu0 %v479
  %v1084 = vpop.f32.mrf.mxu0
  %v1085 = vadd.f32 %v826, %v1084
  %v1086 = vpop.f32.mrf.mxu0
  %v1087 = vadd.f32 %v828, %v1086
  %1088 = vmatmul.bf16.gmra.mxu0 %v481
  %v1089 = vpop.f32.mrf.mxu0
  %v1090 = vadd.f32 %v831, %v1089
  %v1091 = vpop.f32.mrf.mxu0
  %v1092 = vadd.f32 %v833, %v1091
  %1093 = vmatmul.bf16.gmra.mxu0 %v483
  %v1094 = vpop.f32.mrf.mxu0
  %v1095 = vadd.f32 %v836, %v1094
  %v1096 = vpop.f32.mrf.mxu0
  %v1097 = vadd.f32 %v838, %v1096
  %1098 = vmatmul.bf16.gmra.mxu0 %v485
  %v1099 = vpop.f32.mrf.mxu0
  %v1100 = vadd.f32 %v841, %v1099
  %v1101 = vpop.f32.mrf.mxu0
  %v1102 = vadd.f32 %v843, %v1101
  %1103 = vmatmul.bf16.gmra.mxu0 %v487
  %v1104 = vpop.f32.mrf.mxu0
  %v1105 = vadd.f32 %v846, %v1104
  %v1106 = vpop.f32.mrf.mxu0
  %v1107 = vadd.f32 %v848, %v1106
  %1108 = vmatmul.bf16.gmra.mxu0 %v489
  %v1109 = vpop.f32.mrf.mxu0
  %v1110 = vadd.f32 %v851, %v1109
  %v1111 = vpop.f32.mrf.mxu0
  %v1112 = vadd.f32 %v853, %v1111
  %1113 = vmatmul.bf16.gmra.mxu0 %v491
  %v1114 = vpop.f32.mrf.mxu0
  %v1115 = vadd.f32 %v856, %v1114
  %v1116 = vpop.f32.mrf.mxu0
  %v1117 = vadd.f32 %v858, %v1116
  %1118 = vmatmul.bf16.gmra.mxu0 %v493
  %v1119 = vpop.f32.mrf.mxu0
  %v1120 = vadd.f32 %v861, %v1119
  %v1121 = vpop.f32.mrf.mxu0
  %v1122 = vadd.f32 %v863, %v1121
  %1123 = vmatmul.bf16.gmra.mxu0 %v495
  %v1124 = vpop.f32.mrf.mxu0
  %v1125 = vadd.f32 %v866, %v1124
  %v1126 = vpop.f32.mrf.mxu0
  %v1127 = vadd.f32 %v868, %v1126
  %1128 = vmatmul.bf16.gmra.mxu0 %v497
  %v1129 = vpop.f32.mrf.mxu0
  %v1130 = vadd.f32 %v871, %v1129
  %v1131 = vpop.f32.mrf.mxu0
  %v1132 = vadd.f32 %v873, %v1131
  %1133 = vmatmul.bf16.gmra.mxu0 %v499
  %v1134 = vpop.f32.mrf.mxu0
  %v1135 = vadd.f32 %v876, %v1134
  %v1136 = vpop.f32.mrf.mxu0
  %v1137 = vadd.f32 %v878, %v1136
  %1138 = vmatmul.bf16.gmra.mxu0 %v501
  %v1139 = vpop.f32.mrf.mxu0
  %v1140 = vadd.f32 %v881, %v1139
  %v1141 = vpop.f32.mrf.mxu0
  %v1142 = vadd.f32 %v883, %v1141
  %1143 = vmatmul.bf16.gmra.mxu0 %v503
  %v1144 = vpop.f32.mrf.mxu0
  %v1145 = vadd.f32 %v886, %v1144
  %v1146 = vpop.f32.mrf.mxu0
  %v1147 = vadd.f32 %v888, %v1146
  %1148 = vmatmul.bf16.gmra.mxu0 %v505
  %v1149 = vpop.f32.mrf.mxu0
  %v1150 = vadd.f32 %v891, %v1149
  %v1151 = vpop.f32.mrf.mxu0
  %v1152 = vadd.f32 %v893, %v1151
  %1153 = vmatmul.bf16.gmra.mxu0 %v507
  %v1154 = vpop.f32.mrf.mxu0
  %v1155 = vadd.f32 %v896, %v1154
  %v1156 = vpop.f32.mrf.mxu0
  %v1157 = vadd.f32 %v898, %v1156
  %1158 = vmatmul.bf16.gmra.mxu0 %v509
  %v1159 = vpop.f32.mrf.mxu0
  %v1160 = vadd.f32 %v901, %v1159
  %v1161 = vpop.f32.mrf.mxu0
  %v1162 = vadd.f32 %v903, %v1161
  %1163 = vmatmul.bf16.gmra.mxu0 %v511
  %v1164 = vpop.f32.mrf.mxu0
  %v1165 = vadd.f32 %v906, %v1164
  %v1166 = vpop.f32.mrf.mxu0
  %v1167 = vadd.f32 %v908, %v1166
  %1168 = vmatmul.bf16.gmra.mxu0 %v513
  %v1169 = vpop.f32.mrf.mxu0
  %v1170 = vadd.f32 %v911, %v1169
  %v1171 = vpop.f32.mrf.mxu0
  %v1172 = vadd.f32 %v913, %v1171
  %1173 = vmatmul.bf16.gmra.mxu0 %v515
  %v1174 = vpop.f32.mrf.mxu0
  %v1175 = vadd.f32 %v916, %v1174
  %v1176 = vpop.f32.mrf.mxu0
  %v1177 = vadd.f32 %v918, %v1176
  %1178 = vmatmul.bf16.gmra.mxu0 %v517
  %v1179 = vpop.f32.mrf.mxu0
  %v1180 = vadd.f32 %v921, %v1179
  %v1181 = vpop.f32.mrf.mxu0
  %v1182 = vadd.f32 %v923, %v1181
  %1183 = vmatmul.bf16.gmra.mxu0 %v519
  %v1184 = vpop.f32.mrf.mxu0
  %v1185 = vadd.f32 %v926, %v1184
  %v1186 = vpop.f32.mrf.mxu0
  %v1187 = vadd.f32 %v928, %v1186
  %1188 = vmatmul.bf16.gmra.mxu0 %v521
  %v1189 = vpop.f32.mrf.mxu0
  %v1190 = vadd.f32 %v931, %v1189
  %v1191 = vpop.f32.mrf.mxu0
  %v1192 = vadd.f32 %v933, %v1191
  %1193 = vmatmul.bf16.gmra.mxu0 %v523
  %v1194 = vpop.f32.mrf.mxu0
  %v1195 = vadd.f32 %v936, %v1194
  %v1196 = vpop.f32.mrf.mxu0
  %v1197 = vadd.f32 %v938, %v1196
  %1198 = vmatmul.bf16.gmra.mxu0 %v525
  %v1199 = vpop.f32.mrf.mxu0
  %v1200 = vadd.f32 %v941, %v1199
  %v1201 = vpop.f32.mrf.mxu0
  %v1202 = vadd.f32 %v943, %v1201
  %1203 = vmatmul.bf16.gmra.mxu0 %v527
  %v1204 = vpop.f32.mrf.mxu0
  %v1205 = vadd.f32 %v946, %v1204
  %v1206 = vpop.f32.mrf.mxu0
  %v1207 = vadd.f32 %v948, %v1206
  %1208 = vmatmul.bf16.gmra.mxu0 %v529
  %v1209 = vpop.f32.mrf.mxu0
  %v1210 = vadd.f32 %v951, %v1209
  %v1211 = vpop.f32.mrf.mxu0
  %v1212 = vadd.f32 %v953, %v1211
  %1213 = vmatmul.bf16.gmra.mxu0 %v531
  %v1214 = vpop.f32.mrf.mxu0
  %v1215 = vadd.f32 %v956, %v1214
  %v1216 = vpop.f32.mrf.mxu0
  %v1217 = vadd.f32 %v958, %v1216
  %1218 = vmatmul.bf16.gmra.mxu0 %v533
  %v1219 = vpop.f32.mrf.mxu0
  %v1220 = vadd.f32 %v961, %v1219
  %v1221 = vpop.f32.mrf.mxu0
  %v1222 = vadd.f32 %v963, %v1221
  %1223 = vmatmul.bf16.gmra.mxu0 %v535
  %v1224 = vpop.f32.mrf.mxu0
  %v1225 = vadd.f32 %v966, %v1224
  %v1226 = vpop.f32.mrf.mxu0
  %v1227 = vadd.f32 %v968, %v1226
  %1228 = vmatmul.bf16.gmra.mxu0 %v537
  %v1229 = vpop.f32.mrf.mxu0
  %v1230 = vadd.f32 %v971, %v1229
  %v1231 = vpop.f32.mrf.mxu0
  %v1232 = vadd.f32 %v973, %v1231
  %1233 = vmatmul.bf16.gmra.mxu0 %v539
  %v1234 = vpop.f32.mrf.mxu0
  %v1235 = vadd.f32 %v976, %v1234
  %v1236 = vpop.f32.mrf.mxu0
  %v1237 = vadd.f32 %v978, %v1236
  %1238 = vmatmul.bf16.gmra.mxu0 %v541
  %v1239 = vpop.f32.mrf.mxu0
  %v1240 = vadd.f32 %v981, %v1239
  %v1241 = vpop.f32.mrf.mxu0
  %v1242 = vadd.f32 %v983, %v1241
  %1243 = vmatmul.bf16.gmra.mxu0 %v543
  %v1244 = vpop.f32.mrf.mxu0
  %v1245 = vadd.f32 %v986, %v1244
  %v1246 = vpop.f32.mrf.mxu0
  %v1247 = vadd.f32 %v988, %v1246
  %1248 = vmatmul.bf16.gmra.mxu0 %v545
  %v1249 = vpop.f32.mrf.mxu0
  %v1250 = vadd.f32 %v991, %v1249
  %v1251 = vpop.f32.mrf.mxu0
  %v1252 = vadd.f32 %v993, %v1251
  %1253 = vmatmul.bf16.gmra.mxu0 %v547
  %v1254 = vpop.f32.mrf.mxu0
  %v1255 = vadd.f32 %v996, %v1254
  %v1256 = vpop.f32.mrf.mxu0
  %v1257 = vadd.f32 %v998, %v1256
  %1258 = vmatmul.bf16.gmra.mxu0 %v549
  %v1259 = vpop.f32.mrf.mxu0
  %v1260 = vadd.f32 %v1001, %v1259
  %v1261 = vpop.f32.mrf.mxu0
  %v1262 = vadd.f32 %v1003, %v1261
  %1263 = vdwg.mxu0
  %v1264 = vmax.f32 %v1015, 0.0
  %v1265 = vmax.f32 %v1017, 0.0
  %v1266 = vmax.f32 %v1020, 0.0
  %v1267 = vmax.f32 %v1022, 0.0
  %v1268 = vmax.f32 %v1025, 0.0
  %v1269 = vmax.f32 %v1027, 0.0
  %v1270 = vmax.f32 %v1030, 0.0
  %v1271 = vmax.f32 %v1032, 0.0
  %v1272 = vmax.f32 %v1035, 0.0
  %v1273 = vmax.f32 %v1037, 0.0
  %v1274 = vmax.f32 %v1040, 0.0
  %v1275 = vmax.f32 %v1042, 0.0
  %v1276 = vmax.f32 %v1045, 0.0
  %v1277 = vmax.f32 %v1047, 0.0
  %v1278 = vmax.f32 %v1050, 0.0
  %v1279 = vmax.f32 %v1052, 0.0
  %v1280 = vmax.f32 %v1055, 0.0
  %v1281 = vmax.f32 %v1057, 0.0
  %v1282 = vmax.f32 %v1060, 0.0
  %v1283 = vmax.f32 %v1062, 0.0
  %v1284 = vmax.f32 %v1065, 0.0
  %v1285 = vmax.f32 %v1067, 0.0
  %v1286 = vmax.f32 %v1070, 0.0
  %v1287 = vmax.f32 %v1072, 0.0
  %v1288 = vmax.f32 %v1075, 0.0
  %v1289 = vmax.f32 %v1077, 0.0
  %v1290 = vmax.f32 %v1080, 0.0
  %v1291 = vmax.f32 %v1082, 0.0
  %v1292 = vmax.f32 %v1085, 0.0
  %v1293 = vmax.f32 %v1087, 0.0
  %v1294 = vmax.f32 %v1090, 0.0
  %v1295 = vmax.f32 %v1092, 0.0
  %v1296 = vmax.f32 %v1095, 0.0
  %v1297 = vmax.f32 %v1097, 0.0
  %v1298 = vmax.f32 %v1100, 0.0
  %v1299 = vmax.f32 %v1102, 0.0
  %v1300 = vmax.f32 %v1105, 0.0
  %v1301 = vmax.f32 %v1107, 0.0
  %v1302 = vmax.f32 %v1110, 0.0
  %v1303 = vmax.f32 %v1112, 0.0
  %v1304 = vmax.f32 %v1115, 0.0
  %v1305 = vmax.f32 %v1117, 0.0
  %v1306 = vmax.f32 %v1120, 0.0
  %v1307 = vmax.f32 %v1122, 0.0
  %v1308 = vmax.f32 %v1125, 0.0
  %v1309 = vmax.f32 %v1127, 0.0
  %v1310 = vmax.f32 %v1130, 0.0
  %v1311 = vmax.f32 %v1132, 0.0
  %v1312 = vmax.f32 %v1135, 0.0
  %v1313 = vmax.f32 %v1137, 0.0
  %v1314 = vmax.f32 %v1140, 0.0
  %v1315 = vmax.f32 %v1142, 0.0
  %v1316 = vmax.f32 %v1145, 0.0
  %v1317 = vmax.f32 %v1147, 0.0
  %v1318 = vmax.f32 %v1150, 0.0
  %v1319 = vmax.f32 %v1152, 0.0
  %v1320 = vmax.f32 %v1155, 0.0
  %v1321 = vmax.f32 %v1157, 0.0
  %v1322 = vmax.f32 %v1160, 0.0
  %v1323 = vmax.f32 %v1162, 0.0
  %v1324 = vmax.f32 %v1165, 0.0
  %v1325 = vmax.f32 %v1167, 0.0
  %v1326 = vmax.f32 %v1170, 0.0
  %v1327 = vmax.f32 %v1172, 0.0
  %v1328 = vmax.f32 %v1175, 0.0
  %v1329 = vmax.f32 %v1177, 0.0
  %v1330 = vmax.f32 %v1180, 0.0
  %v1331 = vmax.f32 %v1182, 0.0
  %v1332 = vmax.f32 %v1185, 0.0
  %v1333 = vmax.f32 %v1187, 0.0
  %v1334 = vmax.f32 %v1190, 0.0
  %v1335 = vmax.f32 %v1192, 0.0
  %v1336 = vmax.f32 %v1195, 0.0
  %v1337 = vmax.f32 %v1197, 0.0
  %v1338 = vmax.f32 %v1200, 0.0
  %v1339 = vmax.f32 %v1202, 0.0
  %v1340 = vmax.f32 %v1205, 0.0
  %v1341 = vmax.f32 %v1207, 0.0
  %v1342 = vmax.f32 %v1210, 0.0
  %v1343 = vmax.f32 %v1212, 0.0
  %v1344 = vmax.f32 %v1215, 0.0
  %v1345 = vmax.f32 %v1217, 0.0
  %v1346 = vmax.f32 %v1220, 0.0
  %v1347 = vmax.f32 %v1222, 0.0
  %v1348 = vmax.f32 %v1225, 0.0
  %v1349 = vmax.f32 %v1227, 0.0
  %v1350 = vmax.f32 %v1230, 0.0
  %v1351 = vmax.f32 %v1232, 0.0
  %v1352 = vmax.f32 %v1235, 0.0
  %v1353 = vmax.f32 %v1237, 0.0
  %v1354 = vmax.f32 %v1240, 0.0
  %v1355 = vmax.f32 %v1242, 0.0
  %v1356 = vmax.f32 %v1245, 0.0
  %v1357 = vmax.f32 %v1247, 0.0
  %v1358 = vmax.f32 %v1250, 0.0
  %v1359 = vmax.f32 %v1252, 0.0
  %v1360 = vmax.f32 %v1255, 0.0
  %v1361 = vmax.f32 %v1257, 0.0
  %v1362 = vmax.f32 %v1260, 0.0
  %v1363 = vmax.f32 %v1262, 0.0
  %v1364 = vpack.c.bf16 %v1264, %v1264
  %v1365 = vpack.c.bf16 %v1265, %v1265
  %v1366 = vpack.c.bf16 %v1266, %v1266
  %v1367 = vpack.c.bf16 %v1267, %v1267
  %v1368 = vpack.c.bf16 %v1268, %v1268
  %v1369 = vpack.c.bf16 %v1269, %v1269
  %v1370 = vpack.c.bf16 %v1270, %v1270
  %v1371 = vpack.c.bf16 %v1271, %v1271
  %v1372 = vpack.c.bf16 %v1272, %v1272
  %v1373 = vpack.c.bf16 %v1273, %v1273
  %v1374 = vpack.c.bf16 %v1274, %v1274
  %v1375 = vpack.c.bf16 %v1275, %v1275
  %v1376 = vpack.c.bf16 %v1276, %v1276
  %v1377 = vpack.c.bf16 %v1277, %v1277
  %v1378 = vpack.c.bf16 %v1278, %v1278
  %v1379 = vpack.c.bf16 %v1279, %v1279
  %v1380 = vpack.c.bf16 %v1280, %v1280
  %v1381 = vpack.c.bf16 %v1281, %v1281
  %v1382 = vpack.c.bf16 %v1282, %v1282
  %v1383 = vpack.c.bf16 %v1283, %v1283
  %v1384 = vpack.c.bf16 %v1284, %v1284
  %v1385 = vpack.c.bf16 %v1285, %v1285
  %v1386 = vpack.c.bf16 %v1286, %v1286
  %v1387 = vpack.c.bf16 %v1287, %v1287
  %v1388 = vpack.c.bf16 %v1288, %v1288
  %v1389 = vpack.c.bf16 %v1289, %v1289
  %v1390 = vpack.c.bf16 %v1290, %v1290
  %v1391 = vpack.c.bf16 %v1291, %v1291
  %v1392 = vpack.c.bf16 %v1292, %v1292
  %v1393 = vpack.c.bf16 %v1293, %v1293
  %v1394 = vpack.c.bf16 %v1294, %v1294
  %v1395 = vpack.c.bf16 %v1295, %v1295
  %v1396 = vpack.c.bf16 %v1296, %v1296
  %v1397 = vpack.c.bf16 %v1297, %v1297
  %v1398 = vpack.c.bf16 %v1298, %v1298
  %v1399 = vpack.c.bf16 %v1299, %v1299
  %v1400 = vpack.c.bf16 %v1300, %v1300
  %v1401 = vpack.c.bf16 %v1301, %v1301
  %v1402 = vpack.c.bf16 %v1302, %v1302
  %v1403 = vpack.c.bf16 %v1303, %v1303
  %v1404 = vpack.c.bf16 %v1304, %v1304
  %v1405 = vpack.c.bf16 %v1305, %v1305
  %v1406 = vpack.c.bf16 %v1306, %v1306
  %v1407 = vpack.c.bf16 %v1307, %v1307
  %v1408 = vpack.c.bf16 %v1308, %v1308
  %v1409 = vpack.c.bf16 %v1309, %v1309
  %v1410 = vpack.c.bf16 %v1310, %v1310
  %v1411 = vpack.c.bf16 %v1311, %v1311
  %v1412 = vpack.c.bf16 %v1312, %v1312
  %v1413 = vpack.c.bf16 %v1313, %v1313
  %v1414 = vpack.c.bf16 %v1314, %v1314
  %v1415 = vpack.c.bf16 %v1315, %v1315
  %v1416 = vpack.c.bf16 %v1316, %v1316
  %v1417 = vpack.c.bf16 %v1317, %v1317
  %v1418 = vpack.c.bf16 %v1318, %v1318
  %v1419 = vpack.c.bf16 %v1319, %v1319
  %v1420 = vpack.c.bf16 %v1320, %v1320
  %v1421 = vpack.c.bf16 %v1321, %v1321
  %v1422 = vpack.c.bf16 %v1322, %v1322
  %v1423 = vpack.c.bf16 %v1323, %v1323
  %v1424 = vpack.c.bf16 %v1324, %v1324
  %v1425 = vpack.c.bf16 %v1325, %v1325
  %v1426 = vpack.c.bf16 %v1326, %v1326
  %v1427 = vpack.c.bf16 %v1327, %v1327
  %v1428 = vpack.c.bf16 %v1328, %v1328
  %v1429 = vpack.c.bf16 %v1329, %v1329
  %v1430 = vpack.c.bf16 %v1330, %v1330
  %v1431 = vpack.c.bf16 %v1331, %v1331
  %v1432 = vpack.c.bf16 %v1332, %v1332
  %v1433 = vpack.c.bf16 %v1333, %v1333
  %v1434 = vpack.c.bf16 %v1334, %v1334
  %v1435 = vpack.c.bf16 %v1335, %v1335
  %v1436 = vpack.c.bf16 %v1336, %v1336
  %v1437 = vpack.c.bf16 %v1337, %v1337
  %v1438 = vpack.c.bf16 %v1338, %v1338
  %v1439 = vpack.c.bf16 %v1339, %v1339
  %v1440 = vpack.c.bf16 %v1340, %v1340
  %v1441 = vpack.c.bf16 %v1341, %v1341
  %v1442 = vpack.c.bf16 %v1342, %v1342
  %v1443 = vpack.c.bf16 %v1343, %v1343
  %v1444 = vpack.c.bf16 %v1344, %v1344
  %v1445 = vpack.c.bf16 %v1345, %v1345
  %v1446 = vpack.c.bf16 %v1346, %v1346
  %v1447 = vpack.c.bf16 %v1347, %v1347
  %v1448 = vpack.c.bf16 %v1348, %v1348
  %v1449 = vpack.c.bf16 %v1349, %v1349
  %v1450 = vpack.c.bf16 %v1350, %v1350
  %v1451 = vpack.c.bf16 %v1351, %v1351
  %v1452 = vpack.c.bf16 %v1352, %v1352
  %v1453 = vpack.c.bf16 %v1353, %v1353
  %v1454 = vpack.c.bf16 %v1354, %v1354
  %v1455 = vpack.c.bf16 %v1355, %v1355
  %v1456 = vpack.c.bf16 %v1356, %v1356
  %v1457 = vpack.c.bf16 %v1357, %v1357
  %v1458 = vpack.c.bf16 %v1358, %v1358
  %v1459 = vpack.c.bf16 %v1359, %v1359
  %v1460 = vpack.c.bf16 %v1360, %v1360
  %v1461 = vpack.c.bf16 %v1361, %v1361
  %v1462 = vpack.c.bf16 %v1362, %v1362
  %v1463 = vpack.c.bf16 %v1363, %v1363
  %vm1464 = vcmask 257024
  %1465 = vst.msk [vmem:[%s3] sm:$0xf] %vm1464, %v1364
  %1466 = vst.msk [vmem:[%s3 + $0x4] sm:$0xf] %vm1464, %v1365
  %1467 = vst.msk [vmem:[%s3 + $0x8] sm:$0xf] %vm1464, %v1366
  %1468 = vst.msk [vmem:[%s3 + $0xc] sm:$0xf] %vm1464, %v1367
  %1469 = vst.msk [vmem:[%s3 + $0x10] sm:$0xf] %vm1464, %v1368
  %1470 = vst.msk [vmem:[%s3 + $0x14] sm:$0xf] %vm1464, %v1369
  %1471 = vst.msk [vmem:[%s3 + $0x18] sm:$0xf] %vm1464, %v1370
  %1472 = vst.msk [vmem:[%s3 + $0x1c] sm:$0xf] %vm1464, %v1371
  %1473 = vst.msk [vmem:[%s3 + $0x20] sm:$0xf] %vm1464, %v1372
  %1474 = vst.msk [vmem:[%s3 + $0x24] sm:$0xf] %vm1464, %v1373
  %1475 = vst.msk [vmem:[%s3 + $0x28] sm:$0xf] %vm1464, %v1374
  %1476 = vst.msk [vmem:[%s3 + $0x2c] sm:$0xf] %vm1464, %v1375
  %1477 = vst.msk [vmem:[%s3 + $0x30] sm:$0xf] %vm1464, %v1376
  %1478 = vst.msk [vmem:[%s3 + $0x34] sm:$0xf] %vm1464, %v1377
  %1479 = vst.msk [vmem:[%s3 + $0x38] sm:$0xf] %vm1464, %v1378
  %1480 = vst.msk [vmem:[%s3 + $0x3c] sm:$0xf] %vm1464, %v1379
  %1481 = vst.msk [vmem:[%s3 + $0x40] sm:$0xf] %vm1464, %v1380
  %1482 = vst.msk [vmem:[%s3 + $0x44] sm:$0xf] %vm1464, %v1381
  %1483 = vst.msk [vmem:[%s3 + $0x48] sm:$0xf] %vm1464, %v1382
  %1484 = vst.msk [vmem:[%s3 + $0x4c] sm:$0xf] %vm1464, %v1383
  %1485 = vst.msk [vmem:[%s3 + $0x50] sm:$0xf] %vm1464, %v1384
  %1486 = vst.msk [vmem:[%s3 + $0x54] sm:$0xf] %vm1464, %v1385
  %1487 = vst.msk [vmem:[%s3 + $0x58] sm:$0xf] %vm1464, %v1386
  %1488 = vst.msk [vmem:[%s3 + $0x5c] sm:$0xf] %vm1464, %v1387
  %1489 = vst.msk [vmem:[%s3 + $0x60] sm:$0xf] %vm1464, %v1388
  %1490 = vst.msk [vmem:[%s3 + $0x64] sm:$0xf] %vm1464, %v1389
  %1491 = vst.msk [vmem:[%s3 + $0x68] sm:$0xf] %vm1464, %v1390
  %1492 = vst.msk [vmem:[%s3 + $0x6c] sm:$0xf] %vm1464, %v1391
  %1493 = vst.msk [vmem:[%s3 + $0x70] sm:$0xf] %vm1464, %v1392
  %1494 = vst.msk [vmem:[%s3 + $0x74] sm:$0xf] %vm1464, %v1393
  %1495 = vst.msk [vmem:[%s3 + $0x78] sm:$0xf] %vm1464, %v1394
  %1496 = vst.msk [vmem:[%s3 + $0x7c] sm:$0xf] %vm1464, %v1395
  %1497 = vst.msk [vmem:[%s3 + $0x80] sm:$0xf] %vm1464, %v1396
  %1498 = vst.msk [vmem:[%s3 + $0x84] sm:$0xf] %vm1464, %v1397
  %1499 = vst.msk [vmem:[%s3 + $0x88] sm:$0xf] %vm1464, %v1398
  %1500 = vst.msk [vmem:[%s3 + $0x8c] sm:$0xf] %vm1464, %v1399
  %1501 = vst.msk [vmem:[%s3 + $0x90] sm:$0xf] %vm1464, %v1400
  %1502 = vst.msk [vmem:[%s3 + $0x94] sm:$0xf] %vm1464, %v1401
  %1503 = vst.msk [vmem:[%s3 + $0x98] sm:$0xf] %vm1464, %v1402
  %1504 = vst.msk [vmem:[%s3 + $0x9c] sm:$0xf] %vm1464, %v1403
  %1505 = vst.msk [vmem:[%s3 + $0xa0] sm:$0xf] %vm1464, %v1404
  %1506 = vst.msk [vmem:[%s3 + $0xa4] sm:$0xf] %vm1464, %v1405
  %1507 = vst.msk [vmem:[%s3 + $0xa8] sm:$0xf] %vm1464, %v1406
  %1508 = vst.msk [vmem:[%s3 + $0xac] sm:$0xf] %vm1464, %v1407
  %1509 = vst.msk [vmem:[%s3 + $0xb0] sm:$0xf] %vm1464, %v1408
  %1510 = vst.msk [vmem:[%s3 + $0xb4] sm:$0xf] %vm1464, %v1409
  %1511 = vst.msk [vmem:[%s3 + $0xb8] sm:$0xf] %vm1464, %v1410
  %1512 = vst.msk [vmem:[%s3 + $0xbc] sm:$0xf] %vm1464, %v1411
  %1513 = vst.msk [vmem:[%s3 + $0xc0] sm:$0xf] %vm1464, %v1412
  %1514 = vst.msk [vmem:[%s3 + $0xc4] sm:$0xf] %vm1464, %v1413
  %1515 = vst.msk [vmem:[%s3 + $0xc8] sm:$0xf] %vm1464, %v1414
  %1516 = vst.msk [vmem:[%s3 + $0xcc] sm:$0xf] %vm1464, %v1415
  %1517 = vst.msk [vmem:[%s3 + $0xd0] sm:$0xf] %vm1464, %v1416
  %1518 = vst.msk [vmem:[%s3 + $0xd4] sm:$0xf] %vm1464, %v1417
  %1519 = vst.msk [vmem:[%s3 + $0xd8] sm:$0xf] %vm1464, %v1418
  %1520 = vst.msk [vmem:[%s3 + $0xdc] sm:$0xf] %vm1464, %v1419
  %1521 = vst.msk [vmem:[%s3 + $0xe0] sm:$0xf] %vm1464, %v1420
  %1522 = vst.msk [vmem:[%s3 + $0xe4] sm:$0xf] %vm1464, %v1421
  %1523 = vst.msk [vmem:[%s3 + $0xe8] sm:$0xf] %vm1464, %v1422
  %1524 = vst.msk [vmem:[%s3 + $0xec] sm:$0xf] %vm1464, %v1423
  %1525 = vst.msk [vmem:[%s3 + $0xf0] sm:$0xf] %vm1464, %v1424
  %1526 = vst.msk [vmem:[%s3 + $0xf4] sm:$0xf] %vm1464, %v1425
  %1527 = vst.msk [vmem:[%s3 + $0xf8] sm:$0xf] %vm1464, %v1426
  %1528 = vst.msk [vmem:[%s3 + $0xfc] sm:$0xf] %vm1464, %v1427
  %1529 = vst.msk [vmem:[%s3 + $0x100] sm:$0xf] %vm1464, %v1428
  %1530 = vst.msk [vmem:[%s3 + $0x104] sm:$0xf] %vm1464, %v1429
  %1531 = vst.msk [vmem:[%s3 + $0x108] sm:$0xf] %vm1464, %v1430
  %1532 = vst.msk [vmem:[%s3 + $0x10c] sm:$0xf] %vm1464, %v1431
  %1533 = vst.msk [vmem:[%s3 + $0x110] sm:$0xf] %vm1464, %v1432
  %1534 = vst.msk [vmem:[%s3 + $0x114] sm:$0xf] %vm1464, %v1433
  %1535 = vst.msk [vmem:[%s3 + $0x118] sm:$0xf] %vm1464, %v1434
  %1536 = vst.msk [vmem:[%s3 + $0x11c] sm:$0xf] %vm1464, %v1435
  %1537 = vst.msk [vmem:[%s3 + $0x120] sm:$0xf] %vm1464, %v1436
  %1538 = vst.msk [vmem:[%s3 + $0x124] sm:$0xf] %vm1464, %v1437
  %1539 = vst.msk [vmem:[%s3 + $0x128] sm:$0xf] %vm1464, %v1438
  %1540 = vst.msk [vmem:[%s3 + $0x12c] sm:$0xf] %vm1464, %v1439
  %1541 = vst.msk [vmem:[%s3 + $0x130] sm:$0xf] %vm1464, %v1440
  %1542 = vst.msk [vmem:[%s3 + $0x134] sm:$0xf] %vm1464, %v1441
  %1543 = vst.msk [vmem:[%s3 + $0x138] sm:$0xf] %vm1464, %v1442
  %1544 = vst.msk [vmem:[%s3 + $0x13c] sm:$0xf] %vm1464, %v1443
  %1545 = vst.msk [vmem:[%s3 + $0x140] sm:$0xf] %vm1464, %v1444
  %1546 = vst.msk [vmem:[%s3 + $0x144] sm:$0xf] %vm1464, %v1445
  %1547 = vst.msk [vmem:[%s3 + $0x148] sm:$0xf] %vm1464, %v1446
  %1548 = vst.msk [vmem:[%s3 + $0x14c] sm:$0xf] %vm1464, %v1447
  %1549 = vst.msk [vmem:[%s3 + $0x150] sm:$0xf] %vm1464, %v1448
  %1550 = vst.msk [vmem:[%s3 + $0x154] sm:$0xf] %vm1464, %v1449
  %1551 = vst.msk [vmem:[%s3 + $0x158] sm:$0xf] %vm1464, %v1450
  %1552 = vst.msk [vmem:[%s3 + $0x15c] sm:$0xf] %vm1464, %v1451
  %1553 = vst.msk [vmem:[%s3 + $0x160] sm:$0xf] %vm1464, %v1452
  %1554 = vst.msk [vmem:[%s3 + $0x164] sm:$0xf] %vm1464, %v1453
  %1555 = vst.msk [vmem:[%s3 + $0x168] sm:$0xf] %vm1464, %v1454
  %1556 = vst.msk [vmem:[%s3 + $0x16c] sm:$0xf] %vm1464, %v1455
  %1557 = vst.msk [vmem:[%s3 + $0x170] sm:$0xf] %vm1464, %v1456
  %1558 = vst.msk [vmem:[%s3 + $0x174] sm:$0xf] %vm1464, %v1457
  %1559 = vst.msk [vmem:[%s3 + $0x178] sm:$0xf] %vm1464, %v1458
  %1560 = vst.msk [vmem:[%s3 + $0x17c] sm:$0xf] %vm1464, %v1459
  %1561 = vst.msk [vmem:[%s3 + $0x180] sm:$0xf] %vm1464, %v1460
  %1562 = vst.msk [vmem:[%s3 + $0x184] sm:$0xf] %vm1464, %v1461
  %1563 = vst.msk [vmem:[%s3 + $0x188] sm:$0xf] %vm1464, %v1462
  %1564 = vst.msk [vmem:[%s3 + $0x18c] sm:$0xf] %vm1464, %v1463
  // Predicated region
  $region14: #{_lambda_.4} parent=0 // pred_check
    _
  $region15: #{_lambda_.4} parent=0 // pred_check_branch
    %1566 = sbr.rel (0) target = $region17
  $region16: #{_lambda_.4} parent=0 // pred_region
    _
  $region17: #{_lambda_.4} parent=0 // pred_fallthru
    _
  // Predicated region
  $region18: #{_lambda_.4} parent=0 // pred_check
    _
  $region19: #{_lambda_.4} parent=0 // pred_check_branch
    %1568 = sbr.rel (0) target = $region21
  $region20: #{_lambda_.4} parent=0 // pred_region
    _
  $region21: #{_lambda_.4} parent=0 // pred_fallthru
    _

// kernel: _lambda_.5
$region0: #{_lambda_.5}
  #allocation0 [shape = 'u32[]', space=smem, size = 0x4, offset = 0x4, fixed_abs, tag = 'smem constant byte address 0x4 - core index']
  #allocation1 [shape = 'u32[72,128]{1,0:T(1,128)}', space=vmem, size = 0x9000, scoped, tag = 'internal scratch']
  %s0 = inlined_call_operand.vmem [shape: bf16[192,512], index: 0, kind: input, shape index: {}]
  %s1 = inlined_call_operand.vmem [shape: bf16[512,64], index: 1, kind: input, shape index: {}]
  %s2 = inlined_call_operand.vmem [shape: f32[1,64], index: 2, kind: input, shape index: {}]
  %s3 = inlined_call_operand.vmem [shape: bf16[192,64], index: 3, kind: output, shape index: {}]
  %s4 = sld [smem:[#allocation0]]
  $region22: #{_lambda_.5} parent=0
    _
  %s6 = ssub.s32 1, %s4
  %s7 = scalar_select 0, %s6, %s4
  // Predicated region
  $region2: #{_lambda_.5} parent=0 // pred_check
    _
  $region3: #{_lambda_.5} parent=0 // pred_check_branch
    %9 = sbr.rel (0) target = $region5
  $region4: #{_lambda_.5} parent=0 // pred_region
    _
  $region5: #{_lambda_.5} parent=0 // pred_fallthru
    _
  // Predicated region
  $region6: #{_lambda_.5} parent=0 // pred_check
    _
  $region7: #{_lambda_.5} parent=0 // pred_check_branch
    %11 = sbr.rel (0) target = $region9
  $region8: #{_lambda_.5} parent=0 // pred_region
    _
  $region9: #{_lambda_.5} parent=0 // pred_fallthru
    _
  // Predicated region
  $region10: #{_lambda_.5} parent=0 // pred_check
    _
  $region11: #{_lambda_.5} parent=0 // pred_check_branch
    %13 = sbr.rel (0) target = $region13
  $region12: #{_lambda_.5} parent=0 // pred_region
    _
  $region13: #{_lambda_.5} parent=0 // pred_fallthru
    _
  %v14 = vld [vmem:[%s0] sm:$0xff]
  %v15 = vld [vmem:[%s0 + $0x8] sm:$0xff]
  %v16 = vld [vmem:[%s0 + $0x10] sm:$0xff]
  %v17 = vld [vmem:[%s0 + $0x18] sm:$0xff]
  %v18 = vld [vmem:[%s0 + $0x20] sm:$0xff]
  %v19 = vld [vmem:[%s0 + $0x28] sm:$0xff]
  %v20 = vld [vmem:[%s0 + $0x30] sm:$0xff]
  %v21 = vld [vmem:[%s0 + $0x38] sm:$0xff]
  %v22 = vld [vmem:[%s0 + $0x40] sm:$0xff]
  %v23 = vld [vmem:[%s0 + $0x48] sm:$0xff]
  %v24 = vld [vmem:[%s0 + $0x50] sm:$0xff]
  %v25 = vld [vmem:[%s0 + $0x58] sm:$0xff]
  %v26 = vld [vmem:[%s0 + $0x60] sm:$0xff]
  %v27 = vld [vmem:[%s0 + $0x68] sm:$0xff]
  %v28 = vld [vmem:[%s0 + $0x70] sm:$0xff]
  %v29 = vld [vmem:[%s0 + $0x78] sm:$0xff]
  %v30 = vld [vmem:[%s0 + $0x80] sm:$0xff]
  %v31 = vld [vmem:[%s0 + $0x88] sm:$0xff]
  %v32 = vld [vmem:[%s0 + $0x90] sm:$0xff]
  %v33 = vld [vmem:[%s0 + $0x98] sm:$0xff]
  %v34 = vld [vmem:[%s0 + $0xa0] sm:$0xff]
  %v35 = vld [vmem:[%s0 + $0xa8] sm:$0xff]
  %v36 = vld [vmem:[%s0 + $0xb0] sm:$0xff]
  %v37 = vld [vmem:[%s0 + $0xb8] sm:$0xff]
  %v38 = vld [vmem:[%s0 + $0xc0] sm:$0xff]
  %v39 = vld [vmem:[%s0 + $0xc8] sm:$0xff]
  %v40 = vld [vmem:[%s0 + $0xd0] sm:$0xff]
  %v41 = vld [vmem:[%s0 + $0xd8] sm:$0xff]
  %v42 = vld [vmem:[%s0 + $0xe0] sm:$0xff]
  %v43 = vld [vmem:[%s0 + $0xe8] sm:$0xff]
  %v44 = vld [vmem:[%s0 + $0xf0] sm:$0xff]
  %v45 = vld [vmem:[%s0 + $0xf8] sm:$0xff]
  %v46 = vld [vmem:[%s0 + $0x100] sm:$0xff]
  %v47 = vld [vmem:[%s0 + $0x108] sm:$0xff]
  %v48 = vld [vmem:[%s0 + $0x110] sm:$0xff]
  %v49 = vld [vmem:[%s0 + $0x118] sm:$0xff]
  %v50 = vld [vmem:[%s0 + $0x120] sm:$0xff]
  %v51 = vld [vmem:[%s0 + $0x128] sm:$0xff]
  %v52 = vld [vmem:[%s0 + $0x130] sm:$0xff]
  %v53 = vld [vmem:[%s0 + $0x138] sm:$0xff]
  %v54 = vld [vmem:[%s0 + $0x140] sm:$0xff]
  %v55 = vld [vmem:[%s0 + $0x148] sm:$0xff]
  %v56 = vld [vmem:[%s0 + $0x150] sm:$0xff]
  %v57 = vld [vmem:[%s0 + $0x158] sm:$0xff]
  %v58 = vld [vmem:[%s0 + $0x160] sm:$0xff]
  %v59 = vld [vmem:[%s0 + $0x168] sm:$0xff]
  %v60 = vld [vmem:[%s0 + $0x170] sm:$0xff]
  %v61 = vld [vmem:[%s0 + $0x178] sm:$0xff]
  %v62 = vld [vmem:[%s1] sm:$0xf]
  %v63 = vld [vmem:[%s1 + $0x4] sm:$0xf]
  %v64 = vld [vmem:[%s1 + $0x8] sm:$0xf]
  %v65 = vld [vmem:[%s1 + $0xc] sm:$0xf]
  %v66 = vld [vmem:[%s1 + $0x10] sm:$0xf]
  %v67 = vld [vmem:[%s1 + $0x14] sm:$0xf]
  %v68 = vld [vmem:[%s1 + $0x18] sm:$0xf]
  %v69 = vld [vmem:[%s1 + $0x1c] sm:$0xf]
  %v70 = vld [vmem:[%s1 + $0x20] sm:$0xf]
  %v71 = vld [vmem:[%s1 + $0x24] sm:$0xf]
  %v72 = vld [vmem:[%s1 + $0x28] sm:$0xf]
  %v73 = vld [vmem:[%s1 + $0x2c] sm:$0xf]
  %v74 = vld [vmem:[%s1 + $0x30] sm:$0xf]
  %v75 = vld [vmem:[%s1 + $0x34] sm:$0xf]
  %v76 = vld [vmem:[%s1 + $0x38] sm:$0xf]
  %v77 = vld [vmem:[%s1 + $0x3c] sm:$0xf]
  %v78 = vld [vmem:[%s1 + $0x40] sm:$0xf]
  %v79 = vld [vmem:[%s1 + $0x44] sm:$0xf]
  %v80 = vld [vmem:[%s1 + $0x48] sm:$0xf]
  %v81 = vld [vmem:[%s1 + $0x4c] sm:$0xf]
  %v82 = vld [vmem:[%s1 + $0x50] sm:$0xf]
  %v83 = vld [vmem:[%s1 + $0x54] sm:$0xf]
  %v84 = vld [vmem:[%s1 + $0x58] sm:$0xf]
  %v85 = vld [vmem:[%s1 + $0x5c] sm:$0xf]
  %v86 = vld [vmem:[%s1 + $0x60] sm:$0xf]
  %v87 = vld [vmem:[%s1 + $0x64] sm:$0xf]
  %v88 = vld [vmem:[%s1 + $0x68] sm:$0xf]
  %v89 = vld [vmem:[%s1 + $0x6c] sm:$0xf]
  %v90 = vld [vmem:[%s1 + $0x70] sm:$0xf]
  %v91 = vld [vmem:[%s1 + $0x74] sm:$0xf]
  %v92 = vld [vmem:[%s1 + $0x78] sm:$0xf]
  %v93 = vld [vmem:[%s1 + $0x7c] sm:$0xf]
  %v94 = vld [vmem:[%s1 + $0x80] sm:$0xf]
  %v95 = vld [vmem:[%s1 + $0x84] sm:$0xf]
  %v96 = vld [vmem:[%s1 + $0x88] sm:$0xf]
  %v97 = vld [vmem:[%s1 + $0x8c] sm:$0xf]
  %v98 = vld [vmem:[%s1 + $0x90] sm:$0xf]
  %v99 = vld [vmem:[%s1 + $0x94] sm:$0xf]
  %v100 = vld [vmem:[%s1 + $0x98] sm:$0xf]
  %v101 = vld [vmem:[%s1 + $0x9c] sm:$0xf]
  %v102 = vld [vmem:[%s1 + $0xa0] sm:$0xf]
  %v103 = vld [vmem:[%s1 + $0xa4] sm:$0xf]
  %v104 = vld [vmem:[%s1 + $0xa8] sm:$0xf]
  %v105 = vld [vmem:[%s1 + $0xac] sm:$0xf]
  %v106 = vld [vmem:[%s1 + $0xb0] sm:$0xf]
  %v107 = vld [vmem:[%s1 + $0xb4] sm:$0xf]
  %v108 = vld [vmem:[%s1 + $0xb8] sm:$0xf]
  %v109 = vld [vmem:[%s1 + $0xbc] sm:$0xf]
  %v110 = vld [vmem:[%s1 + $0xc0] sm:$0xf]
  %v111 = vld [vmem:[%s1 + $0xc4] sm:$0xf]
  %v112 = vld [vmem:[%s1 + $0xc8] sm:$0xf]
  %v113 = vld [vmem:[%s1 + $0xcc] sm:$0xf]
  %v114 = vld [vmem:[%s1 + $0xd0] sm:$0xf]
  %v115 = vld [vmem:[%s1 + $0xd4] sm:$0xf]
  %v116 = vld [vmem:[%s1 + $0xd8] sm:$0xf]
  %v117 = vld [vmem:[%s1 + $0xdc] sm:$0xf]
  %v118 = vld [vmem:[%s1 + $0xe0] sm:$0xf]
  %v119 = vld [vmem:[%s1 + $0xe4] sm:$0xf]
  %v120 = vld [vmem:[%s1 + $0xe8] sm:$0xf]
  %v121 = vld [vmem:[%s1 + $0xec] sm:$0xf]
  %v122 = vld [vmem:[%s1 + $0xf0] sm:$0xf]
  %v123 = vld [vmem:[%s1 + $0xf4] sm:$0xf]
  %v124 = vld [vmem:[%s1 + $0xf8] sm:$0xf]
  %v125 = vld [vmem:[%s1 + $0xfc] sm:$0xf]
  %v126 = vld [vmem:[%s2] sm:$0x1]
  %v128 = vperm.slane %v126, 0
  %v178 = vunpack.c.l.b16 %v14
  %v179 = vunpack.c.h.b16 %v14
  %v180 = vunpack.c.l.b16 %v15
  %v181 = vunpack.c.h.b16 %v15
  %v182 = vunpack.c.l.b16 %v16
  %v183 = vunpack.c.h.b16 %v16
  %v184 = vunpack.c.l.b16 %v17
  %v185 = vunpack.c.h.b16 %v17
  %v186 = vunpack.c.l.b16 %v18
  %v187 = vunpack.c.h.b16 %v18
  %v188 = vunpack.c.l.b16 %v19
  %v189 = vunpack.c.h.b16 %v19
  %v190 = vunpack.c.l.b16 %v20
  %v191 = vunpack.c.h.b16 %v20
  %v192 = vunpack.c.l.b16 %v21
  %v193 = vunpack.c.h.b16 %v21
  %v194 = vunpack.c.l.b16 %v22
  %v195 = vunpack.c.h.b16 %v22
  %v196 = vunpack.c.l.b16 %v23
  %v197 = vunpack.c.h.b16 %v23
  %v198 = vunpack.c.l.b16 %v24
  %v199 = vunpack.c.h.b16 %v24
  %v200 = vunpack.c.l.b16 %v25
  %v201 = vunpack.c.h.b16 %v25
  %v202 = vunpack.c.l.b16 %v26
  %v203 = vunpack.c.h.b16 %v26
  %v204 = vunpack.c.l.b16 %v27
  %v205 = vunpack.c.h.b16 %v27
  %v206 = vunpack.c.l.b16 %v28
  %v207 = vunpack.c.h.b16 %v28
  %v208 = vunpack.c.l.b16 %v29
  %v209 = vunpack.c.h.b16 %v29
  %v210 = vunpack.c.l.b16 %v30
  %v211 = vunpack.c.h.b16 %v30
  %v212 = vunpack.c.l.b16 %v31
  %v213 = vunpack.c.h.b16 %v31
  %v214 = vunpack.c.l.b16 %v32
  %v215 = vunpack.c.h.b16 %v32
  %v216 = vunpack.c.l.b16 %v33
  %v217 = vunpack.c.h.b16 %v33
  %v218 = vunpack.c.l.b16 %v34
  %v219 = vunpack.c.h.b16 %v34
  %v220 = vunpack.c.l.b16 %v35
  %v221 = vunpack.c.h.b16 %v35
  %v222 = vunpack.c.l.b16 %v36
  %v223 = vunpack.c.h.b16 %v36
  %v224 = vunpack.c.l.b16 %v37
  %v225 = vunpack.c.h.b16 %v37
  %v226 = vunpack.c.l.b16 %v38
  %v227 = vunpack.c.h.b16 %v38
  %v228 = vunpack.c.l.b16 %v39
  %v229 = vunpack.c.h.b16 %v39
  %v230 = vunpack.c.l.b16 %v40
  %v231 = vunpack.c.h.b16 %v40
  %v232 = vunpack.c.l.b16 %v41
  %v233 = vunpack.c.h.b16 %v41
  %v234 = vunpack.c.l.b16 %v42
  %v235 = vunpack.c.h.b16 %v42
  %v236 = vunpack.c.l.b16 %v43
  %v237 = vunpack.c.h.b16 %v43
  %v238 = vunpack.c.l.b16 %v44
  %v239 = vunpack.c.h.b16 %v44
  %v240 = vunpack.c.l.b16 %v45
  %v241 = vunpack.c.h.b16 %v45
  %v242 = vunpack.c.l.b16 %v46
  %v243 = vunpack.c.h.b16 %v46
  %v244 = vunpack.c.l.b16 %v47
  %v245 = vunpack.c.h.b16 %v47
  %v246 = vunpack.c.l.b16 %v48
  %v247 = vunpack.c.h.b16 %v48
  %v248 = vunpack.c.l.b16 %v49
  %v249 = vunpack.c.h.b16 %v49
  %v250 = vunpack.c.l.b16 %v50
  %v251 = vunpack.c.h.b16 %v50
  %v252 = vunpack.c.l.b16 %v51
  %v253 = vunpack.c.h.b16 %v51
  %v254 = vunpack.c.l.b16 %v52
  %v255 = vunpack.c.h.b16 %v52
  %v256 = vunpack.c.l.b16 %v53
  %v257 = vunpack.c.h.b16 %v53
  %v258 = vunpack.c.l.b16 %v54
  %v259 = vunpack.c.h.b16 %v54
  %v260 = vunpack.c.l.b16 %v55
  %v261 = vunpack.c.h.b16 %v55
  %v262 = vunpack.c.l.b16 %v56
  %v263 = vunpack.c.h.b16 %v56
  %v264 = vunpack.c.l.b16 %v57
  %v265 = vunpack.c.h.b16 %v57
  %v266 = vunpack.c.l.b16 %v58
  %v267 = vunpack.c.h.b16 %v58
  %v268 = vunpack.c.l.b16 %v59
  %v269 = vunpack.c.h.b16 %v59
  %v270 = vunpack.c.l.b16 %v60
  %v271 = vunpack.c.h.b16 %v60
  %v272 = vunpack.c.l.b16 %v61
  %v273 = vunpack.c.h.b16 %v61
  %v274 = vpack.c.b16 %v182, %v178
  %v275 = vpack.c.b16 %v183, %v179
  %v276 = vpack.c.b16 %v184, %v180
  %v277 = vpack.c.b16 %v185, %v181
  %v278 = vpack.c.b16 %v190, %v186
  %v279 = vpack.c.b16 %v191, %v187
  %v280 = vpack.c.b16 %v192, %v188
  %v281 = vpack.c.b16 %v193, %v189
  %v282 = vpack.c.b16 %v198, %v194
  %v283 = vpack.c.b16 %v199, %v195
  %v284 = vpack.c.b16 %v200, %v196
  %v285 = vpack.c.b16 %v201, %v197
  %v286 = vpack.c.b16 %v206, %v202
  %v287 = vpack.c.b16 %v207, %v203
  %v288 = vpack.c.b16 %v208, %v204
  %v289 = vpack.c.b16 %v209, %v205
  %v290 = vpack.c.b16 %v214, %v210
  %v291 = vpack.c.b16 %v215, %v211
  %v292 = vpack.c.b16 %v216, %v212
  %v293 = vpack.c.b16 %v217, %v213
  %v294 = vpack.c.b16 %v222, %v218
  %v295 = vpack.c.b16 %v223, %v219
  %v296 = vpack.c.b16 %v224, %v220
  %v297 = vpack.c.b16 %v225, %v221
  %v298 = vpack.c.b16 %v230, %v226
  %v299 = vpack.c.b16 %v231, %v227
  %v300 = vpack.c.b16 %v232, %v228
  %v301 = vpack.c.b16 %v233, %v229
  %v302 = vpack.c.b16 %v238, %v234
  %v303 = vpack.c.b16 %v239, %v235
  %v304 = vpack.c.b16 %v240, %v236
  %v305 = vpack.c.b16 %v241, %v237
  %v306 = vpack.c.b16 %v246, %v242
  %v307 = vpack.c.b16 %v247, %v243
  %v308 = vpack.c.b16 %v248, %v244
  %v309 = vpack.c.b16 %v249, %v245
  %v310 = vpack.c.b16 %v254, %v250
  %v311 = vpack.c.b16 %v255, %v251
  %v312 = vpack.c.b16 %v256, %v252
  %v313 = vpack.c.b16 %v257, %v253
  %v314 = vpack.c.b16 %v262, %v258
  %v315 = vpack.c.b16 %v263, %v259
  %v316 = vpack.c.b16 %v264, %v260
  %v317 = vpack.c.b16 %v265, %v261
  %v318 = vpack.c.b16 %v270, %v266
  %v319 = vpack.c.b16 %v271, %v267
  %v320 = vpack.c.b16 %v272, %v268
  %v321 = vpack.c.b16 %v273, %v269
  %v434 = vunpack.c.l.b16 %v62
  %v435 = vunpack.c.l.b16 %v63
  %v436 = vunpack.c.l.b16 %v64
  %v437 = vunpack.c.l.b16 %v65
  %v438 = vunpack.c.l.b16 %v66
  %v439 = vunpack.c.l.b16 %v67
  %v440 = vunpack.c.l.b16 %v68
  %v441 = vunpack.c.l.b16 %v69
  %v442 = vunpack.c.l.b16 %v70
  %v443 = vunpack.c.l.b16 %v71
  %v444 = vunpack.c.l.b16 %v72
  %v445 = vunpack.c.l.b16 %v73
  %v446 = vunpack.c.l.b16 %v74
  %v447 = vunpack.c.l.b16 %v75
  %v448 = vunpack.c.l.b16 %v76
  %v449 = vunpack.c.l.b16 %v77
  %v450 = vunpack.c.l.b16 %v78
  %v451 = vunpack.c.l.b16 %v79
  %v452 = vunpack.c.l.b16 %v80
  %v453 = vunpack.c.l.b16 %v81
  %v454 = vunpack.c.l.b16 %v82
  %v455 = vunpack.c.l.b16 %v83
  %v456 = vunpack.c.l.b16 %v84
  %v457 = vunpack.c.l.b16 %v85
  %v458 = vunpack.c.l.b16 %v86
  %v459 = vunpack.c.l.b16 %v87
  %v460 = vunpack.c.l.b16 %v88
  %v461 = vunpack.c.l.b16 %v89
  %v462 = vunpack.c.l.b16 %v90
  %v463 = vunpack.c.l.b16 %v91
  %v464 = vunpack.c.l.b16 %v92
  %v465 = vunpack.c.l.b16 %v93
  %v466 = vunpack.c.l.b16 %v94
  %v467 = vunpack.c.l.b16 %v95
  %v468 = vunpack.c.l.b16 %v96
  %v469 = vunpack.c.l.b16 %v97
  %v470 = vunpack.c.l.b16 %v98
  %v471 = vunpack.c.l.b16 %v99
  %v472 = vunpack.c.l.b16 %v100
  %v473 = vunpack.c.l.b16 %v101
  %v474 = vunpack.c.l.b16 %v102
  %v475 = vunpack.c.l.b16 %v103
  %v476 = vunpack.c.l.b16 %v104
  %v477 = vunpack.c.l.b16 %v105
  %v478 = vunpack.c.l.b16 %v106
  %v479 = vunpack.c.l.b16 %v107
  %v480 = vunpack.c.l.b16 %v108
  %v481 = vunpack.c.l.b16 %v109
  %v482 = vunpack.c.l.b16 %v110
  %v483 = vunpack.c.l.b16 %v111
  %v484 = vunpack.c.l.b16 %v112
  %v485 = vunpack.c.l.b16 %v113
  %v486 = vunpack.c.l.b16 %v114
  %v487 = vunpack.c.l.b16 %v115
  %v488 = vunpack.c.l.b16 %v116
  %v489 = vunpack.c.l.b16 %v117
  %v490 = vunpack.c.l.b16 %v118
  %v491 = vunpack.c.l.b16 %v119
  %v492 = vunpack.c.l.b16 %v120
  %v493 = vunpack.c.l.b16 %v121
  %v494 = vunpack.c.l.b16 %v122
  %v495 = vunpack.c.l.b16 %v123
  %v496 = vunpack.c.l.b16 %v124
  %v497 = vunpack.c.l.b16 %v125
  %v498 = vpack.c.b16 %v435, %v434
  %v499 = vpack.c.b16 %v437, %v436
  %v500 = vpack.c.b16 %v439, %v438
  %v501 = vpack.c.b16 %v441, %v440
  %v502 = vpack.c.b16 %v443, %v442
  %v503 = vpack.c.b16 %v445, %v444
  %v504 = vpack.c.b16 %v447, %v446
  %v505 = vpack.c.b16 %v449, %v448
  %v506 = vpack.c.b16 %v451, %v450
  %v507 = vpack.c.b16 %v453, %v452
  %v508 = vpack.c.b16 %v455, %v454
  %v509 = vpack.c.b16 %v457, %v456
  %v510 = vpack.c.b16 %v459, %v458
  %v511 = vpack.c.b16 %v461, %v460
  %v512 = vpack.c.b16 %v463, %v462
  %v513 = vpack.c.b16 %v465, %v464
  %v514 = vpack.c.b16 %v467, %v466
  %v515 = vpack.c.b16 %v469, %v468
  %v516 = vpack.c.b16 %v471, %v470
  %v517 = vpack.c.b16 %v473, %v472
  %v518 = vpack.c.b16 %v475, %v474
  %v519 = vpack.c.b16 %v477, %v476
  %v520 = vpack.c.b16 %v479, %v478
  %v521 = vpack.c.b16 %v481, %v480
  %v522 = vpack.c.b16 %v483, %v482
  %v523 = vpack.c.b16 %v485, %v484
  %v524 = vpack.c.b16 %v487, %v486
  %v525 = vpack.c.b16 %v489, %v488
  %v526 = vpack.c.b16 %v491, %v490
  %v527 = vpack.c.b16 %v493, %v492
  %v528 = vpack.c.b16 %v495, %v494
  %v529 = vpack.c.b16 %v497, %v496
  %562 = vmatpush.bf16.msra.mxu0 %v505
  %563 = vmatpush.bf16.msra.mxu0 %v504
  %564 = vmatpush.bf16.msra.mxu0 %v503
  %565 = vmatpush.bf16.msra.mxu0 %v502
  %566 = vmatpush.bf16.msra.mxu0 %v501
  %567 = vmatpush.bf16.msra.mxu0 %v500
  %568 = vmatpush.bf16.msra.mxu0 %v499
  %569 = vmatpush.bf16.msra.mxu0 %v498
  %570 = vmatmul.bf16.gmra.mxu0 %v274
  %v571 = vpop.f32.mrf.mxu0
  %v572 = vadd.f32 %v128, %v571
  %v573 = vpop.f32.mrf.mxu0
  %v574 = vadd.f32 %v128, %v573
  %575 = vmatmul.bf16.gmra.mxu0 %v278
  %v576 = vpop.f32.mrf.mxu0
  %v577 = vadd.f32 %v128, %v576
  %v578 = vpop.f32.mrf.mxu0
  %v579 = vadd.f32 %v128, %v578
  %580 = vmatmul.bf16.gmra.mxu0 %v282
  %v581 = vpop.f32.mrf.mxu0
  %v582 = vadd.f32 %v128, %v581
  %v583 = vpop.f32.mrf.mxu0
  %v584 = vadd.f32 %v128, %v583
  %585 = vmatmul.bf16.gmra.mxu0 %v286
  %v586 = vpop.f32.mrf.mxu0
  %v587 = vadd.f32 %v128, %v586
  %v588 = vpop.f32.mrf.mxu0
  %v589 = vadd.f32 %v128, %v588
  %590 = vmatmul.bf16.gmra.mxu0 %v290
  %v591 = vpop.f32.mrf.mxu0
  %v592 = vadd.f32 %v128, %v591
  %v593 = vpop.f32.mrf.mxu0
  %v594 = vadd.f32 %v128, %v593
  %595 = vmatmul.bf16.gmra.mxu0 %v294
  %v596 = vpop.f32.mrf.mxu0
  %v597 = vadd.f32 %v128, %v596
  %v598 = vpop.f32.mrf.mxu0
  %v599 = vadd.f32 %v128, %v598
  %600 = vmatmul.bf16.gmra.mxu0 %v298
  %v601 = vpop.f32.mrf.mxu0
  %v602 = vadd.f32 %v128, %v601
  %v603 = vpop.f32.mrf.mxu0
  %v604 = vadd.f32 %v128, %v603
  %605 = vmatmul.bf16.gmra.mxu0 %v302
  %v606 = vpop.f32.mrf.mxu0
  %v607 = vadd.f32 %v128, %v606
  %v608 = vpop.f32.mrf.mxu0
  %v609 = vadd.f32 %v128, %v608
  %610 = vmatmul.bf16.gmra.mxu0 %v306
  %v611 = vpop.f32.mrf.mxu0
  %v612 = vadd.f32 %v128, %v611
  %v613 = vpop.f32.mrf.mxu0
  %v614 = vadd.f32 %v128, %v613
  %615 = vmatmul.bf16.gmra.mxu0 %v310
  %v616 = vpop.f32.mrf.mxu0
  %v617 = vadd.f32 %v128, %v616
  %v618 = vpop.f32.mrf.mxu0
  %v619 = vadd.f32 %v128, %v618
  %620 = vmatmul.bf16.gmra.mxu0 %v314
  %v621 = vpop.f32.mrf.mxu0
  %v622 = vadd.f32 %v128, %v621
  %v623 = vpop.f32.mrf.mxu0
  %v624 = vadd.f32 %v128, %v623
  %625 = vmatmul.bf16.gmra.mxu0 %v318
  %v626 = vpop.f32.mrf.mxu0
  %v627 = vadd.f32 %v128, %v626
  %v628 = vpop.f32.mrf.mxu0
  %v629 = vadd.f32 %v128, %v628
  %630 = vdwg.mxu0
  %631 = vmatpush.bf16.msra.mxu0 %v513
  %632 = vmatpush.bf16.msra.mxu0 %v512
  %633 = vmatpush.bf16.msra.mxu0 %v511
  %634 = vmatpush.bf16.msra.mxu0 %v510
  %635 = vmatpush.bf16.msra.mxu0 %v509
  %636 = vmatpush.bf16.msra.mxu0 %v508
  %637 = vmatpush.bf16.msra.mxu0 %v507
  %638 = vmatpush.bf16.msra.mxu0 %v506
  %639 = vmatmul.bf16.gmra.mxu0 %v275
  %v640 = vpop.f32.mrf.mxu0
  %v641 = vadd.f32 %v572, %v640
  %v642 = vpop.f32.mrf.mxu0
  %v643 = vadd.f32 %v574, %v642
  %644 = vmatmul.bf16.gmra.mxu0 %v279
  %v645 = vpop.f32.mrf.mxu0
  %v646 = vadd.f32 %v577, %v645
  %v647 = vpop.f32.mrf.mxu0
  %v648 = vadd.f32 %v579, %v647
  %649 = vmatmul.bf16.gmra.mxu0 %v283
  %v650 = vpop.f32.mrf.mxu0
  %v651 = vadd.f32 %v582, %v650
  %v652 = vpop.f32.mrf.mxu0
  %v653 = vadd.f32 %v584, %v652
  %654 = vmatmul.bf16.gmra.mxu0 %v287
  %v655 = vpop.f32.mrf.mxu0
  %v656 = vadd.f32 %v587, %v655
  %v657 = vpop.f32.mrf.mxu0
  %v658 = vadd.f32 %v589, %v657
  %659 = vmatmul.bf16.gmra.mxu0 %v291
  %v660 = vpop.f32.mrf.mxu0
  %v661 = vadd.f32 %v592, %v660
  %v662 = vpop.f32.mrf.mxu0
  %v663 = vadd.f32 %v594, %v662
  %664 = vmatmul.bf16.gmra.mxu0 %v295
  %v665 = vpop.f32.mrf.mxu0
  %v666 = vadd.f32 %v597, %v665
  %v667 = vpop.f32.mrf.mxu0
  %v668 = vadd.f32 %v599, %v667
  %669 = vmatmul.bf16.gmra.mxu0 %v299
  %v670 = vpop.f32.mrf.mxu0
  %v671 = vadd.f32 %v602, %v670
  %v672 = vpop.f32.mrf.mxu0
  %v673 = vadd.f32 %v604, %v672
  %674 = vmatmul.bf16.gmra.mxu0 %v303
  %v675 = vpop.f32.mrf.mxu0
  %v676 = vadd.f32 %v607, %v675
  %v677 = vpop.f32.mrf.mxu0
  %v678 = vadd.f32 %v609, %v677
  %679 = vmatmul.bf16.gmra.mxu0 %v307
  %v680 = vpop.f32.mrf.mxu0
  %v681 = vadd.f32 %v612, %v680
  %v682 = vpop.f32.mrf.mxu0
  %v683 = vadd.f32 %v614, %v682
  %684 = vmatmul.bf16.gmra.mxu0 %v311
  %v685 = vpop.f32.mrf.mxu0
  %v686 = vadd.f32 %v617, %v685
  %v687 = vpop.f32.mrf.mxu0
  %v688 = vadd.f32 %v619, %v687
  %689 = vmatmul.bf16.gmra.mxu0 %v315
  %v690 = vpop.f32.mrf.mxu0
  %v691 = vadd.f32 %v622, %v690
  %v692 = vpop.f32.mrf.mxu0
  %v693 = vadd.f32 %v624, %v692
  %694 = vmatmul.bf16.gmra.mxu0 %v319
  %v695 = vpop.f32.mrf.mxu0
  %v696 = vadd.f32 %v627, %v695
  %v697 = vpop.f32.mrf.mxu0
  %v698 = vadd.f32 %v629, %v697
  %699 = vdwg.mxu0
  %700 = vmatpush.bf16.msra.mxu0 %v521
  %701 = vmatpush.bf16.msra.mxu0 %v520
  %702 = vmatpush.bf16.msra.mxu0 %v519
  %703 = vmatpush.bf16.msra.mxu0 %v518
  %704 = vmatpush.bf16.msra.mxu0 %v517
  %705 = vmatpush.bf16.msra.mxu0 %v516
  %706 = vmatpush.bf16.msra.mxu0 %v515
  %707 = vmatpush.bf16.msra.mxu0 %v514
  %708 = vmatmul.bf16.gmra.mxu0 %v276
  %v709 = vpop.f32.mrf.mxu0
  %v710 = vadd.f32 %v641, %v709
  %v711 = vpop.f32.mrf.mxu0
  %v712 = vadd.f32 %v643, %v711
  %713 = vmatmul.bf16.gmra.mxu0 %v280
  %v714 = vpop.f32.mrf.mxu0
  %v715 = vadd.f32 %v646, %v714
  %v716 = vpop.f32.mrf.mxu0
  %v717 = vadd.f32 %v648, %v716
  %718 = vmatmul.bf16.gmra.mxu0 %v284
  %v719 = vpop.f32.mrf.mxu0
  %v720 = vadd.f32 %v651, %v719
  %v721 = vpop.f32.mrf.mxu0
  %v722 = vadd.f32 %v653, %v721
  %723 = vmatmul.bf16.gmra.mxu0 %v288
  %v724 = vpop.f32.mrf.mxu0
  %v725 = vadd.f32 %v656, %v724
  %v726 = vpop.f32.mrf.mxu0
  %v727 = vadd.f32 %v658, %v726
  %728 = vmatmul.bf16.gmra.mxu0 %v292
  %v729 = vpop.f32.mrf.mxu0
  %v730 = vadd.f32 %v661, %v729
  %v731 = vpop.f32.mrf.mxu0
  %v732 = vadd.f32 %v663, %v731
  %733 = vmatmul.bf16.gmra.mxu0 %v296
  %v734 = vpop.f32.mrf.mxu0
  %v735 = vadd.f32 %v666, %v734
  %v736 = vpop.f32.mrf.mxu0
  %v737 = vadd.f32 %v668, %v736
  %738 = vmatmul.bf16.gmra.mxu0 %v300
  %v739 = vpop.f32.mrf.mxu0
  %v740 = vadd.f32 %v671, %v739
  %v741 = vpop.f32.mrf.mxu0
  %v742 = vadd.f32 %v673, %v741
  %743 = vmatmul.bf16.gmra.mxu0 %v304
  %v744 = vpop.f32.mrf.mxu0
  %v745 = vadd.f32 %v676, %v744
  %v746 = vpop.f32.mrf.mxu0
  %v747 = vadd.f32 %v678, %v746
  %748 = vmatmul.bf16.gmra.mxu0 %v308
  %v749 = vpop.f32.mrf.mxu0
  %v750 = vadd.f32 %v681, %v749
  %v751 = vpop.f32.mrf.mxu0
  %v752 = vadd.f32 %v683, %v751
  %753 = vmatmul.bf16.gmra.mxu0 %v312
  %v754 = vpop.f32.mrf.mxu0
  %v755 = vadd.f32 %v686, %v754
  %v756 = vpop.f32.mrf.mxu0
  %v757 = vadd.f32 %v688, %v756
  %758 = vmatmul.bf16.gmra.mxu0 %v316
  %v759 = vpop.f32.mrf.mxu0
  %v760 = vadd.f32 %v691, %v759
  %v761 = vpop.f32.mrf.mxu0
  %v762 = vadd.f32 %v693, %v761
  %763 = vmatmul.bf16.gmra.mxu0 %v320
  %v764 = vpop.f32.mrf.mxu0
  %v765 = vadd.f32 %v696, %v764
  %v766 = vpop.f32.mrf.mxu0
  %v767 = vadd.f32 %v698, %v766
  %768 = vdwg.mxu0
  %769 = vmatpush.bf16.msra.mxu0 %v529
  %770 = vmatpush.bf16.msra.mxu0 %v528
  %771 = vmatpush.bf16.msra.mxu0 %v527
  %772 = vmatpush.bf16.msra.mxu0 %v526
  %773 = vmatpush.bf16.msra.mxu0 %v525
  %774 = vmatpush.bf16.msra.mxu0 %v524
  %775 = vmatpush.bf16.msra.mxu0 %v523
  %776 = vmatpush.bf16.msra.mxu0 %v522
  %777 = vmatmul.bf16.gmra.mxu0 %v277
  %v778 = vpop.f32.mrf.mxu0
  %v779 = vadd.f32 %v710, %v778
  %v780 = vpop.f32.mrf.mxu0
  %v781 = vadd.f32 %v712, %v780
  %782 = vmatmul.bf16.gmra.mxu0 %v281
  %v783 = vpop.f32.mrf.mxu0
  %v784 = vadd.f32 %v715, %v783
  %v785 = vpop.f32.mrf.mxu0
  %v786 = vadd.f32 %v717, %v785
  %787 = vmatmul.bf16.gmra.mxu0 %v285
  %v788 = vpop.f32.mrf.mxu0
  %v789 = vadd.f32 %v720, %v788
  %v790 = vpop.f32.mrf.mxu0
  %v791 = vadd.f32 %v722, %v790
  %792 = vmatmul.bf16.gmra.mxu0 %v289
  %v793 = vpop.f32.mrf.mxu0
  %v794 = vadd.f32 %v725, %v793
  %v795 = vpop.f32.mrf.mxu0
  %v796 = vadd.f32 %v727, %v795
  %797 = vmatmul.bf16.gmra.mxu0 %v293
  %v798 = vpop.f32.mrf.mxu0
  %v799 = vadd.f32 %v730, %v798
  %v800 = vpop.f32.mrf.mxu0
  %v801 = vadd.f32 %v732, %v800
  %802 = vmatmul.bf16.gmra.mxu0 %v297
  %v803 = vpop.f32.mrf.mxu0
  %v804 = vadd.f32 %v735, %v803
  %v805 = vpop.f32.mrf.mxu0
  %v806 = vadd.f32 %v737, %v805
  %807 = vmatmul.bf16.gmra.mxu0 %v301
  %v808 = vpop.f32.mrf.mxu0
  %v809 = vadd.f32 %v740, %v808
  %v810 = vpop.f32.mrf.mxu0
  %v811 = vadd.f32 %v742, %v810
  %812 = vmatmul.bf16.gmra.mxu0 %v305
  %v813 = vpop.f32.mrf.mxu0
  %v814 = vadd.f32 %v745, %v813
  %v815 = vpop.f32.mrf.mxu0
  %v816 = vadd.f32 %v747, %v815
  %817 = vmatmul.bf16.gmra.mxu0 %v309
  %v818 = vpop.f32.mrf.mxu0
  %v819 = vadd.f32 %v750, %v818
  %v820 = vpop.f32.mrf.mxu0
  %v821 = vadd.f32 %v752, %v820
  %822 = vmatmul.bf16.gmra.mxu0 %v313
  %v823 = vpop.f32.mrf.mxu0
  %v824 = vadd.f32 %v755, %v823
  %v825 = vpop.f32.mrf.mxu0
  %v826 = vadd.f32 %v757, %v825
  %827 = vmatmul.bf16.gmra.mxu0 %v317
  %v828 = vpop.f32.mrf.mxu0
  %v829 = vadd.f32 %v760, %v828
  %v830 = vpop.f32.mrf.mxu0
  %v831 = vadd.f32 %v762, %v830
  %832 = vmatmul.bf16.gmra.mxu0 %v321
  %v833 = vpop.f32.mrf.mxu0
  %v834 = vadd.f32 %v765, %v833
  %v835 = vpop.f32.mrf.mxu0
  %v836 = vadd.f32 %v767, %v835
  %837 = vdwg.mxu0
  %v838 = vmax.f32 %v779, 0.0
  %v839 = vmax.f32 %v781, 0.0
  %v840 = vmax.f32 %v784, 0.0
  %v841 = vmax.f32 %v786, 0.0
  %v842 = vmax.f32 %v789, 0.0
  %v843 = vmax.f32 %v791, 0.0
  %v844 = vmax.f32 %v794, 0.0
  %v845 = vmax.f32 %v796, 0.0
  %v846 = vmax.f32 %v799, 0.0
  %v847 = vmax.f32 %v801, 0.0
  %v848 = vmax.f32 %v804, 0.0
  %v849 = vmax.f32 %v806, 0.0
  %v850 = vmax.f32 %v809, 0.0
  %v851 = vmax.f32 %v811, 0.0
  %v852 = vmax.f32 %v814, 0.0
  %v853 = vmax.f32 %v816, 0.0
  %v854 = vmax.f32 %v819, 0.0
  %v855 = vmax.f32 %v821, 0.0
  %v856 = vmax.f32 %v824, 0.0
  %v857 = vmax.f32 %v826, 0.0
  %v858 = vmax.f32 %v829, 0.0
  %v859 = vmax.f32 %v831, 0.0
  %v860 = vmax.f32 %v834, 0.0
  %v861 = vmax.f32 %v836, 0.0
  %v862 = vpack.c.bf16 %v838, %v838
  %v863 = vpack.c.bf16 %v839, %v839
  %v864 = vpack.c.bf16 %v840, %v840
  %v865 = vpack.c.bf16 %v841, %v841
  %v866 = vpack.c.bf16 %v842, %v842
  %v867 = vpack.c.bf16 %v843, %v843
  %v868 = vpack.c.bf16 %v844, %v844
  %v869 = vpack.c.bf16 %v845, %v845
  %v870 = vpack.c.bf16 %v846, %v846
  %v871 = vpack.c.bf16 %v847, %v847
  %v872 = vpack.c.bf16 %v848, %v848
  %v873 = vpack.c.bf16 %v849, %v849
  %v874 = vpack.c.bf16 %v850, %v850
  %v875 = vpack.c.bf16 %v851, %v851
  %v876 = vpack.c.bf16 %v852, %v852
  %v877 = vpack.c.bf16 %v853, %v853
  %v878 = vpack.c.bf16 %v854, %v854
  %v879 = vpack.c.bf16 %v855, %v855
  %v880 = vpack.c.bf16 %v856, %v856
  %v881 = vpack.c.bf16 %v857, %v857
  %v882 = vpack.c.bf16 %v858, %v858
  %v883 = vpack.c.bf16 %v859, %v859
  %v884 = vpack.c.bf16 %v860, %v860
  %v885 = vpack.c.bf16 %v861, %v861
  %vm886 = vcmask 519168
  %887 = vst.msk [vmem:[%s3] sm:$0xf] %vm886, %v862
  %888 = vst.msk [vmem:[%s3 + $0x4] sm:$0xf] %vm886, %v863
  %889 = vst.msk [vmem:[%s3 + $0x8] sm:$0xf] %vm886, %v864
  %890 = vst.msk [vmem:[%s3 + $0xc] sm:$0xf] %vm886, %v865
  %891 = vst.msk [vmem:[%s3 + $0x10] sm:$0xf] %vm886, %v866
  %892 = vst.msk [vmem:[%s3 + $0x14] sm:$0xf] %vm886, %v867
  %893 = vst.msk [vmem:[%s3 + $0x18] sm:$0xf] %vm886, %v868
  %894 = vst.msk [vmem:[%s3 + $0x1c] sm:$0xf] %vm886, %v869
  %895 = vst.msk [vmem:[%s3 + $0x20] sm:$0xf] %vm886, %v870
  %896 = vst.msk [vmem:[%s3 + $0x24] sm:$0xf] %vm886, %v871
  %897 = vst.msk [vmem:[%s3 + $0x28] sm:$0xf] %vm886, %v872
  %898 = vst.msk [vmem:[%s3 + $0x2c] sm:$0xf] %vm886, %v873
  %899 = vst.msk [vmem:[%s3 + $0x30] sm:$0xf] %vm886, %v874
  %900 = vst.msk [vmem:[%s3 + $0x34] sm:$0xf] %vm886, %v875
  %901 = vst.msk [vmem:[%s3 + $0x38] sm:$0xf] %vm886, %v876
  %902 = vst.msk [vmem:[%s3 + $0x3c] sm:$0xf] %vm886, %v877
  %903 = vst.msk [vmem:[%s3 + $0x40] sm:$0xf] %vm886, %v878
  %904 = vst.msk [vmem:[%s3 + $0x44] sm:$0xf] %vm886, %v879
  %905 = vst.msk [vmem:[%s3 + $0x48] sm:$0xf] %vm886, %v880
  %906 = vst.msk [vmem:[%s3 + $0x4c] sm:$0xf] %vm886, %v881
  %907 = vst.msk [vmem:[%s3 + $0x50] sm:$0xf] %vm886, %v882
  %908 = vst.msk [vmem:[%s3 + $0x54] sm:$0xf] %vm886, %v883
  %909 = vst.msk [vmem:[%s3 + $0x58] sm:$0xf] %vm886, %v884
  %910 = vst.msk [vmem:[%s3 + $0x5c] sm:$0xf] %vm886, %v885
  // Predicated region
  $region14: #{_lambda_.5} parent=0 // pred_check
    _
  $region15: #{_lambda_.5} parent=0 // pred_check_branch
    %912 = sbr.rel (0) target = $region17
  $region16: #{_lambda_.5} parent=0 // pred_region
    _
  $region17: #{_lambda_.5} parent=0 // pred_fallthru
    _
  // Predicated region
  $region18: #{_lambda_.5} parent=0 // pred_check
    _
  $region19: #{_lambda_.5} parent=0 // pred_check_branch
    %914 = sbr.rel (0) target = $region21
  $region20: #{_lambda_.5} parent=0 // pred_region
    _
  $region21: #{_lambda_.5} parent=0 // pred_fallthru
    _

// kernel: _lambda_.6
$region0: #{_lambda_.6}
  #allocation0 [shape = 'u32[]', space=smem, size = 0x4, offset = 0x4, fixed_abs, tag = 'smem constant byte address 0x4 - core index']
  #allocation1 [shape = 'u32[72,128]{1,0:T(1,128)}', space=vmem, size = 0x9000, scoped, tag = 'internal scratch']
  %s0 = inlined_call_operand.vmem [shape: bf16[128,576], index: 0, kind: input, shape index: {}]
  %s1 = inlined_call_operand.vmem [shape: bf16[576,32], index: 1, kind: input, shape index: {}]
  %s2 = inlined_call_operand.vmem [shape: f32[1,32], index: 2, kind: input, shape index: {}]
  %s3 = inlined_call_operand.vmem [shape: bf16[128,32], index: 3, kind: output, shape index: {}]
  %s4 = sld [smem:[#allocation0]]
  $region22: #{_lambda_.6} parent=0
    _
  %s6 = ssub.s32 1, %s4
  %s7 = scalar_select 0, %s6, %s4
  // Predicated region
  $region2: #{_lambda_.6} parent=0 // pred_check
    _
  $region3: #{_lambda_.6} parent=0 // pred_check_branch
    %9 = sbr.rel (0) target = $region5
  $region4: #{_lambda_.6} parent=0 // pred_region
    _
  $region5: #{_lambda_.6} parent=0 // pred_fallthru
    _
  // Predicated region
  $region6: #{_lambda_.6} parent=0 // pred_check
    _
  $region7: #{_lambda_.6} parent=0 // pred_check_branch
    %11 = sbr.rel (0) target = $region9
  $region8: #{_lambda_.6} parent=0 // pred_region
    _
  $region9: #{_lambda_.6} parent=0 // pred_fallthru
    _
  // Predicated region
  $region10: #{_lambda_.6} parent=0 // pred_check
    _
  $region11: #{_lambda_.6} parent=0 // pred_check_branch
    %13 = sbr.rel (0) target = $region13
  $region12: #{_lambda_.6} parent=0 // pred_region
    _
  $region13: #{_lambda_.6} parent=0 // pred_fallthru
    _
  %v15 = vld [vmem:[%s0] sm:$0xff]
  %v16 = vld [vmem:[%s0 + $0x8] sm:$0xff]
  %v17 = vld [vmem:[%s0 + $0x10] sm:$0xf]
  %v18 = vld [vmem:[%s0 + $0x14] sm:$0xff]
  %v19 = vld [vmem:[%s0 + $0x1c] sm:$0xff]
  %v20 = vld [vmem:[%s0 + $0x24] sm:$0xf]
  %v21 = vld [vmem:[%s0 + $0x28] sm:$0xff]
  %v22 = vld [vmem:[%s0 + $0x30] sm:$0xff]
  %v23 = vld [vmem:[%s0 + $0x38] sm:$0xf]
  %v24 = vld [vmem:[%s0 + $0x3c] sm:$0xff]
  %v25 = vld [vmem:[%s0 + $0x44] sm:$0xff]
  %v26 = vld [vmem:[%s0 + $0x4c] sm:$0xf]
  %v27 = vld [vmem:[%s0 + $0x50] sm:$0xff]
  %v28 = vld [vmem:[%s0 + $0x58] sm:$0xff]
  %v29 = vld [vmem:[%s0 + $0x60] sm:$0xf]
  %v30 = vld [vmem:[%s0 + $0x64] sm:$0xff]
  %v31 = vld [vmem:[%s0 + $0x6c] sm:$0xff]
  %v32 = vld [vmem:[%s0 + $0x74] sm:$0xf]
  %v33 = vld [vmem:[%s0 + $0x78] sm:$0xff]
  %v34 = vld [vmem:[%s0 + $0x80] sm:$0xff]
  %v35 = vld [vmem:[%s0 + $0x88] sm:$0xf]
  %v36 = vld [vmem:[%s0 + $0x8c] sm:$0xff]
  %v37 = vld [vmem:[%s0 + $0x94] sm:$0xff]
  %v38 = vld [vmem:[%s0 + $0x9c] sm:$0xf]
  %v39 = vld [vmem:[%s0 + $0xa0] sm:$0xff]
  %v40 = vld [vmem:[%s0 + $0xa8] sm:$0xff]
  %v41 = vld [vmem:[%s0 + $0xb0] sm:$0xf]
  %v42 = vld [vmem:[%s0 + $0xb4] sm:$0xff]
  %v43 = vld [vmem:[%s0 + $0xbc] sm:$0xff]
  %v44 = vld [vmem:[%s0 + $0xc4] sm:$0xf]
  %v45 = vld [vmem:[%s0 + $0xc8] sm:$0xff]
  %v46 = vld [vmem:[%s0 + $0xd0] sm:$0xff]
  %v47 = vld [vmem:[%s0 + $0xd8] sm:$0xf]
  %v48 = vld [vmem:[%s0 + $0xdc] sm:$0xff]
  %v49 = vld [vmem:[%s0 + $0xe4] sm:$0xff]
  %v50 = vld [vmem:[%s0 + $0xec] sm:$0xf]
  %v51 = vld [vmem:[%s0 + $0xf0] sm:$0xff]
  %v52 = vld [vmem:[%s0 + $0xf8] sm:$0xff]
  %v53 = vld [vmem:[%s0 + $0x100] sm:$0xf]
  %v54 = vld [vmem:[%s0 + $0x104] sm:$0xff]
  %v55 = vld [vmem:[%s0 + $0x10c] sm:$0xff]
  %v56 = vld [vmem:[%s0 + $0x114] sm:$0xf]
  %v57 = vld [vmem:[%s0 + $0x118] sm:$0xff]
  %v58 = vld [vmem:[%s0 + $0x120] sm:$0xff]
  %v59 = vld [vmem:[%s0 + $0x128] sm:$0xf]
  %v60 = vld [vmem:[%s0 + $0x12c] sm:$0xff]
  %v61 = vld [vmem:[%s0 + $0x134] sm:$0xff]
  %v62 = vld [vmem:[%s0 + $0x13c] sm:$0xf]
  %v63 = vld [vmem:[%s1] sm:$0xf]
  %v64 = vld [vmem:[%s1 + $0x4] sm:$0xf]
  %v65 = vld [vmem:[%s1 + $0x8] sm:$0xf]
  %v66 = vld [vmem:[%s1 + $0xc] sm:$0xf]
  %v67 = vld [vmem:[%s1 + $0x10] sm:$0xf]
  %v68 = vld [vmem:[%s1 + $0x14] sm:$0xf]
  %v69 = vld [vmem:[%s1 + $0x18] sm:$0xf]
  %v70 = vld [vmem:[%s1 + $0x1c] sm:$0xf]
  %v71 = vld [vmem:[%s1 + $0x20] sm:$0xf]
  %v72 = vld [vmem:[%s1 + $0x24] sm:$0xf]
  %v73 = vld [vmem:[%s1 + $0x28] sm:$0xf]
  %v74 = vld [vmem:[%s1 + $0x2c] sm:$0xf]
  %v75 = vld [vmem:[%s1 + $0x30] sm:$0xf]
  %v76 = vld [vmem:[%s1 + $0x34] sm:$0xf]
  %v77 = vld [vmem:[%s1 + $0x38] sm:$0xf]
  %v78 = vld [vmem:[%s1 + $0x3c] sm:$0xf]
  %v79 = vld [vmem:[%s1 + $0x40] sm:$0xf]
  %v80 = vld [vmem:[%s1 + $0x44] sm:$0xf]
  %v81 = vld [vmem:[%s1 + $0x48] sm:$0xf]
  %v82 = vld [vmem:[%s1 + $0x4c] sm:$0xf]
  %v83 = vld [vmem:[%s1 + $0x50] sm:$0xf]
  %v84 = vld [vmem:[%s1 + $0x54] sm:$0xf]
  %v85 = vld [vmem:[%s1 + $0x58] sm:$0xf]
  %v86 = vld [vmem:[%s1 + $0x5c] sm:$0xf]
  %v87 = vld [vmem:[%s1 + $0x60] sm:$0xf]
  %v88 = vld [vmem:[%s1 + $0x64] sm:$0xf]
  %v89 = vld [vmem:[%s1 + $0x68] sm:$0xf]
  %v90 = vld [vmem:[%s1 + $0x6c] sm:$0xf]
  %v91 = vld [vmem:[%s1 + $0x70] sm:$0xf]
  %v92 = vld [vmem:[%s1 + $0x74] sm:$0xf]
  %v93 = vld [vmem:[%s1 + $0x78] sm:$0xf]
  %v94 = vld [vmem:[%s1 + $0x7c] sm:$0xf]
  %v95 = vld [vmem:[%s1 + $0x80] sm:$0xf]
  %v96 = vld [vmem:[%s1 + $0x84] sm:$0xf]
  %v97 = vld [vmem:[%s1 + $0x88] sm:$0xf]
  %v98 = vld [vmem:[%s1 + $0x8c] sm:$0xf]
  %v99 = vld [vmem:[%s1 + $0x90] sm:$0xf]
  %v100 = vld [vmem:[%s1 + $0x94] sm:$0xf]
  %v101 = vld [vmem:[%s1 + $0x98] sm:$0xf]
  %v102 = vld [vmem:[%s1 + $0x9c] sm:$0xf]
  %v103 = vld [vmem:[%s1 + $0xa0] sm:$0xf]
  %v104 = vld [vmem:[%s1 + $0xa4] sm:$0xf]
  %v105 = vld [vmem:[%s1 + $0xa8] sm:$0xf]
  %v106 = vld [vmem:[%s1 + $0xac] sm:$0xf]
  %v107 = vld [vmem:[%s1 + $0xb0] sm:$0xf]
  %v108 = vld [vmem:[%s1 + $0xb4] sm:$0xf]
  %v109 = vld [vmem:[%s1 + $0xb8] sm:$0xf]
  %v110 = vld [vmem:[%s1 + $0xbc] sm:$0xf]
  %v111 = vld [vmem:[%s1 + $0xc0] sm:$0xf]
  %v112 = vld [vmem:[%s1 + $0xc4] sm:$0xf]
  %v113 = vld [vmem:[%s1 + $0xc8] sm:$0xf]
  %v114 = vld [vmem:[%s1 + $0xcc] sm:$0xf]
  %v115 = vld [vmem:[%s1 + $0xd0] sm:$0xf]
  %v116 = vld [vmem:[%s1 + $0xd4] sm:$0xf]
  %v117 = vld [vmem:[%s1 + $0xd8] sm:$0xf]
  %v118 = vld [vmem:[%s1 + $0xdc] sm:$0xf]
  %v119 = vld [vmem:[%s1 + $0xe0] sm:$0xf]
  %v120 = vld [vmem:[%s1 + $0xe4] sm:$0xf]
  %v121 = vld [vmem:[%s1 + $0xe8] sm:$0xf]
  %v122 = vld [vmem:[%s1 + $0xec] sm:$0xf]
  %v123 = vld [vmem:[%s1 + $0xf0] sm:$0xf]
  %v124 = vld [vmem:[%s1 + $0xf4] sm:$0xf]
  %v125 = vld [vmem:[%s1 + $0xf8] sm:$0xf]
  %v126 = vld [vmem:[%s1 + $0xfc] sm:$0xf]
  %v127 = vld [vmem:[%s1 + $0x100] sm:$0xf]
  %v128 = vld [vmem:[%s1 + $0x104] sm:$0xf]
  %v129 = vld [vmem:[%s1 + $0x108] sm:$0xf]
  %v130 = vld [vmem:[%s1 + $0x10c] sm:$0xf]
  %v131 = vld [vmem:[%s1 + $0x110] sm:$0xf]
  %v132 = vld [vmem:[%s1 + $0x114] sm:$0xf]
  %v133 = vld [vmem:[%s1 + $0x118] sm:$0xf]
  %v134 = vld [vmem:[%s1 + $0x11c] sm:$0xf]
  %v135 = vld [vmem:[%s2] sm:$0x1]
  %v137 = vperm.slane %v135, 0
  %v187 = vunpack.c.l.b16 %v15
  %v188 = vunpack.c.h.b16 %v15
  %v189 = vunpack.c.l.b16 %v16
  %v190 = vunpack.c.h.b16 %v16
  %v191 = vunpack.c.l.b16 %v17
  %v192 = vunpack.c.l.b16 %v18
  %v193 = vunpack.c.h.b16 %v18
  %v194 = vunpack.c.l.b16 %v19
  %v195 = vunpack.c.h.b16 %v19
  %v196 = vunpack.c.l.b16 %v20
  %v197 = vunpack.c.l.b16 %v21
  %v198 = vunpack.c.h.b16 %v21
  %v199 = vunpack.c.l.b16 %v22
  %v200 = vunpack.c.h.b16 %v22
  %v201 = vunpack.c.l.b16 %v23
  %v202 = vunpack.c.l.b16 %v24
  %v203 = vunpack.c.h.b16 %v24
  %v204 = vunpack.c.l.b16 %v25
  %v205 = vunpack.c.h.b16 %v25
  %v206 = vunpack.c.l.b16 %v26
  %v207 = vunpack.c.l.b16 %v27
  %v208 = vunpack.c.h.b16 %v27
  %v209 = vunpack.c.l.b16 %v28
  %v210 = vunpack.c.h.b16 %v28
  %v211 = vunpack.c.l.b16 %v29
  %v212 = vunpack.c.l.b16 %v30
  %v213 = vunpack.c.h.b16 %v30
  %v214 = vunpack.c.l.b16 %v31
  %v215 = vunpack.c.h.b16 %v31
  %v216 = vunpack.c.l.b16 %v32
  %v217 = vunpack.c.l.b16 %v33
  %v218 = vunpack.c.h.b16 %v33
  %v219 = vunpack.c.l.b16 %v34
  %v220 = vunpack.c.h.b16 %v34
  %v221 = vunpack.c.l.b16 %v35
  %v222 = vunpack.c.l.b16 %v36
  %v223 = vunpack.c.h.b16 %v36
  %v224 = vunpack.c.l.b16 %v37
  %v225 = vunpack.c.h.b16 %v37
  %v226 = vunpack.c.l.b16 %v38
  %v227 = vunpack.c.l.b16 %v39
  %v228 = vunpack.c.h.b16 %v39
  %v229 = vunpack.c.l.b16 %v40
  %v230 = vunpack.c.h.b16 %v40
  %v231 = vunpack.c.l.b16 %v41
  %v232 = vunpack.c.l.b16 %v42
  %v233 = vunpack.c.h.b16 %v42
  %v234 = vunpack.c.l.b16 %v43
  %v235 = vunpack.c.h.b16 %v43
  %v236 = vunpack.c.l.b16 %v44
  %v237 = vunpack.c.l.b16 %v45
  %v238 = vunpack.c.h.b16 %v45
  %v239 = vunpack.c.l.b16 %v46
  %v240 = vunpack.c.h.b16 %v46
  %v241 = vunpack.c.l.b16 %v47
  %v242 = vunpack.c.l.b16 %v48
  %v243 = vunpack.c.h.b16 %v48
  %v244 = vunpack.c.l.b16 %v49
  %v245 = vunpack.c.h.b16 %v49
  %v246 = vunpack.c.l.b16 %v50
  %v247 = vunpack.c.l.b16 %v51
  %v248 = vunpack.c.h.b16 %v51
  %v249 = vunpack.c.l.b16 %v52
  %v250 = vunpack.c.h.b16 %v52
  %v251 = vunpack.c.l.b16 %v53
  %v252 = vunpack.c.l.b16 %v54
  %v253 = vunpack.c.h.b16 %v54
  %v254 = vunpack.c.l.b16 %v55
  %v255 = vunpack.c.h.b16 %v55
  %v256 = vunpack.c.l.b16 %v56
  %v257 = vunpack.c.l.b16 %v57
  %v258 = vunpack.c.h.b16 %v57
  %v259 = vunpack.c.l.b16 %v58
  %v260 = vunpack.c.h.b16 %v58
  %v261 = vunpack.c.l.b16 %v59
  %v262 = vunpack.c.l.b16 %v60
  %v263 = vunpack.c.h.b16 %v60
  %v264 = vunpack.c.l.b16 %v61
  %v265 = vunpack.c.h.b16 %v61
  %v266 = vunpack.c.l.b16 %v62
  %v267 = vpack.c.b16 %v192, %v187
  %v268 = vpack.c.b16 %v193, %v188
  %v269 = vpack.c.b16 %v194, %v189
  %v270 = vpack.c.b16 %v195, %v190
  %v271 = vpack.c.b16 %v196, %v191
  %v272 = vpack.c.b16 %v202, %v197
  %v273 = vpack.c.b16 %v203, %v198
  %v274 = vpack.c.b16 %v204, %v199
  %v275 = vpack.c.b16 %v205, %v200
  %v276 = vpack.c.b16 %v206, %v201
  %v277 = vpack.c.b16 %v212, %v207
  %v278 = vpack.c.b16 %v213, %v208
  %v279 = vpack.c.b16 %v214, %v209
  %v280 = vpack.c.b16 %v215, %v210
  %v281 = vpack.c.b16 %v216, %v211
  %v282 = vpack.c.b16 %v222, %v217
  %v283 = vpack.c.b16 %v223, %v218
  %v284 = vpack.c.b16 %v224, %v219
  %v285 = vpack.c.b16 %v225, %v220
  %v286 = vpack.c.b16 %v226, %v221
  %v287 = vpack.c.b16 %v232, %v227
  %v288 = vpack.c.b16 %v233, %v228
  %v289 = vpack.c.b16 %v234, %v229
  %v290 = vpack.c.b16 %v235, %v230
  %v291 = vpack.c.b16 %v236, %v231
  %v292 = vpack.c.b16 %v242, %v237
  %v293 = vpack.c.b16 %v243, %v238
  %v294 = vpack.c.b16 %v244, %v239
  %v295 = vpack.c.b16 %v245, %v240
  %v296 = vpack.c.b16 %v246, %v241
  %v297 = vpack.c.b16 %v252, %v247
  %v298 = vpack.c.b16 %v253, %v248
  %v299 = vpack.c.b16 %v254, %v249
  %v300 = vpack.c.b16 %v255, %v250
  %v301 = vpack.c.b16 %v256, %v251
  %v302 = vpack.c.b16 %v262, %v257
  %v303 = vpack.c.b16 %v263, %v258
  %v304 = vpack.c.b16 %v264, %v259
  %v305 = vpack.c.b16 %v265, %v260
  %v306 = vpack.c.b16 %v266, %v261
  %v411 = vunpack.c.l.b16 %v63
  %v412 = vunpack.c.l.b16 %v64
  %v413 = vunpack.c.l.b16 %v65
  %v414 = vunpack.c.l.b16 %v66
  %v415 = vunpack.c.l.b16 %v67
  %v416 = vunpack.c.l.b16 %v68
  %v417 = vunpack.c.l.b16 %v69
  %v418 = vunpack.c.l.b16 %v70
  %v419 = vunpack.c.l.b16 %v71
  %v420 = vunpack.c.l.b16 %v72
  %v421 = vunpack.c.l.b16 %v73
  %v422 = vunpack.c.l.b16 %v74
  %v423 = vunpack.c.l.b16 %v75
  %v424 = vunpack.c.l.b16 %v76
  %v425 = vunpack.c.l.b16 %v77
  %v426 = vunpack.c.l.b16 %v78
  %v427 = vunpack.c.l.b16 %v79
  %v428 = vunpack.c.l.b16 %v80
  %v429 = vunpack.c.l.b16 %v81
  %v430 = vunpack.c.l.b16 %v82
  %v431 = vunpack.c.l.b16 %v83
  %v432 = vunpack.c.l.b16 %v84
  %v433 = vunpack.c.l.b16 %v85
  %v434 = vunpack.c.l.b16 %v86
  %v435 = vunpack.c.l.b16 %v87
  %v436 = vunpack.c.l.b16 %v88
  %v437 = vunpack.c.l.b16 %v89
  %v438 = vunpack.c.l.b16 %v90
  %v439 = vunpack.c.l.b16 %v91
  %v440 = vunpack.c.l.b16 %v92
  %v441 = vunpack.c.l.b16 %v93
  %v442 = vunpack.c.l.b16 %v94
  %v443 = vunpack.c.l.b16 %v95
  %v444 = vunpack.c.l.b16 %v96
  %v445 = vunpack.c.l.b16 %v97
  %v446 = vunpack.c.l.b16 %v98
  %v447 = vunpack.c.l.b16 %v99
  %v448 = vunpack.c.l.b16 %v100
  %v449 = vunpack.c.l.b16 %v101
  %v450 = vunpack.c.l.b16 %v102
  %v451 = vunpack.c.l.b16 %v103
  %v452 = vunpack.c.l.b16 %v104
  %v453 = vunpack.c.l.b16 %v105
  %v454 = vunpack.c.l.b16 %v106
  %v455 = vunpack.c.l.b16 %v107
  %v456 = vunpack.c.l.b16 %v108
  %v457 = vunpack.c.l.b16 %v109
  %v458 = vunpack.c.l.b16 %v110
  %v459 = vunpack.c.l.b16 %v111
  %v460 = vunpack.c.l.b16 %v112
  %v461 = vunpack.c.l.b16 %v113
  %v462 = vunpack.c.l.b16 %v114
  %v463 = vunpack.c.l.b16 %v115
  %v464 = vunpack.c.l.b16 %v116
  %v465 = vunpack.c.l.b16 %v117
  %v466 = vunpack.c.l.b16 %v118
  %v467 = vunpack.c.l.b16 %v119
  %v468 = vunpack.c.l.b16 %v120
  %v469 = vunpack.c.l.b16 %v121
  %v470 = vunpack.c.l.b16 %v122
  %v471 = vunpack.c.l.b16 %v123
  %v472 = vunpack.c.l.b16 %v124
  %v473 = vunpack.c.l.b16 %v125
  %v474 = vunpack.c.l.b16 %v126
  %v475 = vunpack.c.l.b16 %v127
  %v476 = vunpack.c.l.b16 %v128
  %v477 = vunpack.c.l.b16 %v129
  %v478 = vunpack.c.l.b16 %v130
  %v479 = vunpack.c.l.b16 %v131
  %v480 = vunpack.c.l.b16 %v132
  %v481 = vunpack.c.l.b16 %v133
  %v482 = vunpack.c.l.b16 %v134
  %v483 = vpack.c.b16 %v412, %v411
  %v484 = vpack.c.b16 %v414, %v413
  %v485 = vpack.c.b16 %v416, %v415
  %v486 = vpack.c.b16 %v418, %v417
  %v487 = vpack.c.b16 %v420, %v419
  %v488 = vpack.c.b16 %v422, %v421
  %v489 = vpack.c.b16 %v424, %v423
  %v490 = vpack.c.b16 %v426, %v425
  %v491 = vpack.c.b16 %v428, %v427
  %v492 = vpack.c.b16 %v430, %v429
  %v493 = vpack.c.b16 %v432, %v431
  %v494 = vpack.c.b16 %v434, %v433
  %v495 = vpack.c.b16 %v436, %v435
  %v496 = vpack.c.b16 %v438, %v437
  %v497 = vpack.c.b16 %v440, %v439
  %v498 = vpack.c.b16 %v442, %v441
  %v499 = vpack.c.b16 %v444, %v443
  %v500 = vpack.c.b16 %v446, %v445
  %v501 = vpack.c.b16 %v448, %v447
  %v502 = vpack.c.b16 %v450, %v449
  %v503 = vpack.c.b16 %v452, %v451
  %v504 = vpack.c.b16 %v454, %v453
  %v505 = vpack.c.b16 %v456, %v455
  %v506 = vpack.c.b16 %v458, %v457
  %v507 = vpack.c.b16 %v460, %v459
  %v508 = vpack.c.b16 %v462, %v461
  %v509 = vpack.c.b16 %v464, %v463
  %v510 = vpack.c.b16 %v466, %v465
  %v511 = vpack.c.b16 %v468, %v467
  %v512 = vpack.c.b16 %v470, %v469
  %v513 = vpack.c.b16 %v472, %v471
  %v514 = vpack.c.b16 %v474, %v473
  %v515 = vpack.c.b16 %v476, %v475
  %v516 = vpack.c.b16 %v478, %v477
  %v517 = vpack.c.b16 %v480, %v479
  %v518 = vpack.c.b16 %v482, %v481
  %vm555 = vcmask 523264
  %v557 = vsel %vm555, %v271, 0
  %v560 = vsel %vm555, %v276, 0
  %v563 = vsel %vm555, %v281, 0
  %v566 = vsel %vm555, %v286, 0
  %v569 = vsel %vm555, %v291, 0
  %v572 = vsel %vm555, %v296, 0
  %v575 = vsel %vm555, %v301, 0
  %v578 = vsel %vm555, %v306, 0
  %580 = vmatpush.bf16.msra.mxu0 %v490
  %581 = vmatpush.bf16.msra.mxu0 %v489
  %582 = vmatpush.bf16.msra.mxu0 %v488
  %583 = vmatpush.bf16.msra.mxu0 %v487
  %584 = vmatpush.bf16.msra.mxu0 %v486
  %585 = vmatpush.bf16.msra.mxu0 %v485
  %586 = vmatpush.bf16.msra.mxu0 %v484
  %587 = vmatpush.bf16.msra.mxu0 %v483
  %588 = vmatmul.bf16.gmra.mxu0 %v267
  %v589 = vpop.f32.mrf.mxu0
  %v590 = vadd.f32 %v137, %v589
  %v591 = vpop.f32.mrf.mxu0
  %v592 = vadd.f32 %v137, %v591
  %593 = vmatmul.bf16.gmra.mxu0 %v272
  %v594 = vpop.f32.mrf.mxu0
  %v595 = vadd.f32 %v137, %v594
  %v596 = vpop.f32.mrf.mxu0
  %v597 = vadd.f32 %v137, %v596
  %598 = vmatmul.bf16.gmra.mxu0 %v277
  %v599 = vpop.f32.mrf.mxu0
  %v600 = vadd.f32 %v137, %v599
  %v601 = vpop.f32.mrf.mxu0
  %v602 = vadd.f32 %v137, %v601
  %603 = vmatmul.bf16.gmra.mxu0 %v282
  %v604 = vpop.f32.mrf.mxu0
  %v605 = vadd.f32 %v137, %v604
  %v606 = vpop.f32.mrf.mxu0
  %v607 = vadd.f32 %v137, %v606
  %608 = vmatmul.bf16.gmra.mxu0 %v287
  %v609 = vpop.f32.mrf.mxu0
  %v610 = vadd.f32 %v137, %v609
  %v611 = vpop.f32.mrf.mxu0
  %v612 = vadd.f32 %v137, %v611
  %613 = vmatmul.bf16.gmra.mxu0 %v292
  %v614 = vpop.f32.mrf.mxu0
  %v615 = vadd.f32 %v137, %v614
  %v616 = vpop.f32.mrf.mxu0
  %v617 = vadd.f32 %v137, %v616
  %618 = vmatmul.bf16.gmra.mxu0 %v297
  %v619 = vpop.f32.mrf.mxu0
  %v620 = vadd.f32 %v137, %v619
  %v621 = vpop.f32.mrf.mxu0
  %v622 = vadd.f32 %v137, %v621
  %623 = vmatmul.bf16.gmra.mxu0 %v302
  %v624 = vpop.f32.mrf.mxu0
  %v625 = vadd.f32 %v137, %v624
  %v626 = vpop.f32.mrf.mxu0
  %v627 = vadd.f32 %v137, %v626
  %628 = vdwg.mxu0
  %629 = vmatpush.bf16.msra.mxu0 %v498
  %630 = vmatpush.bf16.msra.mxu0 %v497
  %631 = vmatpush.bf16.msra.mxu0 %v496
  %632 = vmatpush.bf16.msra.mxu0 %v495
  %633 = vmatpush.bf16.msra.mxu0 %v494
  %634 = vmatpush.bf16.msra.mxu0 %v493
  %635 = vmatpush.bf16.msra.mxu0 %v492
  %636 = vmatpush.bf16.msra.mxu0 %v491
  %637 = vmatmul.bf16.gmra.mxu0 %v268
  %v638 = vpop.f32.mrf.mxu0
  %v639 = vadd.f32 %v590, %v638
  %v640 = vpop.f32.mrf.mxu0
  %v641 = vadd.f32 %v592, %v640
  %642 = vmatmul.bf16.gmra.mxu0 %v273
  %v643 = vpop.f32.mrf.mxu0
  %v644 = vadd.f32 %v595, %v643
  %v645 = vpop.f32.mrf.mxu0
  %v646 = vadd.f32 %v597, %v645
  %647 = vmatmul.bf16.gmra.mxu0 %v278
  %v648 = vpop.f32.mrf.mxu0
  %v649 = vadd.f32 %v600, %v648
  %v650 = vpop.f32.mrf.mxu0
  %v651 = vadd.f32 %v602, %v650
  %652 = vmatmul.bf16.gmra.mxu0 %v283
  %v653 = vpop.f32.mrf.mxu0
  %v654 = vadd.f32 %v605, %v653
  %v655 = vpop.f32.mrf.mxu0
  %v656 = vadd.f32 %v607, %v655
  %657 = vmatmul.bf16.gmra.mxu0 %v288
  %v658 = vpop.f32.mrf.mxu0
  %v659 = vadd.f32 %v610, %v658
  %v660 = vpop.f32.mrf.mxu0
  %v661 = vadd.f32 %v612, %v660
  %662 = vmatmul.bf16.gmra.mxu0 %v293
  %v663 = vpop.f32.mrf.mxu0
  %v664 = vadd.f32 %v615, %v663
  %v665 = vpop.f32.mrf.mxu0
  %v666 = vadd.f32 %v617, %v665
  %667 = vmatmul.bf16.gmra.mxu0 %v298
  %v668 = vpop.f32.mrf.mxu0
  %v669 = vadd.f32 %v620, %v668
  %v670 = vpop.f32.mrf.mxu0
  %v671 = vadd.f32 %v622, %v670
  %672 = vmatmul.bf16.gmra.mxu0 %v303
  %v673 = vpop.f32.mrf.mxu0
  %v674 = vadd.f32 %v625, %v673
  %v675 = vpop.f32.mrf.mxu0
  %v676 = vadd.f32 %v627, %v675
  %677 = vdwg.mxu0
  %678 = vmatpush.bf16.msra.mxu0 %v506
  %679 = vmatpush.bf16.msra.mxu0 %v505
  %680 = vmatpush.bf16.msra.mxu0 %v504
  %681 = vmatpush.bf16.msra.mxu0 %v503
  %682 = vmatpush.bf16.msra.mxu0 %v502
  %683 = vmatpush.bf16.msra.mxu0 %v501
  %684 = vmatpush.bf16.msra.mxu0 %v500
  %685 = vmatpush.bf16.msra.mxu0 %v499
  %686 = vmatmul.bf16.gmra.mxu0 %v269
  %v687 = vpop.f32.mrf.mxu0
  %v688 = vadd.f32 %v639, %v687
  %v689 = vpop.f32.mrf.mxu0
  %v690 = vadd.f32 %v641, %v689
  %691 = vmatmul.bf16.gmra.mxu0 %v274
  %v692 = vpop.f32.mrf.mxu0
  %v693 = vadd.f32 %v644, %v692
  %v694 = vpop.f32.mrf.mxu0
  %v695 = vadd.f32 %v646, %v694
  %696 = vmatmul.bf16.gmra.mxu0 %v279
  %v697 = vpop.f32.mrf.mxu0
  %v698 = vadd.f32 %v649, %v697
  %v699 = vpop.f32.mrf.mxu0
  %v700 = vadd.f32 %v651, %v699
  %701 = vmatmul.bf16.gmra.mxu0 %v284
  %v702 = vpop.f32.mrf.mxu0
  %v703 = vadd.f32 %v654, %v702
  %v704 = vpop.f32.mrf.mxu0
  %v705 = vadd.f32 %v656, %v704
  %706 = vmatmul.bf16.gmra.mxu0 %v289
  %v707 = vpop.f32.mrf.mxu0
  %v708 = vadd.f32 %v659, %v707
  %v709 = vpop.f32.mrf.mxu0
  %v710 = vadd.f32 %v661, %v709
  %711 = vmatmul.bf16.gmra.mxu0 %v294
  %v712 = vpop.f32.mrf.mxu0
  %v713 = vadd.f32 %v664, %v712
  %v714 = vpop.f32.mrf.mxu0
  %v715 = vadd.f32 %v666, %v714
  %716 = vmatmul.bf16.gmra.mxu0 %v299
  %v717 = vpop.f32.mrf.mxu0
  %v718 = vadd.f32 %v669, %v717
  %v719 = vpop.f32.mrf.mxu0
  %v720 = vadd.f32 %v671, %v719
  %721 = vmatmul.bf16.gmra.mxu0 %v304
  %v722 = vpop.f32.mrf.mxu0
  %v723 = vadd.f32 %v674, %v722
  %v724 = vpop.f32.mrf.mxu0
  %v725 = vadd.f32 %v676, %v724
  %726 = vdwg.mxu0
  %727 = vmatpush.bf16.msra.mxu0 %v514
  %728 = vmatpush.bf16.msra.mxu0 %v513
  %729 = vmatpush.bf16.msra.mxu0 %v512
  %730 = vmatpush.bf16.msra.mxu0 %v511
  %731 = vmatpush.bf16.msra.mxu0 %v510
  %732 = vmatpush.bf16.msra.mxu0 %v509
  %733 = vmatpush.bf16.msra.mxu0 %v508
  %734 = vmatpush.bf16.msra.mxu0 %v507
  %735 = vmatmul.bf16.gmra.mxu0 %v270
  %v736 = vpop.f32.mrf.mxu0
  %v737 = vadd.f32 %v688, %v736
  %v738 = vpop.f32.mrf.mxu0
  %v739 = vadd.f32 %v690, %v738
  %740 = vmatmul.bf16.gmra.mxu0 %v275
  %v741 = vpop.f32.mrf.mxu0
  %v742 = vadd.f32 %v693, %v741
  %v743 = vpop.f32.mrf.mxu0
  %v744 = vadd.f32 %v695, %v743
  %745 = vmatmul.bf16.gmra.mxu0 %v280
  %v746 = vpop.f32.mrf.mxu0
  %v747 = vadd.f32 %v698, %v746
  %v748 = vpop.f32.mrf.mxu0
  %v749 = vadd.f32 %v700, %v748
  %750 = vmatmul.bf16.gmra.mxu0 %v285
  %v751 = vpop.f32.mrf.mxu0
  %v752 = vadd.f32 %v703, %v751
  %v753 = vpop.f32.mrf.mxu0
  %v754 = vadd.f32 %v705, %v753
  %755 = vmatmul.bf16.gmra.mxu0 %v290
  %v756 = vpop.f32.mrf.mxu0
  %v757 = vadd.f32 %v708, %v756
  %v758 = vpop.f32.mrf.mxu0
  %v759 = vadd.f32 %v710, %v758
  %760 = vmatmul.bf16.gmra.mxu0 %v295
  %v761 = vpop.f32.mrf.mxu0
  %v762 = vadd.f32 %v713, %v761
  %v763 = vpop.f32.mrf.mxu0
  %v764 = vadd.f32 %v715, %v763
  %765 = vmatmul.bf16.gmra.mxu0 %v300
  %v766 = vpop.f32.mrf.mxu0
  %v767 = vadd.f32 %v718, %v766
  %v768 = vpop.f32.mrf.mxu0
  %v769 = vadd.f32 %v720, %v768
  %770 = vmatmul.bf16.gmra.mxu0 %v305
  %v771 = vpop.f32.mrf.mxu0
  %v772 = vadd.f32 %v723, %v771
  %v773 = vpop.f32.mrf.mxu0
  %v774 = vadd.f32 %v725, %v773
  %775 = vdwg.mxu0
  %776 = vmatpush.bf16.msra.mxu0 0
  %777 = vmatpush.bf16.msra.mxu0 0
  %778 = vmatpush.bf16.msra.mxu0 0
  %779 = vmatpush.bf16.msra.mxu0 0
  %780 = vmatpush.bf16.msra.mxu0 %v518
  %781 = vmatpush.bf16.msra.mxu0 %v517
  %782 = vmatpush.bf16.msra.mxu0 %v516
  %783 = vmatpush.bf16.msra.mxu0 %v515
  %784 = vmatmul.bf16.gmra.mxu0 %v557
  %v785 = vpop.f32.mrf.mxu0
  %v786 = vadd.f32 %v737, %v785
  %v787 = vpop.f32.mrf.mxu0
  %v788 = vadd.f32 %v739, %v787
  %789 = vmatmul.bf16.gmra.mxu0 %v560
  %v790 = vpop.f32.mrf.mxu0
  %v791 = vadd.f32 %v742, %v790
  %v792 = vpop.f32.mrf.mxu0
  %v793 = vadd.f32 %v744, %v792
  %794 = vmatmul.bf16.gmra.mxu0 %v563
  %v795 = vpop.f32.mrf.mxu0
  %v796 = vadd.f32 %v747, %v795
  %v797 = vpop.f32.mrf.mxu0
  %v798 = vadd.f32 %v749, %v797
  %799 = vmatmul.bf16.gmra.mxu0 %v566
  %v800 = vpop.f32.mrf.mxu0
  %v801 = vadd.f32 %v752, %v800
  %v802 = vpop.f32.mrf.mxu0
  %v803 = vadd.f32 %v754, %v802
  %804 = vmatmul.bf16.gmra.mxu0 %v569
  %v805 = vpop.f32.mrf.mxu0
  %v806 = vadd.f32 %v757, %v805
  %v807 = vpop.f32.mrf.mxu0
  %v808 = vadd.f32 %v759, %v807
  %809 = vmatmul.bf16.gmra.mxu0 %v572
  %v810 = vpop.f32.mrf.mxu0
  %v811 = vadd.f32 %v762, %v810
  %v812 = vpop.f32.mrf.mxu0
  %v813 = vadd.f32 %v764, %v812
  %814 = vmatmul.bf16.gmra.mxu0 %v575
  %v815 = vpop.f32.mrf.mxu0
  %v816 = vadd.f32 %v767, %v815
  %v817 = vpop.f32.mrf.mxu0
  %v818 = vadd.f32 %v769, %v817
  %819 = vmatmul.bf16.gmra.mxu0 %v578
  %v820 = vpop.f32.mrf.mxu0
  %v821 = vadd.f32 %v772, %v820
  %v822 = vpop.f32.mrf.mxu0
  %v823 = vadd.f32 %v774, %v822
  %824 = vdwg.mxu0
  %v825 = vmax.f32 %v786, 0.0
  %v826 = vmax.f32 %v788, 0.0
  %v827 = vmax.f32 %v791, 0.0
  %v828 = vmax.f32 %v793, 0.0
  %v829 = vmax.f32 %v796, 0.0
  %v830 = vmax.f32 %v798, 0.0
  %v831 = vmax.f32 %v801, 0.0
  %v832 = vmax.f32 %v803, 0.0
  %v833 = vmax.f32 %v806, 0.0
  %v834 = vmax.f32 %v808, 0.0
  %v835 = vmax.f32 %v811, 0.0
  %v836 = vmax.f32 %v813, 0.0
  %v837 = vmax.f32 %v816, 0.0
  %v838 = vmax.f32 %v818, 0.0
  %v839 = vmax.f32 %v821, 0.0
  %v840 = vmax.f32 %v823, 0.0
  %v841 = vpack.c.bf16 %v825, %v825
  %v842 = vpack.c.bf16 %v826, %v826
  %v843 = vpack.c.bf16 %v827, %v827
  %v844 = vpack.c.bf16 %v828, %v828
  %v845 = vpack.c.bf16 %v829, %v829
  %v846 = vpack.c.bf16 %v830, %v830
  %v847 = vpack.c.bf16 %v831, %v831
  %v848 = vpack.c.bf16 %v832, %v832
  %v849 = vpack.c.bf16 %v833, %v833
  %v850 = vpack.c.bf16 %v834, %v834
  %v851 = vpack.c.bf16 %v835, %v835
  %v852 = vpack.c.bf16 %v836, %v836
  %v853 = vpack.c.bf16 %v837, %v837
  %v854 = vpack.c.bf16 %v838, %v838
  %v855 = vpack.c.bf16 %v839, %v839
  %v856 = vpack.c.bf16 %v840, %v840
  %vm857 = vcmask 257024
  %858 = vst.msk [vmem:[%s3] sm:$0xf] %vm857, %v841
  %859 = vst.msk [vmem:[%s3 + $0x4] sm:$0xf] %vm857, %v842
  %860 = vst.msk [vmem:[%s3 + $0x8] sm:$0xf] %vm857, %v843
  %861 = vst.msk [vmem:[%s3 + $0xc] sm:$0xf] %vm857, %v844
  %862 = vst.msk [vmem:[%s3 + $0x10] sm:$0xf] %vm857, %v845
  %863 = vst.msk [vmem:[%s3 + $0x14] sm:$0xf] %vm857, %v846
  %864 = vst.msk [vmem:[%s3 + $0x18] sm:$0xf] %vm857, %v847
  %865 = vst.msk [vmem:[%s3 + $0x1c] sm:$0xf] %vm857, %v848
  %866 = vst.msk [vmem:[%s3 + $0x20] sm:$0xf] %vm857, %v849
  %867 = vst.msk [vmem:[%s3 + $0x24] sm:$0xf] %vm857, %v850
  %868 = vst.msk [vmem:[%s3 + $0x28] sm:$0xf] %vm857, %v851
  %869 = vst.msk [vmem:[%s3 + $0x2c] sm:$0xf] %vm857, %v852
  %870 = vst.msk [vmem:[%s3 + $0x30] sm:$0xf] %vm857, %v853
  %871 = vst.msk [vmem:[%s3 + $0x34] sm:$0xf] %vm857, %v854
  %872 = vst.msk [vmem:[%s3 + $0x38] sm:$0xf] %vm857, %v855
  %873 = vst.msk [vmem:[%s3 + $0x3c] sm:$0xf] %vm857, %v856
  // Predicated region
  $region14: #{_lambda_.6} parent=0 // pred_check
    _
  $region15: #{_lambda_.6} parent=0 // pred_check_branch
    %875 = sbr.rel (0) target = $region17
  $region16: #{_lambda_.6} parent=0 // pred_region
    _
  $region17: #{_lambda_.6} parent=0 // pred_fallthru
    _
  // Predicated region
  $region18: #{_lambda_.6} parent=0 // pred_check
    _
  $region19: #{_lambda_.6} parent=0 // pred_check_branch
    %877 = sbr.rel (0) target = $region21
  $region20: #{_lambda_.6} parent=0 // pred_region
    _
  $region21: #{_lambda_.6} parent=0 // pred_fallthru
    _

// kernel: _lambda_.7
$region0: #{_lambda_.7}
  #allocation0 [shape = 'u32[]', space=smem, size = 0x4, offset = 0x4, fixed_abs, tag = 'smem constant byte address 0x4 - core index']
  #allocation1 [shape = 'u32[72,128]{1,0:T(1,128)}', space=vmem, size = 0x9000, scoped, tag = 'internal scratch']
  %s0 = inlined_call_operand.vmem [shape: bf16[32,1568], index: 0, kind: input, shape index: {}]
  %s1 = inlined_call_operand.vmem [shape: bf16[1568,512], index: 1, kind: input, shape index: {}]
  %s2 = inlined_call_operand.vmem [shape: f32[1,512], index: 2, kind: input, shape index: {}]
  %s3 = inlined_call_operand.vmem [shape: bf16[512,128], index: 3, kind: input, shape index: {}]
  %s4 = inlined_call_operand.vmem [shape: f32[1,128], index: 4, kind: input, shape index: {}]
  %s5 = inlined_call_operand.vmem [shape: f32[32,128], index: 5, kind: output, shape index: {}]
  %s6 = sld [smem:[#allocation0]]
  $region30: #{_lambda_.7} parent=0
    _
  %s8 = ssub.s32 1, %s6
  %s9 = scalar_select 0, %s8, %s6
  // Predicated region
  $region2: #{_lambda_.7} parent=0 // pred_check
    _
  $region3: #{_lambda_.7} parent=0 // pred_check_branch
    %11 = sbr.rel (0) target = $region5
  $region4: #{_lambda_.7} parent=0 // pred_region
    _
  $region5: #{_lambda_.7} parent=0 // pred_fallthru
    _
  // Predicated region
  $region6: #{_lambda_.7} parent=0 // pred_check
    _
  $region7: #{_lambda_.7} parent=0 // pred_check_branch
    %13 = sbr.rel (0) target = $region9
  $region8: #{_lambda_.7} parent=0 // pred_region
    _
  $region9: #{_lambda_.7} parent=0 // pred_fallthru
    _
  // Predicated region
  $region10: #{_lambda_.7} parent=0 // pred_check
    _
  $region11: #{_lambda_.7} parent=0 // pred_check_branch
    %15 = sbr.rel (0) target = $region13
  $region12: #{_lambda_.7} parent=0 // pred_region
    _
  $region13: #{_lambda_.7} parent=0 // pred_fallthru
    _
  // Predicated region
  $region14: #{_lambda_.7} parent=0 // pred_check
    _
  $region15: #{_lambda_.7} parent=0 // pred_check_branch
    %17 = sbr.rel (0) target = $region17
  $region16: #{_lambda_.7} parent=0 // pred_region
    _
  $region17: #{_lambda_.7} parent=0 // pred_fallthru
    _
  // Predicated region
  $region18: #{_lambda_.7} parent=0 // pred_check
    _
  $region19: #{_lambda_.7} parent=0 // pred_check_branch
    %19 = sbr.rel (0) target = $region21
  $region20: #{_lambda_.7} parent=0 // pred_region
    _
  $region21: #{_lambda_.7} parent=0 // pred_fallthru
    _
  %v21 = vld [vmem:[%s0] sm:$0xff]
  %v22 = vld [vmem:[%s0 + $0x8] sm:$0xff]
  %v23 = vld [vmem:[%s0 + $0x10] sm:$0xff]
  %v24 = vld [vmem:[%s0 + $0x18] sm:$0xff]
  %v25 = vld [vmem:[%s0 + $0x20] sm:$0xff]
  %v26 = vld [vmem:[%s0 + $0x28] sm:$0xff]
  %v27 = vld [vmem:[%s0 + $0x30] sm:$0xf]
  %v28 = vld [vmem:[%s0 + $0x34] sm:$0xff]
  %v29 = vld [vmem:[%s0 + $0x3c] sm:$0xff]
  %v30 = vld [vmem:[%s0 + $0x44] sm:$0xff]
  %v31 = vld [vmem:[%s0 + $0x4c] sm:$0xff]
  %v32 = vld [vmem:[%s0 + $0x54] sm:$0xff]
  %v33 = vld [vmem:[%s0 + $0x5c] sm:$0xff]
  %v34 = vld [vmem:[%s0 + $0x64] sm:$0xf]
  %v35 = vld [vmem:[%s0 + $0x68] sm:$0xff]
  %v36 = vld [vmem:[%s0 + $0x70] sm:$0xff]
  %v37 = vld [vmem:[%s0 + $0x78] sm:$0xff]
  %v38 = vld [vmem:[%s0 + $0x80] sm:$0xff]
  %v39 = vld [vmem:[%s0 + $0x88] sm:$0xff]
  %v40 = vld [vmem:[%s0 + $0x90] sm:$0xff]
  %v41 = vld [vmem:[%s0 + $0x98] sm:$0xf]
  %v42 = vld [vmem:[%s0 + $0x9c] sm:$0xff]
  %v43 = vld [vmem:[%s0 + $0xa4] sm:$0xff]
  %v44 = vld [vmem:[%s0 + $0xac] sm:$0xff]
  %v45 = vld [vmem:[%s0 + $0xb4] sm:$0xff]
  %v46 = vld [vmem:[%s0 + $0xbc] sm:$0xff]
  %v47 = vld [vmem:[%s0 + $0xc4] sm:$0xff]
  %v48 = vld [vmem:[%s0 + $0xcc] sm:$0xf]
  %v49 = vld [vmem:[%s1] sm:$0xff]
  %v50 = vld [vmem:[%s1 + $0x8] sm:$0xff]
  %v51 = vld [vmem:[%s1 + $0x10] sm:$0xff]
  %v52 = vld [vmem:[%s1 + $0x18] sm:$0xff]
  %v53 = vld [vmem:[%s1 + $0x20] sm:$0xff]
  %v54 = vld [vmem:[%s1 + $0x28] sm:$0xff]
  %v55 = vld [vmem:[%s1 + $0x30] sm:$0xff]
  %v56 = vld [vmem:[%s1 + $0x38] sm:$0xff]
  %v57 = vld [vmem:[%s1 + $0x40] sm:$0xff]
  %v58 = vld [vmem:[%s1 + $0x48] sm:$0xff]
  %v59 = vld [vmem:[%s1 + $0x50] sm:$0xff]
  %v60 = vld [vmem:[%s1 + $0x58] sm:$0xff]
  %v61 = vld [vmem:[%s1 + $0x60] sm:$0xff]
  %v62 = vld [vmem:[%s1 + $0x68] sm:$0xff]
  %v63 = vld [vmem:[%s1 + $0x70] sm:$0xff]
  %v64 = vld [vmem:[%s1 + $0x78] sm:$0xff]
  %v65 = vld [vmem:[%s1 + $0x80] sm:$0xff]
  %v66 = vld [vmem:[%s1 + $0x88] sm:$0xff]
  %v67 = vld [vmem:[%s1 + $0x90] sm:$0xff]
  %v68 = vld [vmem:[%s1 + $0x98] sm:$0xff]
  %v69 = vld [vmem:[%s1 + $0xa0] sm:$0xff]
  %v70 = vld [vmem:[%s1 + $0xa8] sm:$0xff]
  %v71 = vld [vmem:[%s1 + $0xb0] sm:$0xff]
  %v72 = vld [vmem:[%s1 + $0xb8] sm:$0xff]
  %v73 = vld [vmem:[%s1 + $0xc0] sm:$0xff]
  %v74 = vld [vmem:[%s1 + $0xc8] sm:$0xff]
  %v75 = vld [vmem:[%s1 + $0xd0] sm:$0xff]
  %v76 = vld [vmem:[%s1 + $0xd8] sm:$0xff]
  %v77 = vld [vmem:[%s1 + $0xe0] sm:$0xff]
  %v78 = vld [vmem:[%s1 + $0xe8] sm:$0xff]
  %v79 = vld [vmem:[%s1 + $0xf0] sm:$0xff]
  %v80 = vld [vmem:[%s1 + $0xf8] sm:$0xff]
  %v81 = vld [vmem:[%s1 + $0x100] sm:$0xff]
  %v82 = vld [vmem:[%s1 + $0x108] sm:$0xff]
  %v83 = vld [vmem:[%s1 + $0x110] sm:$0xff]
  %v84 = vld [vmem:[%s1 + $0x118] sm:$0xff]
  %v85 = vld [vmem:[%s1 + $0x120] sm:$0xff]
  %v86 = vld [vmem:[%s1 + $0x128] sm:$0xff]
  %v87 = vld [vmem:[%s1 + $0x130] sm:$0xff]
  %v88 = vld [vmem:[%s1 + $0x138] sm:$0xff]
  %v89 = vld [vmem:[%s1 + $0x140] sm:$0xff]
  %v90 = vld [vmem:[%s1 + $0x148] sm:$0xff]
  %v91 = vld [vmem:[%s1 + $0x150] sm:$0xff]
  %v92 = vld [vmem:[%s1 + $0x158] sm:$0xff]
  %v93 = vld [vmem:[%s1 + $0x160] sm:$0xff]
  %v94 = vld [vmem:[%s1 + $0x168] sm:$0xff]
  %v95 = vld [vmem:[%s1 + $0x170] sm:$0xff]
  %v96 = vld [vmem:[%s1 + $0x178] sm:$0xff]
  %v97 = vld [vmem:[%s1 + $0x180] sm:$0xff]
  %v98 = vld [vmem:[%s1 + $0x188] sm:$0xff]
  %v99 = vld [vmem:[%s1 + $0x190] sm:$0xff]
  %v100 = vld [vmem:[%s1 + $0x198] sm:$0xff]
  %v101 = vld [vmem:[%s1 + $0x1a0] sm:$0xff]
  %v102 = vld [vmem:[%s1 + $0x1a8] sm:$0xff]
  %v103 = vld [vmem:[%s1 + $0x1b0] sm:$0xff]
  %v104 = vld [vmem:[%s1 + $0x1b8] sm:$0xff]
  %v105 = vld [vmem:[%s1 + $0x1c0] sm:$0xff]
  %v106 = vld [vmem:[%s1 + $0x1c8] sm:$0xff]
  %v107 = vld [vmem:[%s1 + $0x1d0] sm:$0xff]
  %v108 = vld [vmem:[%s1 + $0x1d8] sm:$0xff]
  %v109 = vld [vmem:[%s1 + $0x1e0] sm:$0xff]
  %v110 = vld [vmem:[%s1 + $0x1e8] sm:$0xff]
  %v111 = vld [vmem:[%s1 + $0x1f0] sm:$0xff]
  %v112 = vld [vmem:[%s1 + $0x1f8] sm:$0xff]
  %v113 = vld [vmem:[%s1 + $0x200] sm:$0xff]
  %v114 = vld [vmem:[%s1 + $0x208] sm:$0xff]
  %v115 = vld [vmem:[%s1 + $0x210] sm:$0xff]
  %v116 = vld [vmem:[%s1 + $0x218] sm:$0xff]
  %v117 = vld [vmem:[%s1 + $0x220] sm:$0xff]
  %v118 = vld [vmem:[%s1 + $0x228] sm:$0xff]
  %v119 = vld [vmem:[%s1 + $0x230] sm:$0xff]
  %v120 = vld [vmem:[%s1 + $0x238] sm:$0xff]
  %v121 = vld [vmem:[%s1 + $0x240] sm:$0xff]
  %v122 = vld [vmem:[%s1 + $0x248] sm:$0xff]
  %v123 = vld [vmem:[%s1 + $0x250] sm:$0xff]
  %v124 = vld [vmem:[%s1 + $0x258] sm:$0xff]
  %v125 = vld [vmem:[%s1 + $0x260] sm:$0xff]
  %v126 = vld [vmem:[%s1 + $0x268] sm:$0xff]
  %v127 = vld [vmem:[%s1 + $0x270] sm:$0xff]
  %v128 = vld [vmem:[%s1 + $0x278] sm:$0xff]
  %v129 = vld [vmem:[%s1 + $0x280] sm:$0xff]
  %v130 = vld [vmem:[%s1 + $0x288] sm:$0xff]
  %v131 = vld [vmem:[%s1 + $0x290] sm:$0xff]
  %v132 = vld [vmem:[%s1 + $0x298] sm:$0xff]
  %v133 = vld [vmem:[%s1 + $0x2a0] sm:$0xff]
  %v134 = vld [vmem:[%s1 + $0x2a8] sm:$0xff]
  %v135 = vld [vmem:[%s1 + $0x2b0] sm:$0xff]
  %v136 = vld [vmem:[%s1 + $0x2b8] sm:$0xff]
  %v137 = vld [vmem:[%s1 + $0x2c0] sm:$0xff]
  %v138 = vld [vmem:[%s1 + $0x2c8] sm:$0xff]
  %v139 = vld [vmem:[%s1 + $0x2d0] sm:$0xff]
  %v140 = vld [vmem:[%s1 + $0x2d8] sm:$0xff]
  %v141 = vld [vmem:[%s1 + $0x2e0] sm:$0xff]
  %v142 = vld [vmem:[%s1 + $0x2e8] sm:$0xff]
  %v143 = vld [vmem:[%s1 + $0x2f0] sm:$0xff]
  %v144 = vld [vmem:[%s1 + $0x2f8] sm:$0xff]
  %v145 = vld [vmem:[%s1 + $0x300] sm:$0xff]
  %v146 = vld [vmem:[%s1 + $0x308] sm:$0xff]
  %v147 = vld [vmem:[%s1 + $0x310] sm:$0xff]
  %v148 = vld [vmem:[%s1 + $0x318] sm:$0xff]
  %v149 = vld [vmem:[%s1 + $0x320] sm:$0xff]
  %v150 = vld [vmem:[%s1 + $0x328] sm:$0xff]
  %v151 = vld [vmem:[%s1 + $0x330] sm:$0xff]
  %v152 = vld [vmem:[%s1 + $0x338] sm:$0xff]
  %v153 = vld [vmem:[%s1 + $0x340] sm:$0xff]
  %v154 = vld [vmem:[%s1 + $0x348] sm:$0xff]
  %v155 = vld [vmem:[%s1 + $0x350] sm:$0xff]
  %v156 = vld [vmem:[%s1 + $0x358] sm:$0xff]
  %v157 = vld [vmem:[%s1 + $0x360] sm:$0xff]
  %v158 = vld [vmem:[%s1 + $0x368] sm:$0xff]
  %v159 = vld [vmem:[%s1 + $0x370] sm:$0xff]
  %v160 = vld [vmem:[%s1 + $0x378] sm:$0xff]
  %v161 = vld [vmem:[%s1 + $0x380] sm:$0xff]
  %v162 = vld [vmem:[%s1 + $0x388] sm:$0xff]
  %v163 = vld [vmem:[%s1 + $0x390] sm:$0xff]
  %v164 = vld [vmem:[%s1 + $0x398] sm:$0xff]
  %v165 = vld [vmem:[%s1 + $0x3a0] sm:$0xff]
  %v166 = vld [vmem:[%s1 + $0x3a8] sm:$0xff]
  %v167 = vld [vmem:[%s1 + $0x3b0] sm:$0xff]
  %v168 = vld [vmem:[%s1 + $0x3b8] sm:$0xff]
  %v169 = vld [vmem:[%s1 + $0x3c0] sm:$0xff]
  %v170 = vld [vmem:[%s1 + $0x3c8] sm:$0xff]
  %v171 = vld [vmem:[%s1 + $0x3d0] sm:$0xff]
  %v172 = vld [vmem:[%s1 + $0x3d8] sm:$0xff]
  %v173 = vld [vmem:[%s1 + $0x3e0] sm:$0xff]
  %v174 = vld [vmem:[%s1 + $0x3e8] sm:$0xff]
  %v175 = vld [vmem:[%s1 + $0x3f0] sm:$0xff]
  %v176 = vld [vmem:[%s1 + $0x3f8] sm:$0xff]
  %v177 = vld [vmem:[%s1 + $0x400] sm:$0xff]
  %v178 = vld [vmem:[%s1 + $0x408] sm:$0xff]
  %v179 = vld [vmem:[%s1 + $0x410] sm:$0xff]
  %v180 = vld [vmem:[%s1 + $0x418] sm:$0xff]
  %v181 = vld [vmem:[%s1 + $0x420] sm:$0xff]
  %v182 = vld [vmem:[%s1 + $0x428] sm:$0xff]
  %v183 = vld [vmem:[%s1 + $0x430] sm:$0xff]
  %v184 = vld [vmem:[%s1 + $0x438] sm:$0xff]
  %v185 = vld [vmem:[%s1 + $0x440] sm:$0xff]
  %v186 = vld [vmem:[%s1 + $0x448] sm:$0xff]
  %v187 = vld [vmem:[%s1 + $0x450] sm:$0xff]
  %v188 = vld [vmem:[%s1 + $0x458] sm:$0xff]
  %v189 = vld [vmem:[%s1 + $0x460] sm:$0xff]
  %v190 = vld [vmem:[%s1 + $0x468] sm:$0xff]
  %v191 = vld [vmem:[%s1 + $0x470] sm:$0xff]
  %v192 = vld [vmem:[%s1 + $0x478] sm:$0xff]
  %v193 = vld [vmem:[%s1 + $0x480] sm:$0xff]
  %v194 = vld [vmem:[%s1 + $0x488] sm:$0xff]
  %v195 = vld [vmem:[%s1 + $0x490] sm:$0xff]
  %v196 = vld [vmem:[%s1 + $0x498] sm:$0xff]
  %v197 = vld [vmem:[%s1 + $0x4a0] sm:$0xff]
  %v198 = vld [vmem:[%s1 + $0x4a8] sm:$0xff]
  %v199 = vld [vmem:[%s1 + $0x4b0] sm:$0xff]
  %v200 = vld [vmem:[%s1 + $0x4b8] sm:$0xff]
  %v201 = vld [vmem:[%s1 + $0x4c0] sm:$0xff]
  %v202 = vld [vmem:[%s1 + $0x4c8] sm:$0xff]
  %v203 = vld [vmem:[%s1 + $0x4d0] sm:$0xff]
  %v204 = vld [vmem:[%s1 + $0x4d8] sm:$0xff]
  %v205 = vld [vmem:[%s1 + $0x4e0] sm:$0xff]
  %v206 = vld [vmem:[%s1 + $0x4e8] sm:$0xff]
  %v207 = vld [vmem:[%s1 + $0x4f0] sm:$0xff]
  %v208 = vld [vmem:[%s1 + $0x4f8] sm:$0xff]
  %v209 = vld [vmem:[%s1 + $0x500] sm:$0xff]
  %v210 = vld [vmem:[%s1 + $0x508] sm:$0xff]
  %v211 = vld [vmem:[%s1 + $0x510] sm:$0xff]
  %v212 = vld [vmem:[%s1 + $0x518] sm:$0xff]
  %v213 = vld [vmem:[%s1 + $0x520] sm:$0xff]
  %v214 = vld [vmem:[%s1 + $0x528] sm:$0xff]
  %v215 = vld [vmem:[%s1 + $0x530] sm:$0xff]
  %v216 = vld [vmem:[%s1 + $0x538] sm:$0xff]
  %v217 = vld [vmem:[%s1 + $0x540] sm:$0xff]
  %v218 = vld [vmem:[%s1 + $0x548] sm:$0xff]
  %v219 = vld [vmem:[%s1 + $0x550] sm:$0xff]
  %v220 = vld [vmem:[%s1 + $0x558] sm:$0xff]
  %v221 = vld [vmem:[%s1 + $0x560] sm:$0xff]
  %v222 = vld [vmem:[%s1 + $0x568] sm:$0xff]
  %v223 = vld [vmem:[%s1 + $0x570] sm:$0xff]
  %v224 = vld [vmem:[%s1 + $0x578] sm:$0xff]
  %v225 = vld [vmem:[%s1 + $0x580] sm:$0xff]
  %v226 = vld [vmem:[%s1 + $0x588] sm:$0xff]
  %v227 = vld [vmem:[%s1 + $0x590] sm:$0xff]
  %v228 = vld [vmem:[%s1 + $0x598] sm:$0xff]
  %v229 = vld [vmem:[%s1 + $0x5a0] sm:$0xff]
  %v230 = vld [vmem:[%s1 + $0x5a8] sm:$0xff]
  %v231 = vld [vmem:[%s1 + $0x5b0] sm:$0xff]
  %v232 = vld [vmem:[%s1 + $0x5b8] sm:$0xff]
  %v233 = vld [vmem:[%s1 + $0x5c0] sm:$0xff]
  %v234 = vld [vmem:[%s1 + $0x5c8] sm:$0xff]
  %v235 = vld [vmem:[%s1 + $0x5d0] sm:$0xff]
  %v236 = vld [vmem:[%s1 + $0x5d8] sm:$0xff]
  %v237 = vld [vmem:[%s1 + $0x5e0] sm:$0xff]
  %v238 = vld [vmem:[%s1 + $0x5e8] sm:$0xff]
  %v239 = vld [vmem:[%s1 + $0x5f0] sm:$0xff]
  %v240 = vld [vmem:[%s1 + $0x5f8] sm:$0xff]
  %v241 = vld [vmem:[%s1 + $0x600] sm:$0xff]
  %v242 = vld [vmem:[%s1 + $0x608] sm:$0xff]
  %v243 = vld [vmem:[%s1 + $0x610] sm:$0xff]
  %v244 = vld [vmem:[%s1 + $0x618] sm:$0xff]
  %v245 = vld [vmem:[%s1 + $0x620] sm:$0xff]
  %v246 = vld [vmem:[%s1 + $0x628] sm:$0xff]
  %v247 = vld [vmem:[%s1 + $0x630] sm:$0xff]
  %v248 = vld [vmem:[%s1 + $0x638] sm:$0xff]
  %v249 = vld [vmem:[%s1 + $0x640] sm:$0xff]
  %v250 = vld [vmem:[%s1 + $0x648] sm:$0xff]
  %v251 = vld [vmem:[%s1 + $0x650] sm:$0xff]
  %v252 = vld [vmem:[%s1 + $0x658] sm:$0xff]
  %v253 = vld [vmem:[%s1 + $0x660] sm:$0xff]
  %v254 = vld [vmem:[%s1 + $0x668] sm:$0xff]
  %v255 = vld [vmem:[%s1 + $0x670] sm:$0xff]
  %v256 = vld [vmem:[%s1 + $0x678] sm:$0xff]
  %v257 = vld [vmem:[%s1 + $0x680] sm:$0xff]
  %v258 = vld [vmem:[%s1 + $0x688] sm:$0xff]
  %v259 = vld [vmem:[%s1 + $0x690] sm:$0xff]
  %v260 = vld [vmem:[%s1 + $0x698] sm:$0xff]
  %v261 = vld [vmem:[%s1 + $0x6a0] sm:$0xff]
  %v262 = vld [vmem:[%s1 + $0x6a8] sm:$0xff]
  %v263 = vld [vmem:[%s1 + $0x6b0] sm:$0xff]
  %v264 = vld [vmem:[%s1 + $0x6b8] sm:$0xff]
  %v265 = vld [vmem:[%s1 + $0x6c0] sm:$0xff]
  %v266 = vld [vmem:[%s1 + $0x6c8] sm:$0xff]
  %v267 = vld [vmem:[%s1 + $0x6d0] sm:$0xff]
  %v268 = vld [vmem:[%s1 + $0x6d8] sm:$0xff]
  %v269 = vld [vmem:[%s1 + $0x6e0] sm:$0xff]
  %v270 = vld [vmem:[%s1 + $0x6e8] sm:$0xff]
  %v271 = vld [vmem:[%s1 + $0x6f0] sm:$0xff]
  %v272 = vld [vmem:[%s1 + $0x6f8] sm:$0xff]
  %v273 = vld [vmem:[%s1 + $0x700] sm:$0xff]
  %v274 = vld [vmem:[%s1 + $0x708] sm:$0xff]
  %v275 = vld [vmem:[%s1 + $0x710] sm:$0xff]
  %v276 = vld [vmem:[%s1 + $0x718] sm:$0xff]
  %v277 = vld [vmem:[%s1 + $0x720] sm:$0xff]
  %v278 = vld [vmem:[%s1 + $0x728] sm:$0xff]
  %v279 = vld [vmem:[%s1 + $0x730] sm:$0xff]
  %v280 = vld [vmem:[%s1 + $0x738] sm:$0xff]
  %v281 = vld [vmem:[%s1 + $0x740] sm:$0xff]
  %v282 = vld [vmem:[%s1 + $0x748] sm:$0xff]
  %v283 = vld [vmem:[%s1 + $0x750] sm:$0xff]
  %v284 = vld [vmem:[%s1 + $0x758] sm:$0xff]
  %v285 = vld [vmem:[%s1 + $0x760] sm:$0xff]
  %v286 = vld [vmem:[%s1 + $0x768] sm:$0xff]
  %v287 = vld [vmem:[%s1 + $0x770] sm:$0xff]
  %v288 = vld [vmem:[%s1 + $0x778] sm:$0xff]
  %v289 = vld [vmem:[%s1 + $0x780] sm:$0xff]
  %v290 = vld [vmem:[%s1 + $0x788] sm:$0xff]
  %v291 = vld [vmem:[%s1 + $0x790] sm:$0xff]
  %v292 = vld [vmem:[%s1 + $0x798] sm:$0xff]
  %v293 = vld [vmem:[%s1 + $0x7a0] sm:$0xff]
  %v294 = vld [vmem:[%s1 + $0x7a8] sm:$0xff]
  %v295 = vld [vmem:[%s1 + $0x7b0] sm:$0xff]
  %v296 = vld [vmem:[%s1 + $0x7b8] sm:$0xff]
  %v297 = vld [vmem:[%s1 + $0x7c0] sm:$0xff]
  %v298 = vld [vmem:[%s1 + $0x7c8] sm:$0xff]
  %v299 = vld [vmem:[%s1 + $0x7d0] sm:$0xff]
  %v300 = vld [vmem:[%s1 + $0x7d8] sm:$0xff]
  %v301 = vld [vmem:[%s1 + $0x7e0] sm:$0xff]
  %v302 = vld [vmem:[%s1 + $0x7e8] sm:$0xff]
  %v303 = vld [vmem:[%s1 + $0x7f0] sm:$0xff]
  %v304 = vld [vmem:[%s1 + $0x7f8] sm:$0xff]
  %v305 = vld [vmem:[%s1 + $0x800] sm:$0xff]
  %v306 = vld [vmem:[%s1 + $0x808] sm:$0xff]
  %v307 = vld [vmem:[%s1 + $0x810] sm:$0xff]
  %v308 = vld [vmem:[%s1 + $0x818] sm:$0xff]
  %v309 = vld [vmem:[%s1 + $0x820] sm:$0xff]
  %v310 = vld [vmem:[%s1 + $0x828] sm:$0xff]
  %v311 = vld [vmem:[%s1 + $0x830] sm:$0xff]
  %v312 = vld [vmem:[%s1 + $0x838] sm:$0xff]
  %v313 = vld [vmem:[%s1 + $0x840] sm:$0xff]
  %v314 = vld [vmem:[%s1 + $0x848] sm:$0xff]
  %v315 = vld [vmem:[%s1 + $0x850] sm:$0xff]
  %v316 = vld [vmem:[%s1 + $0x858] sm:$0xff]
  %v317 = vld [vmem:[%s1 + $0x860] sm:$0xff]
  %v318 = vld [vmem:[%s1 + $0x868] sm:$0xff]
  %v319 = vld [vmem:[%s1 + $0x870] sm:$0xff]
  %v320 = vld [vmem:[%s1 + $0x878] sm:$0xff]
  %v321 = vld [vmem:[%s1 + $0x880] sm:$0xff]
  %v322 = vld [vmem:[%s1 + $0x888] sm:$0xff]
  %v323 = vld [vmem:[%s1 + $0x890] sm:$0xff]
  %v324 = vld [vmem:[%s1 + $0x898] sm:$0xff]
  %v325 = vld [vmem:[%s1 + $0x8a0] sm:$0xff]
  %v326 = vld [vmem:[%s1 + $0x8a8] sm:$0xff]
  %v327 = vld [vmem:[%s1 + $0x8b0] sm:$0xff]
  %v328 = vld [vmem:[%s1 + $0x8b8] sm:$0xff]
  %v329 = vld [vmem:[%s1 + $0x8c0] sm:$0xff]
  %v330 = vld [vmem:[%s1 + $0x8c8] sm:$0xff]
  %v331 = vld [vmem:[%s1 + $0x8d0] sm:$0xff]
  %v332 = vld [vmem:[%s1 + $0x8d8] sm:$0xff]
  %v333 = vld [vmem:[%s1 + $0x8e0] sm:$0xff]
  %v334 = vld [vmem:[%s1 + $0x8e8] sm:$0xff]
  %v335 = vld [vmem:[%s1 + $0x8f0] sm:$0xff]
  %v336 = vld [vmem:[%s1 + $0x8f8] sm:$0xff]
  %v337 = vld [vmem:[%s1 + $0x900] sm:$0xff]
  %v338 = vld [vmem:[%s1 + $0x908] sm:$0xff]
  %v339 = vld [vmem:[%s1 + $0x910] sm:$0xff]
  %v340 = vld [vmem:[%s1 + $0x918] sm:$0xff]
  %v341 = vld [vmem:[%s1 + $0x920] sm:$0xff]
  %v342 = vld [vmem:[%s1 + $0x928] sm:$0xff]
  %v343 = vld [vmem:[%s1 + $0x930] sm:$0xff]
  %v344 = vld [vmem:[%s1 + $0x938] sm:$0xff]
  %v345 = vld [vmem:[%s1 + $0x940] sm:$0xff]
  %v346 = vld [vmem:[%s1 + $0x948] sm:$0xff]
  %v347 = vld [vmem:[%s1 + $0x950] sm:$0xff]
  %v348 = vld [vmem:[%s1 + $0x958] sm:$0xff]
  %v349 = vld [vmem:[%s1 + $0x960] sm:$0xff]
  %v350 = vld [vmem:[%s1 + $0x968] sm:$0xff]
  %v351 = vld [vmem:[%s1 + $0x970] sm:$0xff]
  %v352 = vld [vmem:[%s1 + $0x978] sm:$0xff]
  %v353 = vld [vmem:[%s1 + $0x980] sm:$0xff]
  %v354 = vld [vmem:[%s1 + $0x988] sm:$0xff]
  %v355 = vld [vmem:[%s1 + $0x990] sm:$0xff]
  %v356 = vld [vmem:[%s1 + $0x998] sm:$0xff]
  %v357 = vld [vmem:[%s1 + $0x9a0] sm:$0xff]
  %v358 = vld [vmem:[%s1 + $0x9a8] sm:$0xff]
  %v359 = vld [vmem:[%s1 + $0x9b0] sm:$0xff]
  %v360 = vld [vmem:[%s1 + $0x9b8] sm:$0xff]
  %v361 = vld [vmem:[%s1 + $0x9c0] sm:$0xff]
  %v362 = vld [vmem:[%s1 + $0x9c8] sm:$0xff]
  %v363 = vld [vmem:[%s1 + $0x9d0] sm:$0xff]
  %v364 = vld [vmem:[%s1 + $0x9d8] sm:$0xff]
  %v365 = vld [vmem:[%s1 + $0x9e0] sm:$0xff]
  %v366 = vld [vmem:[%s1 + $0x9e8] sm:$0xff]
  %v367 = vld [vmem:[%s1 + $0x9f0] sm:$0xff]
  %v368 = vld [vmem:[%s1 + $0x9f8] sm:$0xff]
  %v369 = vld [vmem:[%s1 + $0xa00] sm:$0xff]
  %v370 = vld [vmem:[%s1 + $0xa08] sm:$0xff]
  %v371 = vld [vmem:[%s1 + $0xa10] sm:$0xff]
  %v372 = vld [vmem:[%s1 + $0xa18] sm:$0xff]
  %v373 = vld [vmem:[%s1 + $0xa20] sm:$0xff]
  %v374 = vld [vmem:[%s1 + $0xa28] sm:$0xff]
  %v375 = vld [vmem:[%s1 + $0xa30] sm:$0xff]
  %v376 = vld [vmem:[%s1 + $0xa38] sm:$0xff]
  %v377 = vld [vmem:[%s1 + $0xa40] sm:$0xff]
  %v378 = vld [vmem:[%s1 + $0xa48] sm:$0xff]
  %v379 = vld [vmem:[%s1 + $0xa50] sm:$0xff]
  %v380 = vld [vmem:[%s1 + $0xa58] sm:$0xff]
  %v381 = vld [vmem:[%s1 + $0xa60] sm:$0xff]
  %v382 = vld [vmem:[%s1 + $0xa68] sm:$0xff]
  %v383 = vld [vmem:[%s1 + $0xa70] sm:$0xff]
  %v384 = vld [vmem:[%s1 + $0xa78] sm:$0xff]
  %v385 = vld [vmem:[%s1 + $0xa80] sm:$0xff]
  %v386 = vld [vmem:[%s1 + $0xa88] sm:$0xff]
  %v387 = vld [vmem:[%s1 + $0xa90] sm:$0xff]
  %v388 = vld [vmem:[%s1 + $0xa98] sm:$0xff]
  %v389 = vld [vmem:[%s1 + $0xaa0] sm:$0xff]
  %v390 = vld [vmem:[%s1 + $0xaa8] sm:$0xff]
  %v391 = vld [vmem:[%s1 + $0xab0] sm:$0xff]
  %v392 = vld [vmem:[%s1 + $0xab8] sm:$0xff]
  %v393 = vld [vmem:[%s1 + $0xac0] sm:$0xff]
  %v394 = vld [vmem:[%s1 + $0xac8] sm:$0xff]
  %v395 = vld [vmem:[%s1 + $0xad0] sm:$0xff]
  %v396 = vld [vmem:[%s1 + $0xad8] sm:$0xff]
  %v397 = vld [vmem:[%s1 + $0xae0] sm:$0xff]
  %v398 = vld [vmem:[%s1 + $0xae8] sm:$0xff]
  %v399 = vld [vmem:[%s1 + $0xaf0] sm:$0xff]
  %v400 = vld [vmem:[%s1 + $0xaf8] sm:$0xff]
  %v401 = vld [vmem:[%s1 + $0xb00] sm:$0xff]
  %v402 = vld [vmem:[%s1 + $0xb08] sm:$0xff]
  %v403 = vld [vmem:[%s1 + $0xb10] sm:$0xff]
  %v404 = vld [vmem:[%s1 + $0xb18] sm:$0xff]
  %v405 = vld [vmem:[%s1 + $0xb20] sm:$0xff]
  %v406 = vld [vmem:[%s1 + $0xb28] sm:$0xff]
  %v407 = vld [vmem:[%s1 + $0xb30] sm:$0xff]
  %v408 = vld [vmem:[%s1 + $0xb38] sm:$0xff]
  %v409 = vld [vmem:[%s1 + $0xb40] sm:$0xff]
  %v410 = vld [vmem:[%s1 + $0xb48] sm:$0xff]
  %v411 = vld [vmem:[%s1 + $0xb50] sm:$0xff]
  %v412 = vld [vmem:[%s1 + $0xb58] sm:$0xff]
  %v413 = vld [vmem:[%s1 + $0xb60] sm:$0xff]
  %v414 = vld [vmem:[%s1 + $0xb68] sm:$0xff]
  %v415 = vld [vmem:[%s1 + $0xb70] sm:$0xff]
  %v416 = vld [vmem:[%s1 + $0xb78] sm:$0xff]
  %v417 = vld [vmem:[%s1 + $0xb80] sm:$0xff]
  %v418 = vld [vmem:[%s1 + $0xb88] sm:$0xff]
  %v419 = vld [vmem:[%s1 + $0xb90] sm:$0xff]
  %v420 = vld [vmem:[%s1 + $0xb98] sm:$0xff]
  %v421 = vld [vmem:[%s1 + $0xba0] sm:$0xff]
  %v422 = vld [vmem:[%s1 + $0xba8] sm:$0xff]
  %v423 = vld [vmem:[%s1 + $0xbb0] sm:$0xff]
  %v424 = vld [vmem:[%s1 + $0xbb8] sm:$0xff]
  %v425 = vld [vmem:[%s1 + $0xbc0] sm:$0xff]
  %v426 = vld [vmem:[%s1 + $0xbc8] sm:$0xff]
  %v427 = vld [vmem:[%s1 + $0xbd0] sm:$0xff]
  %v428 = vld [vmem:[%s1 + $0xbd8] sm:$0xff]
  %v429 = vld [vmem:[%s1 + $0xbe0] sm:$0xff]
  %v430 = vld [vmem:[%s1 + $0xbe8] sm:$0xff]
  %v431 = vld [vmem:[%s1 + $0xbf0] sm:$0xff]
  %v432 = vld [vmem:[%s1 + $0xbf8] sm:$0xff]
  %v433 = vld [vmem:[%s1 + $0xc00] sm:$0xff]
  %v434 = vld [vmem:[%s1 + $0xc08] sm:$0xff]
  %v435 = vld [vmem:[%s1 + $0xc10] sm:$0xff]
  %v436 = vld [vmem:[%s1 + $0xc18] sm:$0xff]
  %v437 = vld [vmem:[%s1 + $0xc20] sm:$0xff]
  %v438 = vld [vmem:[%s1 + $0xc28] sm:$0xff]
  %v439 = vld [vmem:[%s1 + $0xc30] sm:$0xff]
  %v440 = vld [vmem:[%s1 + $0xc38] sm:$0xff]
  %v441 = vld [vmem:[%s2] sm:$0xf]
  %v443 = vperm.slane %v441, 0
  %v444 = vperm.slane %v441, 1
  %v445 = vperm.slane %v441, 2
  %v446 = vperm.slane %v441, 3
  %v479 = vunpack.c.l.b16 %v21
  %v480 = vunpack.c.h.b16 %v21
  %v481 = vunpack.c.l.b16 %v22
  %v482 = vunpack.c.h.b16 %v22
  %v483 = vunpack.c.l.b16 %v23
  %v484 = vunpack.c.h.b16 %v23
  %v485 = vunpack.c.l.b16 %v24
  %v486 = vunpack.c.h.b16 %v24
  %v487 = vunpack.c.l.b16 %v25
  %v488 = vunpack.c.h.b16 %v25
  %v489 = vunpack.c.l.b16 %v26
  %v490 = vunpack.c.h.b16 %v26
  %v491 = vunpack.c.l.b16 %v27
  %v492 = vunpack.c.l.b16 %v28
  %v493 = vunpack.c.h.b16 %v28
  %v494 = vunpack.c.l.b16 %v29
  %v495 = vunpack.c.h.b16 %v29
  %v496 = vunpack.c.l.b16 %v30
  %v497 = vunpack.c.h.b16 %v30
  %v498 = vunpack.c.l.b16 %v31
  %v499 = vunpack.c.h.b16 %v31
  %v500 = vunpack.c.l.b16 %v32
  %v501 = vunpack.c.h.b16 %v32
  %v502 = vunpack.c.l.b16 %v33
  %v503 = vunpack.c.h.b16 %v33
  %v504 = vunpack.c.l.b16 %v34
  %v505 = vunpack.c.l.b16 %v35
  %v506 = vunpack.c.h.b16 %v35
  %v507 = vunpack.c.l.b16 %v36
  %v508 = vunpack.c.h.b16 %v36
  %v509 = vunpack.c.l.b16 %v37
  %v510 = vunpack.c.h.b16 %v37
  %v511 = vunpack.c.l.b16 %v38
  %v512 = vunpack.c.h.b16 %v38
  %v513 = vunpack.c.l.b16 %v39
  %v514 = vunpack.c.h.b16 %v39
  %v515 = vunpack.c.l.b16 %v40
  %v516 = vunpack.c.h.b16 %v40
  %v517 = vunpack.c.l.b16 %v41
  %v518 = vunpack.c.l.b16 %v42
  %v519 = vunpack.c.h.b16 %v42
  %v520 = vunpack.c.l.b16 %v43
  %v521 = vunpack.c.h.b16 %v43
  %v522 = vunpack.c.l.b16 %v44
  %v523 = vunpack.c.h.b16 %v44
  %v524 = vunpack.c.l.b16 %v45
  %v525 = vunpack.c.h.b16 %v45
  %v526 = vunpack.c.l.b16 %v46
  %v527 = vunpack.c.h.b16 %v46
  %v528 = vunpack.c.l.b16 %v47
  %v529 = vunpack.c.h.b16 %v47
  %v530 = vunpack.c.l.b16 %v48
  %v531 = vpack.c.b16 %v492, %v479
  %v532 = vpack.c.b16 %v493, %v480
  %v533 = vpack.c.b16 %v494, %v481
  %v534 = vpack.c.b16 %v495, %v482
  %v535 = vpack.c.b16 %v496, %v483
  %v536 = vpack.c.b16 %v497, %v484
  %v537 = vpack.c.b16 %v498, %v485
  %v538 = vpack.c.b16 %v499, %v486
  %v539 = vpack.c.b16 %v500, %v487
  %v540 = vpack.c.b16 %v501, %v488
  %v541 = vpack.c.b16 %v502, %v489
  %v542 = vpack.c.b16 %v503, %v490
  %v543 = vpack.c.b16 %v504, %v491
  %v544 = vpack.c.b16 %v518, %v505
  %v545 = vpack.c.b16 %v519, %v506
  %v546 = vpack.c.b16 %v520, %v507
  %v547 = vpack.c.b16 %v521, %v508
  %v548 = vpack.c.b16 %v522, %v509
  %v549 = vpack.c.b16 %v523, %v510
  %v550 = vpack.c.b16 %v524, %v511
  %v551 = vpack.c.b16 %v525, %v512
  %v552 = vpack.c.b16 %v526, %v513
  %v553 = vpack.c.b16 %v527, %v514
  %v554 = vpack.c.b16 %v528, %v515
  %v555 = vpack.c.b16 %v529, %v516
  %v556 = vpack.c.b16 %v530, %v517
  %v973 = vunpack.c.l.b16 %v49
  %v974 = vunpack.c.h.b16 %v49
  %v975 = vunpack.c.l.b16 %v50
  %v976 = vunpack.c.h.b16 %v50
  %v977 = vunpack.c.l.b16 %v51
  %v978 = vunpack.c.h.b16 %v51
  %v979 = vunpack.c.l.b16 %v52
  %v980 = vunpack.c.h.b16 %v52
  %v981 = vunpack.c.l.b16 %v53
  %v982 = vunpack.c.h.b16 %v53
  %v983 = vunpack.c.l.b16 %v54
  %v984 = vunpack.c.h.b16 %v54
  %v985 = vunpack.c.l.b16 %v55
  %v986 = vunpack.c.h.b16 %v55
  %v987 = vunpack.c.l.b16 %v56
  %v988 = vunpack.c.h.b16 %v56
  %v989 = vunpack.c.l.b16 %v57
  %v990 = vunpack.c.h.b16 %v57
  %v991 = vunpack.c.l.b16 %v58
  %v992 = vunpack.c.h.b16 %v58
  %v993 = vunpack.c.l.b16 %v59
  %v994 = vunpack.c.h.b16 %v59
  %v995 = vunpack.c.l.b16 %v60
  %v996 = vunpack.c.h.b16 %v60
  %v997 = vunpack.c.l.b16 %v61
  %v998 = vunpack.c.h.b16 %v61
  %v999 = vunpack.c.l.b16 %v62
  %v1000 = vunpack.c.h.b16 %v62
  %v1001 = vunpack.c.l.b16 %v63
  %v1002 = vunpack.c.h.b16 %v63
  %v1003 = vunpack.c.l.b16 %v64
  %v1004 = vunpack.c.h.b16 %v64
  %v1005 = vunpack.c.l.b16 %v65
  %v1006 = vunpack.c.h.b16 %v65
  %v1007 = vunpack.c.l.b16 %v66
  %v1008 = vunpack.c.h.b16 %v66
  %v1009 = vunpack.c.l.b16 %v67
  %v1010 = vunpack.c.h.b16 %v67
  %v1011 = vunpack.c.l.b16 %v68
  %v1012 = vunpack.c.h.b16 %v68
  %v1013 = vunpack.c.l.b16 %v69
  %v1014 = vunpack.c.h.b16 %v69
  %v1015 = vunpack.c.l.b16 %v70
  %v1016 = vunpack.c.h.b16 %v70
  %v1017 = vunpack.c.l.b16 %v71
  %v1018 = vunpack.c.h.b16 %v71
  %v1019 = vunpack.c.l.b16 %v72
  %v1020 = vunpack.c.h.b16 %v72
  %v1021 = vunpack.c.l.b16 %v73
  %v1022 = vunpack.c.h.b16 %v73
  %v1023 = vunpack.c.l.b16 %v74
  %v1024 = vunpack.c.h.b16 %v74
  %v1025 = vunpack.c.l.b16 %v75
  %v1026 = vunpack.c.h.b16 %v75
  %v1027 = vunpack.c.l.b16 %v76
  %v1028 = vunpack.c.h.b16 %v76
  %v1029 = vunpack.c.l.b16 %v77
  %v1030 = vunpack.c.h.b16 %v77
  %v1031 = vunpack.c.l.b16 %v78
  %v1032 = vunpack.c.h.b16 %v78
  %v1033 = vunpack.c.l.b16 %v79
  %v1034 = vunpack.c.h.b16 %v79
  %v1035 = vunpack.c.l.b16 %v80
  %v1036 = vunpack.c.h.b16 %v80
  %v1037 = vunpack.c.l.b16 %v81
  %v1038 = vunpack.c.h.b16 %v81
  %v1039 = vunpack.c.l.b16 %v82
  %v1040 = vunpack.c.h.b16 %v82
  %v1041 = vunpack.c.l.b16 %v83
  %v1042 = vunpack.c.h.b16 %v83
  %v1043 = vunpack.c.l.b16 %v84
  %v1044 = vunpack.c.h.b16 %v84
  %v1045 = vunpack.c.l.b16 %v85
  %v1046 = vunpack.c.h.b16 %v85
  %v1047 = vunpack.c.l.b16 %v86
  %v1048 = vunpack.c.h.b16 %v86
  %v1049 = vunpack.c.l.b16 %v87
  %v1050 = vunpack.c.h.b16 %v87
  %v1051 = vunpack.c.l.b16 %v88
  %v1052 = vunpack.c.h.b16 %v88
  %v1053 = vunpack.c.l.b16 %v89
  %v1054 = vunpack.c.h.b16 %v89
  %v1055 = vunpack.c.l.b16 %v90
  %v1056 = vunpack.c.h.b16 %v90
  %v1057 = vunpack.c.l.b16 %v91
  %v1058 = vunpack.c.h.b16 %v91
  %v1059 = vunpack.c.l.b16 %v92
  %v1060 = vunpack.c.h.b16 %v92
  %v1061 = vunpack.c.l.b16 %v93
  %v1062 = vunpack.c.h.b16 %v93
  %v1063 = vunpack.c.l.b16 %v94
  %v1064 = vunpack.c.h.b16 %v94
  %v1065 = vunpack.c.l.b16 %v95
  %v1066 = vunpack.c.h.b16 %v95
  %v1067 = vunpack.c.l.b16 %v96
  %v1068 = vunpack.c.h.b16 %v96
  %v1069 = vunpack.c.l.b16 %v97
  %v1070 = vunpack.c.h.b16 %v97
  %v1071 = vunpack.c.l.b16 %v98
  %v1072 = vunpack.c.h.b16 %v98
  %v1073 = vunpack.c.l.b16 %v99
  %v1074 = vunpack.c.h.b16 %v99
  %v1075 = vunpack.c.l.b16 %v100
  %v1076 = vunpack.c.h.b16 %v100
  %v1077 = vunpack.c.l.b16 %v101
  %v1078 = vunpack.c.h.b16 %v101
  %v1079 = vunpack.c.l.b16 %v102
  %v1080 = vunpack.c.h.b16 %v102
  %v1081 = vunpack.c.l.b16 %v103
  %v1082 = vunpack.c.h.b16 %v103
  %v1083 = vunpack.c.l.b16 %v104
  %v1084 = vunpack.c.h.b16 %v104
  %v1085 = vunpack.c.l.b16 %v105
  %v1086 = vunpack.c.h.b16 %v105
  %v1087 = vunpack.c.l.b16 %v106
  %v1088 = vunpack.c.h.b16 %v106
  %v1089 = vunpack.c.l.b16 %v107
  %v1090 = vunpack.c.h.b16 %v107
  %v1091 = vunpack.c.l.b16 %v108
  %v1092 = vunpack.c.h.b16 %v108
  %v1093 = vunpack.c.l.b16 %v109
  %v1094 = vunpack.c.h.b16 %v109
  %v1095 = vunpack.c.l.b16 %v110
  %v1096 = vunpack.c.h.b16 %v110
  %v1097 = vunpack.c.l.b16 %v111
  %v1098 = vunpack.c.h.b16 %v111
  %v1099 = vunpack.c.l.b16 %v112
  %v1100 = vunpack.c.h.b16 %v112
  %v1101 = vunpack.c.l.b16 %v113
  %v1102 = vunpack.c.h.b16 %v113
  %v1103 = vunpack.c.l.b16 %v114
  %v1104 = vunpack.c.h.b16 %v114
  %v1105 = vunpack.c.l.b16 %v115
  %v1106 = vunpack.c.h.b16 %v115
  %v1107 = vunpack.c.l.b16 %v116
  %v1108 = vunpack.c.h.b16 %v116
  %v1109 = vunpack.c.l.b16 %v117
  %v1110 = vunpack.c.h.b16 %v117
  %v1111 = vunpack.c.l.b16 %v118
  %v1112 = vunpack.c.h.b16 %v118
  %v1113 = vunpack.c.l.b16 %v119
  %v1114 = vunpack.c.h.b16 %v119
  %v1115 = vunpack.c.l.b16 %v120
  %v1116 = vunpack.c.h.b16 %v120
  %v1117 = vunpack.c.l.b16 %v121
  %v1118 = vunpack.c.h.b16 %v121
  %v1119 = vunpack.c.l.b16 %v122
  %v1120 = vunpack.c.h.b16 %v122
  %v1121 = vunpack.c.l.b16 %v123
  %v1122 = vunpack.c.h.b16 %v123
  %v1123 = vunpack.c.l.b16 %v124
  %v1124 = vunpack.c.h.b16 %v124
  %v1125 = vunpack.c.l.b16 %v125
  %v1126 = vunpack.c.h.b16 %v125
  %v1127 = vunpack.c.l.b16 %v126
  %v1128 = vunpack.c.h.b16 %v126
  %v1129 = vunpack.c.l.b16 %v127
  %v1130 = vunpack.c.h.b16 %v127
  %v1131 = vunpack.c.l.b16 %v128
  %v1132 = vunpack.c.h.b16 %v128
  %v1133 = vunpack.c.l.b16 %v129
  %v1134 = vunpack.c.h.b16 %v129
  %v1135 = vunpack.c.l.b16 %v130
  %v1136 = vunpack.c.h.b16 %v130
  %v1137 = vunpack.c.l.b16 %v131
  %v1138 = vunpack.c.h.b16 %v131
  %v1139 = vunpack.c.l.b16 %v132
  %v1140 = vunpack.c.h.b16 %v132
  %v1141 = vunpack.c.l.b16 %v133
  %v1142 = vunpack.c.h.b16 %v133
  %v1143 = vunpack.c.l.b16 %v134
  %v1144 = vunpack.c.h.b16 %v134
  %v1145 = vunpack.c.l.b16 %v135
  %v1146 = vunpack.c.h.b16 %v135
  %v1147 = vunpack.c.l.b16 %v136
  %v1148 = vunpack.c.h.b16 %v136
  %v1149 = vunpack.c.l.b16 %v137
  %v1150 = vunpack.c.h.b16 %v137
  %v1151 = vunpack.c.l.b16 %v138
  %v1152 = vunpack.c.h.b16 %v138
  %v1153 = vunpack.c.l.b16 %v139
  %v1154 = vunpack.c.h.b16 %v139
  %v1155 = vunpack.c.l.b16 %v140
  %v1156 = vunpack.c.h.b16 %v140
  %v1157 = vunpack.c.l.b16 %v141
  %v1158 = vunpack.c.h.b16 %v141
  %v1159 = vunpack.c.l.b16 %v142
  %v1160 = vunpack.c.h.b16 %v142
  %v1161 = vunpack.c.l.b16 %v143
  %v1162 = vunpack.c.h.b16 %v143
  %v1163 = vunpack.c.l.b16 %v144
  %v1164 = vunpack.c.h.b16 %v144
  %v1165 = vunpack.c.l.b16 %v145
  %v1166 = vunpack.c.h.b16 %v145
  %v1167 = vunpack.c.l.b16 %v146
  %v1168 = vunpack.c.h.b16 %v146
  %v1169 = vunpack.c.l.b16 %v147
  %v1170 = vunpack.c.h.b16 %v147
  %v1171 = vunpack.c.l.b16 %v148
  %v1172 = vunpack.c.h.b16 %v148
  %v1173 = vunpack.c.l.b16 %v149
  %v1174 = vunpack.c.h.b16 %v149
  %v1175 = vunpack.c.l.b16 %v150
  %v1176 = vunpack.c.h.b16 %v150
  %v1177 = vunpack.c.l.b16 %v151
  %v1178 = vunpack.c.h.b16 %v151
  %v1179 = vunpack.c.l.b16 %v152
  %v1180 = vunpack.c.h.b16 %v152
  %v1181 = vunpack.c.l.b16 %v153
  %v1182 = vunpack.c.h.b16 %v153
  %v1183 = vunpack.c.l.b16 %v154
  %v1184 = vunpack.c.h.b16 %v154
  %v1185 = vunpack.c.l.b16 %v155
  %v1186 = vunpack.c.h.b16 %v155
  %v1187 = vunpack.c.l.b16 %v156
  %v1188 = vunpack.c.h.b16 %v156
  %v1189 = vunpack.c.l.b16 %v157
  %v1190 = vunpack.c.h.b16 %v157
  %v1191 = vunpack.c.l.b16 %v158
  %v1192 = vunpack.c.h.b16 %v158
  %v1193 = vunpack.c.l.b16 %v159
  %v1194 = vunpack.c.h.b16 %v159
  %v1195 = vunpack.c.l.b16 %v160
  %v1196 = vunpack.c.h.b16 %v160
  %v1197 = vunpack.c.l.b16 %v161
  %v1198 = vunpack.c.h.b16 %v161
  %v1199 = vunpack.c.l.b16 %v162
  %v1200 = vunpack.c.h.b16 %v162
  %v1201 = vunpack.c.l.b16 %v163
  %v1202 = vunpack.c.h.b16 %v163
  %v1203 = vunpack.c.l.b16 %v164
  %v1204 = vunpack.c.h.b16 %v164
  %v1205 = vunpack.c.l.b16 %v165
  %v1206 = vunpack.c.h.b16 %v165
  %v1207 = vunpack.c.l.b16 %v166
  %v1208 = vunpack.c.h.b16 %v166
  %v1209 = vunpack.c.l.b16 %v167
  %v1210 = vunpack.c.h.b16 %v167
  %v1211 = vunpack.c.l.b16 %v168
  %v1212 = vunpack.c.h.b16 %v168
  %v1213 = vunpack.c.l.b16 %v169
  %v1214 = vunpack.c.h.b16 %v169
  %v1215 = vunpack.c.l.b16 %v170
  %v1216 = vunpack.c.h.b16 %v170
  %v1217 = vunpack.c.l.b16 %v171
  %v1218 = vunpack.c.h.b16 %v171
  %v1219 = vunpack.c.l.b16 %v172
  %v1220 = vunpack.c.h.b16 %v172
  %v1221 = vunpack.c.l.b16 %v173
  %v1222 = vunpack.c.h.b16 %v173
  %v1223 = vunpack.c.l.b16 %v174
  %v1224 = vunpack.c.h.b16 %v174
  %v1225 = vunpack.c.l.b16 %v175
  %v1226 = vunpack.c.h.b16 %v175
  %v1227 = vunpack.c.l.b16 %v176
  %v1228 = vunpack.c.h.b16 %v176
  %v1229 = vunpack.c.l.b16 %v177
  %v1230 = vunpack.c.h.b16 %v177
  %v1231 = vunpack.c.l.b16 %v178
  %v1232 = vunpack.c.h.b16 %v178
  %v1233 = vunpack.c.l.b16 %v179
  %v1234 = vunpack.c.h.b16 %v179
  %v1235 = vunpack.c.l.b16 %v180
  %v1236 = vunpack.c.h.b16 %v180
  %v1237 = vunpack.c.l.b16 %v181
  %v1238 = vunpack.c.h.b16 %v181
  %v1239 = vunpack.c.l.b16 %v182
  %v1240 = vunpack.c.h.b16 %v182
  %v1241 = vunpack.c.l.b16 %v183
  %v1242 = vunpack.c.h.b16 %v183
  %v1243 = vunpack.c.l.b16 %v184
  %v1244 = vunpack.c.h.b16 %v184
  %v1245 = vunpack.c.l.b16 %v185
  %v1246 = vunpack.c.h.b16 %v185
  %v1247 = vunpack.c.l.b16 %v186
  %v1248 = vunpack.c.h.b16 %v186
  %v1249 = vunpack.c.l.b16 %v187
  %v1250 = vunpack.c.h.b16 %v187
  %v1251 = vunpack.c.l.b16 %v188
  %v1252 = vunpack.c.h.b16 %v188
  %v1253 = vunpack.c.l.b16 %v189
  %v1254 = vunpack.c.h.b16 %v189
  %v1255 = vunpack.c.l.b16 %v190
  %v1256 = vunpack.c.h.b16 %v190
  %v1257 = vunpack.c.l.b16 %v191
  %v1258 = vunpack.c.h.b16 %v191
  %v1259 = vunpack.c.l.b16 %v192
  %v1260 = vunpack.c.h.b16 %v192
  %v1261 = vunpack.c.l.b16 %v193
  %v1262 = vunpack.c.h.b16 %v193
  %v1263 = vunpack.c.l.b16 %v194
  %v1264 = vunpack.c.h.b16 %v194
  %v1265 = vunpack.c.l.b16 %v195
  %v1266 = vunpack.c.h.b16 %v195
  %v1267 = vunpack.c.l.b16 %v196
  %v1268 = vunpack.c.h.b16 %v196
  %v1269 = vunpack.c.l.b16 %v197
  %v1270 = vunpack.c.h.b16 %v197
  %v1271 = vunpack.c.l.b16 %v198
  %v1272 = vunpack.c.h.b16 %v198
  %v1273 = vunpack.c.l.b16 %v199
  %v1274 = vunpack.c.h.b16 %v199
  %v1275 = vunpack.c.l.b16 %v200
  %v1276 = vunpack.c.h.b16 %v200
  %v1277 = vunpack.c.l.b16 %v201
  %v1278 = vunpack.c.h.b16 %v201
  %v1279 = vunpack.c.l.b16 %v202
  %v1280 = vunpack.c.h.b16 %v202
  %v1281 = vunpack.c.l.b16 %v203
  %v1282 = vunpack.c.h.b16 %v203
  %v1283 = vunpack.c.l.b16 %v204
  %v1284 = vunpack.c.h.b16 %v204
  %v1285 = vunpack.c.l.b16 %v205
  %v1286 = vunpack.c.h.b16 %v205
  %v1287 = vunpack.c.l.b16 %v206
  %v1288 = vunpack.c.h.b16 %v206
  %v1289 = vunpack.c.l.b16 %v207
  %v1290 = vunpack.c.h.b16 %v207
  %v1291 = vunpack.c.l.b16 %v208
  %v1292 = vunpack.c.h.b16 %v208
  %v1293 = vunpack.c.l.b16 %v209
  %v1294 = vunpack.c.h.b16 %v209
  %v1295 = vunpack.c.l.b16 %v210
  %v1296 = vunpack.c.h.b16 %v210
  %v1297 = vunpack.c.l.b16 %v211
  %v1298 = vunpack.c.h.b16 %v211
  %v1299 = vunpack.c.l.b16 %v212
  %v1300 = vunpack.c.h.b16 %v212
  %v1301 = vunpack.c.l.b16 %v213
  %v1302 = vunpack.c.h.b16 %v213
  %v1303 = vunpack.c.l.b16 %v214
  %v1304 = vunpack.c.h.b16 %v214
  %v1305 = vunpack.c.l.b16 %v215
  %v1306 = vunpack.c.h.b16 %v215
  %v1307 = vunpack.c.l.b16 %v216
  %v1308 = vunpack.c.h.b16 %v216
  %v1309 = vunpack.c.l.b16 %v217
  %v1310 = vunpack.c.h.b16 %v217
  %v1311 = vunpack.c.l.b16 %v218
  %v1312 = vunpack.c.h.b16 %v218
  %v1313 = vunpack.c.l.b16 %v219
  %v1314 = vunpack.c.h.b16 %v219
  %v1315 = vunpack.c.l.b16 %v220
  %v1316 = vunpack.c.h.b16 %v220
  %v1317 = vunpack.c.l.b16 %v221
  %v1318 = vunpack.c.h.b16 %v221
  %v1319 = vunpack.c.l.b16 %v222
  %v1320 = vunpack.c.h.b16 %v222
  %v1321 = vunpack.c.l.b16 %v223
  %v1322 = vunpack.c.h.b16 %v223
  %v1323 = vunpack.c.l.b16 %v224
  %v1324 = vunpack.c.h.b16 %v224
  %v1325 = vunpack.c.l.b16 %v225
  %v1326 = vunpack.c.h.b16 %v225
  %v1327 = vunpack.c.l.b16 %v226
  %v1328 = vunpack.c.h.b16 %v226
  %v1329 = vunpack.c.l.b16 %v227
  %v1330 = vunpack.c.h.b16 %v227
  %v1331 = vunpack.c.l.b16 %v228
  %v1332 = vunpack.c.h.b16 %v228
  %v1333 = vunpack.c.l.b16 %v229
  %v1334 = vunpack.c.h.b16 %v229
  %v1335 = vunpack.c.l.b16 %v230
  %v1336 = vunpack.c.h.b16 %v230
  %v1337 = vunpack.c.l.b16 %v231
  %v1338 = vunpack.c.h.b16 %v231
  %v1339 = vunpack.c.l.b16 %v232
  %v1340 = vunpack.c.h.b16 %v232
  %v1341 = vunpack.c.l.b16 %v233
  %v1342 = vunpack.c.h.b16 %v233
  %v1343 = vunpack.c.l.b16 %v234
  %v1344 = vunpack.c.h.b16 %v234
  %v1345 = vunpack.c.l.b16 %v235
  %v1346 = vunpack.c.h.b16 %v235
  %v1347 = vunpack.c.l.b16 %v236
  %v1348 = vunpack.c.h.b16 %v236
  %v1349 = vunpack.c.l.b16 %v237
  %v1350 = vunpack.c.h.b16 %v237
  %v1351 = vunpack.c.l.b16 %v238
  %v1352 = vunpack.c.h.b16 %v238
  %v1353 = vunpack.c.l.b16 %v239
  %v1354 = vunpack.c.h.b16 %v239
  %v1355 = vunpack.c.l.b16 %v240
  %v1356 = vunpack.c.h.b16 %v240
  %v1357 = vunpack.c.l.b16 %v241
  %v1358 = vunpack.c.h.b16 %v241
  %v1359 = vunpack.c.l.b16 %v242
  %v1360 = vunpack.c.h.b16 %v242
  %v1361 = vunpack.c.l.b16 %v243
  %v1362 = vunpack.c.h.b16 %v243
  %v1363 = vunpack.c.l.b16 %v244
  %v1364 = vunpack.c.h.b16 %v244
  %v1365 = vunpack.c.l.b16 %v245
  %v1366 = vunpack.c.h.b16 %v245
  %v1367 = vunpack.c.l.b16 %v246
  %v1368 = vunpack.c.h.b16 %v246
  %v1369 = vunpack.c.l.b16 %v247
  %v1370 = vunpack.c.h.b16 %v247
  %v1371 = vunpack.c.l.b16 %v248
  %v1372 = vunpack.c.h.b16 %v248
  %v1373 = vunpack.c.l.b16 %v249
  %v1374 = vunpack.c.h.b16 %v249
  %v1375 = vunpack.c.l.b16 %v250
  %v1376 = vunpack.c.h.b16 %v250
  %v1377 = vunpack.c.l.b16 %v251
  %v1378 = vunpack.c.h.b16 %v251
  %v1379 = vunpack.c.l.b16 %v252
  %v1380 = vunpack.c.h.b16 %v252
  %v1381 = vunpack.c.l.b16 %v253
  %v1382 = vunpack.c.h.b16 %v253
  %v1383 = vunpack.c.l.b16 %v254
  %v1384 = vunpack.c.h.b16 %v254
  %v1385 = vunpack.c.l.b16 %v255
  %v1386 = vunpack.c.h.b16 %v255
  %v1387 = vunpack.c.l.b16 %v256
  %v1388 = vunpack.c.h.b16 %v256
  %v1389 = vunpack.c.l.b16 %v257
  %v1390 = vunpack.c.h.b16 %v257
  %v1391 = vunpack.c.l.b16 %v258
  %v1392 = vunpack.c.h.b16 %v258
  %v1393 = vunpack.c.l.b16 %v259
  %v1394 = vunpack.c.h.b16 %v259
  %v1395 = vunpack.c.l.b16 %v260
  %v1396 = vunpack.c.h.b16 %v260
  %v1397 = vunpack.c.l.b16 %v261
  %v1398 = vunpack.c.h.b16 %v261
  %v1399 = vunpack.c.l.b16 %v262
  %v1400 = vunpack.c.h.b16 %v262
  %v1401 = vunpack.c.l.b16 %v263
  %v1402 = vunpack.c.h.b16 %v263
  %v1403 = vunpack.c.l.b16 %v264
  %v1404 = vunpack.c.h.b16 %v264
  %v1405 = vunpack.c.l.b16 %v265
  %v1406 = vunpack.c.h.b16 %v265
  %v1407 = vunpack.c.l.b16 %v266
  %v1408 = vunpack.c.h.b16 %v266
  %v1409 = vunpack.c.l.b16 %v267
  %v1410 = vunpack.c.h.b16 %v267
  %v1411 = vunpack.c.l.b16 %v268
  %v1412 = vunpack.c.h.b16 %v268
  %v1413 = vunpack.c.l.b16 %v269
  %v1414 = vunpack.c.h.b16 %v269
  %v1415 = vunpack.c.l.b16 %v270
  %v1416 = vunpack.c.h.b16 %v270
  %v1417 = vunpack.c.l.b16 %v271
  %v1418 = vunpack.c.h.b16 %v271
  %v1419 = vunpack.c.l.b16 %v272
  %v1420 = vunpack.c.h.b16 %v272
  %v1421 = vunpack.c.l.b16 %v273
  %v1422 = vunpack.c.h.b16 %v273
  %v1423 = vunpack.c.l.b16 %v274
  %v1424 = vunpack.c.h.b16 %v274
  %v1425 = vunpack.c.l.b16 %v275
  %v1426 = vunpack.c.h.b16 %v275
  %v1427 = vunpack.c.l.b16 %v276
  %v1428 = vunpack.c.h.b16 %v276
  %v1429 = vunpack.c.l.b16 %v277
  %v1430 = vunpack.c.h.b16 %v277
  %v1431 = vunpack.c.l.b16 %v278
  %v1432 = vunpack.c.h.b16 %v278
  %v1433 = vunpack.c.l.b16 %v279
  %v1434 = vunpack.c.h.b16 %v279
  %v1435 = vunpack.c.l.b16 %v280
  %v1436 = vunpack.c.h.b16 %v280
  %v1437 = vunpack.c.l.b16 %v281
  %v1438 = vunpack.c.h.b16 %v281
  %v1439 = vunpack.c.l.b16 %v282
  %v1440 = vunpack.c.h.b16 %v282
  %v1441 = vunpack.c.l.b16 %v283
  %v1442 = vunpack.c.h.b16 %v283
  %v1443 = vunpack.c.l.b16 %v284
  %v1444 = vunpack.c.h.b16 %v284
  %v1445 = vunpack.c.l.b16 %v285
  %v1446 = vunpack.c.h.b16 %v285
  %v1447 = vunpack.c.l.b16 %v286
  %v1448 = vunpack.c.h.b16 %v286
  %v1449 = vunpack.c.l.b16 %v287
  %v1450 = vunpack.c.h.b16 %v287
  %v1451 = vunpack.c.l.b16 %v288
  %v1452 = vunpack.c.h.b16 %v288
  %v1453 = vunpack.c.l.b16 %v289
  %v1454 = vunpack.c.h.b16 %v289
  %v1455 = vunpack.c.l.b16 %v290
  %v1456 = vunpack.c.h.b16 %v290
  %v1457 = vunpack.c.l.b16 %v291
  %v1458 = vunpack.c.h.b16 %v291
  %v1459 = vunpack.c.l.b16 %v292
  %v1460 = vunpack.c.h.b16 %v292
  %v1461 = vunpack.c.l.b16 %v293
  %v1462 = vunpack.c.h.b16 %v293
  %v1463 = vunpack.c.l.b16 %v294
  %v1464 = vunpack.c.h.b16 %v294
  %v1465 = vunpack.c.l.b16 %v295
  %v1466 = vunpack.c.h.b16 %v295
  %v1467 = vunpack.c.l.b16 %v296
  %v1468 = vunpack.c.h.b16 %v296
  %v1469 = vunpack.c.l.b16 %v297
  %v1470 = vunpack.c.h.b16 %v297
  %v1471 = vunpack.c.l.b16 %v298
  %v1472 = vunpack.c.h.b16 %v298
  %v1473 = vunpack.c.l.b16 %v299
  %v1474 = vunpack.c.h.b16 %v299
  %v1475 = vunpack.c.l.b16 %v300
  %v1476 = vunpack.c.h.b16 %v300
  %v1477 = vunpack.c.l.b16 %v301
  %v1478 = vunpack.c.h.b16 %v301
  %v1479 = vunpack.c.l.b16 %v302
  %v1480 = vunpack.c.h.b16 %v302
  %v1481 = vunpack.c.l.b16 %v303
  %v1482 = vunpack.c.h.b16 %v303
  %v1483 = vunpack.c.l.b16 %v304
  %v1484 = vunpack.c.h.b16 %v304
  %v1485 = vunpack.c.l.b16 %v305
  %v1486 = vunpack.c.h.b16 %v305
  %v1487 = vunpack.c.l.b16 %v306
  %v1488 = vunpack.c.h.b16 %v306
  %v1489 = vunpack.c.l.b16 %v307
  %v1490 = vunpack.c.h.b16 %v307
  %v1491 = vunpack.c.l.b16 %v308
  %v1492 = vunpack.c.h.b16 %v308
  %v1493 = vunpack.c.l.b16 %v309
  %v1494 = vunpack.c.h.b16 %v309
  %v1495 = vunpack.c.l.b16 %v310
  %v1496 = vunpack.c.h.b16 %v310
  %v1497 = vunpack.c.l.b16 %v311
  %v1498 = vunpack.c.h.b16 %v311
  %v1499 = vunpack.c.l.b16 %v312
  %v1500 = vunpack.c.h.b16 %v312
  %v1501 = vunpack.c.l.b16 %v313
  %v1502 = vunpack.c.h.b16 %v313
  %v1503 = vunpack.c.l.b16 %v314
  %v1504 = vunpack.c.h.b16 %v314
  %v1505 = vunpack.c.l.b16 %v315
  %v1506 = vunpack.c.h.b16 %v315
  %v1507 = vunpack.c.l.b16 %v316
  %v1508 = vunpack.c.h.b16 %v316
  %v1509 = vunpack.c.l.b16 %v317
  %v1510 = vunpack.c.h.b16 %v317
  %v1511 = vunpack.c.l.b16 %v318
  %v1512 = vunpack.c.h.b16 %v318
  %v1513 = vunpack.c.l.b16 %v319
  %v1514 = vunpack.c.h.b16 %v319
  %v1515 = vunpack.c.l.b16 %v320
  %v1516 = vunpack.c.h.b16 %v320
  %v1517 = vunpack.c.l.b16 %v321
  %v1518 = vunpack.c.h.b16 %v321
  %v1519 = vunpack.c.l.b16 %v322
  %v1520 = vunpack.c.h.b16 %v322
  %v1521 = vunpack.c.l.b16 %v323
  %v1522 = vunpack.c.h.b16 %v323
  %v1523 = vunpack.c.l.b16 %v324
  %v1524 = vunpack.c.h.b16 %v324
  %v1525 = vunpack.c.l.b16 %v325
  %v1526 = vunpack.c.h.b16 %v325
  %v1527 = vunpack.c.l.b16 %v326
  %v1528 = vunpack.c.h.b16 %v326
  %v1529 = vunpack.c.l.b16 %v327
  %v1530 = vunpack.c.h.b16 %v327
  %v1531 = vunpack.c.l.b16 %v328
  %v1532 = vunpack.c.h.b16 %v328
  %v1533 = vunpack.c.l.b16 %v329
  %v1534 = vunpack.c.h.b16 %v329
  %v1535 = vunpack.c.l.b16 %v330
  %v1536 = vunpack.c.h.b16 %v330
  %v1537 = vunpack.c.l.b16 %v331
  %v1538 = vunpack.c.h.b16 %v331
  %v1539 = vunpack.c.l.b16 %v332
  %v1540 = vunpack.c.h.b16 %v332
  %v1541 = vunpack.c.l.b16 %v333
  %v1542 = vunpack.c.h.b16 %v333
  %v1543 = vunpack.c.l.b16 %v334
  %v1544 = vunpack.c.h.b16 %v334
  %v1545 = vunpack.c.l.b16 %v335
  %v1546 = vunpack.c.h.b16 %v335
  %v1547 = vunpack.c.l.b16 %v336
  %v1548 = vunpack.c.h.b16 %v336
  %v1549 = vunpack.c.l.b16 %v337
  %v1550 = vunpack.c.h.b16 %v337
  %v1551 = vunpack.c.l.b16 %v338
  %v1552 = vunpack.c.h.b16 %v338
  %v1553 = vunpack.c.l.b16 %v339
  %v1554 = vunpack.c.h.b16 %v339
  %v1555 = vunpack.c.l.b16 %v340
  %v1556 = vunpack.c.h.b16 %v340
  %v1557 = vunpack.c.l.b16 %v341
  %v1558 = vunpack.c.h.b16 %v341
  %v1559 = vunpack.c.l.b16 %v342
  %v1560 = vunpack.c.h.b16 %v342
  %v1561 = vunpack.c.l.b16 %v343
  %v1562 = vunpack.c.h.b16 %v343
  %v1563 = vunpack.c.l.b16 %v344
  %v1564 = vunpack.c.h.b16 %v344
  %v1565 = vunpack.c.l.b16 %v345
  %v1566 = vunpack.c.h.b16 %v345
  %v1567 = vunpack.c.l.b16 %v346
  %v1568 = vunpack.c.h.b16 %v346
  %v1569 = vunpack.c.l.b16 %v347
  %v1570 = vunpack.c.h.b16 %v347
  %v1571 = vunpack.c.l.b16 %v348
  %v1572 = vunpack.c.h.b16 %v348
  %v1573 = vunpack.c.l.b16 %v349
  %v1574 = vunpack.c.h.b16 %v349
  %v1575 = vunpack.c.l.b16 %v350
  %v1576 = vunpack.c.h.b16 %v350
  %v1577 = vunpack.c.l.b16 %v351
  %v1578 = vunpack.c.h.b16 %v351
  %v1579 = vunpack.c.l.b16 %v352
  %v1580 = vunpack.c.h.b16 %v352
  %v1581 = vunpack.c.l.b16 %v353
  %v1582 = vunpack.c.h.b16 %v353
  %v1583 = vunpack.c.l.b16 %v354
  %v1584 = vunpack.c.h.b16 %v354
  %v1585 = vunpack.c.l.b16 %v355
  %v1586 = vunpack.c.h.b16 %v355
  %v1587 = vunpack.c.l.b16 %v356
  %v1588 = vunpack.c.h.b16 %v356
  %v1589 = vunpack.c.l.b16 %v357
  %v1590 = vunpack.c.h.b16 %v357
  %v1591 = vunpack.c.l.b16 %v358
  %v1592 = vunpack.c.h.b16 %v358
  %v1593 = vunpack.c.l.b16 %v359
  %v1594 = vunpack.c.h.b16 %v359
  %v1595 = vunpack.c.l.b16 %v360
  %v1596 = vunpack.c.h.b16 %v360
  %v1597 = vunpack.c.l.b16 %v361
  %v1598 = vunpack.c.h.b16 %v361
  %v1599 = vunpack.c.l.b16 %v362
  %v1600 = vunpack.c.h.b16 %v362
  %v1601 = vunpack.c.l.b16 %v363
  %v1602 = vunpack.c.h.b16 %v363
  %v1603 = vunpack.c.l.b16 %v364
  %v1604 = vunpack.c.h.b16 %v364
  %v1605 = vunpack.c.l.b16 %v365
  %v1606 = vunpack.c.h.b16 %v365
  %v1607 = vunpack.c.l.b16 %v366
  %v1608 = vunpack.c.h.b16 %v366
  %v1609 = vunpack.c.l.b16 %v367
  %v1610 = vunpack.c.h.b16 %v367
  %v1611 = vunpack.c.l.b16 %v368
  %v1612 = vunpack.c.h.b16 %v368
  %v1613 = vunpack.c.l.b16 %v369
  %v1614 = vunpack.c.h.b16 %v369
  %v1615 = vunpack.c.l.b16 %v370
  %v1616 = vunpack.c.h.b16 %v370
  %v1617 = vunpack.c.l.b16 %v371
  %v1618 = vunpack.c.h.b16 %v371
  %v1619 = vunpack.c.l.b16 %v372
  %v1620 = vunpack.c.h.b16 %v372
  %v1621 = vunpack.c.l.b16 %v373
  %v1622 = vunpack.c.h.b16 %v373
  %v1623 = vunpack.c.l.b16 %v374
  %v1624 = vunpack.c.h.b16 %v374
  %v1625 = vunpack.c.l.b16 %v375
  %v1626 = vunpack.c.h.b16 %v375
  %v1627 = vunpack.c.l.b16 %v376
  %v1628 = vunpack.c.h.b16 %v376
  %v1629 = vunpack.c.l.b16 %v377
  %v1630 = vunpack.c.h.b16 %v377
  %v1631 = vunpack.c.l.b16 %v378
  %v1632 = vunpack.c.h.b16 %v378
  %v1633 = vunpack.c.l.b16 %v379
  %v1634 = vunpack.c.h.b16 %v379
  %v1635 = vunpack.c.l.b16 %v380
  %v1636 = vunpack.c.h.b16 %v380
  %v1637 = vunpack.c.l.b16 %v381
  %v1638 = vunpack.c.h.b16 %v381
  %v1639 = vunpack.c.l.b16 %v382
  %v1640 = vunpack.c.h.b16 %v382
  %v1641 = vunpack.c.l.b16 %v383
  %v1642 = vunpack.c.h.b16 %v383
  %v1643 = vunpack.c.l.b16 %v384
  %v1644 = vunpack.c.h.b16 %v384
  %v1645 = vunpack.c.l.b16 %v385
  %v1646 = vunpack.c.h.b16 %v385
  %v1647 = vunpack.c.l.b16 %v386
  %v1648 = vunpack.c.h.b16 %v386
  %v1649 = vunpack.c.l.b16 %v387
  %v1650 = vunpack.c.h.b16 %v387
  %v1651 = vunpack.c.l.b16 %v388
  %v1652 = vunpack.c.h.b16 %v388
  %v1653 = vunpack.c.l.b16 %v389
  %v1654 = vunpack.c.h.b16 %v389
  %v1655 = vunpack.c.l.b16 %v390
  %v1656 = vunpack.c.h.b16 %v390
  %v1657 = vunpack.c.l.b16 %v391
  %v1658 = vunpack.c.h.b16 %v391
  %v1659 = vunpack.c.l.b16 %v392
  %v1660 = vunpack.c.h.b16 %v392
  %v1661 = vunpack.c.l.b16 %v393
  %v1662 = vunpack.c.h.b16 %v393
  %v1663 = vunpack.c.l.b16 %v394
  %v1664 = vunpack.c.h.b16 %v394
  %v1665 = vunpack.c.l.b16 %v395
  %v1666 = vunpack.c.h.b16 %v395
  %v1667 = vunpack.c.l.b16 %v396
  %v1668 = vunpack.c.h.b16 %v396
  %v1669 = vunpack.c.l.b16 %v397
  %v1670 = vunpack.c.h.b16 %v397
  %v1671 = vunpack.c.l.b16 %v398
  %v1672 = vunpack.c.h.b16 %v398
  %v1673 = vunpack.c.l.b16 %v399
  %v1674 = vunpack.c.h.b16 %v399
  %v1675 = vunpack.c.l.b16 %v400
  %v1676 = vunpack.c.h.b16 %v400
  %v1677 = vunpack.c.l.b16 %v401
  %v1678 = vunpack.c.h.b16 %v401
  %v1679 = vunpack.c.l.b16 %v402
  %v1680 = vunpack.c.h.b16 %v402
  %v1681 = vunpack.c.l.b16 %v403
  %v1682 = vunpack.c.h.b16 %v403
  %v1683 = vunpack.c.l.b16 %v404
  %v1684 = vunpack.c.h.b16 %v404
  %v1685 = vunpack.c.l.b16 %v405
  %v1686 = vunpack.c.h.b16 %v405
  %v1687 = vunpack.c.l.b16 %v406
  %v1688 = vunpack.c.h.b16 %v406
  %v1689 = vunpack.c.l.b16 %v407
  %v1690 = vunpack.c.h.b16 %v407
  %v1691 = vunpack.c.l.b16 %v408
  %v1692 = vunpack.c.h.b16 %v408
  %v1693 = vunpack.c.l.b16 %v409
  %v1694 = vunpack.c.h.b16 %v409
  %v1695 = vunpack.c.l.b16 %v410
  %v1696 = vunpack.c.h.b16 %v410
  %v1697 = vunpack.c.l.b16 %v411
  %v1698 = vunpack.c.h.b16 %v411
  %v1699 = vunpack.c.l.b16 %v412
  %v1700 = vunpack.c.h.b16 %v412
  %v1701 = vunpack.c.l.b16 %v413
  %v1702 = vunpack.c.h.b16 %v413
  %v1703 = vunpack.c.l.b16 %v414
  %v1704 = vunpack.c.h.b16 %v414
  %v1705 = vunpack.c.l.b16 %v415
  %v1706 = vunpack.c.h.b16 %v415
  %v1707 = vunpack.c.l.b16 %v416
  %v1708 = vunpack.c.h.b16 %v416
  %v1709 = vunpack.c.l.b16 %v417
  %v1710 = vunpack.c.h.b16 %v417
  %v1711 = vunpack.c.l.b16 %v418
  %v1712 = vunpack.c.h.b16 %v418
  %v1713 = vunpack.c.l.b16 %v419
  %v1714 = vunpack.c.h.b16 %v419
  %v1715 = vunpack.c.l.b16 %v420
  %v1716 = vunpack.c.h.b16 %v420
  %v1717 = vunpack.c.l.b16 %v421
  %v1718 = vunpack.c.h.b16 %v421
  %v1719 = vunpack.c.l.b16 %v422
  %v1720 = vunpack.c.h.b16 %v422
  %v1721 = vunpack.c.l.b16 %v423
  %v1722 = vunpack.c.h.b16 %v423
  %v1723 = vunpack.c.l.b16 %v424
  %v1724 = vunpack.c.h.b16 %v424
  %v1725 = vunpack.c.l.b16 %v425
  %v1726 = vunpack.c.h.b16 %v425
  %v1727 = vunpack.c.l.b16 %v426
  %v1728 = vunpack.c.h.b16 %v426
  %v1729 = vunpack.c.l.b16 %v427
  %v1730 = vunpack.c.h.b16 %v427
  %v1731 = vunpack.c.l.b16 %v428
  %v1732 = vunpack.c.h.b16 %v428
  %v1733 = vunpack.c.l.b16 %v429
  %v1734 = vunpack.c.h.b16 %v429
  %v1735 = vunpack.c.l.b16 %v430
  %v1736 = vunpack.c.h.b16 %v430
  %v1737 = vunpack.c.l.b16 %v431
  %v1738 = vunpack.c.h.b16 %v431
  %v1739 = vunpack.c.l.b16 %v432
  %v1740 = vunpack.c.h.b16 %v432
  %v1741 = vunpack.c.l.b16 %v433
  %v1742 = vunpack.c.h.b16 %v433
  %v1743 = vunpack.c.l.b16 %v434
  %v1744 = vunpack.c.h.b16 %v434
  %v1745 = vunpack.c.l.b16 %v435
  %v1746 = vunpack.c.h.b16 %v435
  %v1747 = vunpack.c.l.b16 %v436
  %v1748 = vunpack.c.h.b16 %v436
  %v1749 = vunpack.c.l.b16 %v437
  %v1750 = vunpack.c.h.b16 %v437
  %v1751 = vunpack.c.l.b16 %v438
  %v1752 = vunpack.c.h.b16 %v438
  %v1753 = vunpack.c.l.b16 %v439
  %v1754 = vunpack.c.h.b16 %v439
  %v1755 = vunpack.c.l.b16 %v440
  %v1756 = vunpack.c.h.b16 %v440
  %v1757 = vpack.c.b16 %v977, %v973
  %v1758 = vpack.c.b16 %v978, %v974
  %v1759 = vpack.c.b16 %v979, %v975
  %v1760 = vpack.c.b16 %v980, %v976
  %v1761 = vpack.c.b16 %v985, %v981
  %v1762 = vpack.c.b16 %v986, %v982
  %v1763 = vpack.c.b16 %v987, %v983
  %v1764 = vpack.c.b16 %v988, %v984
  %v1765 = vpack.c.b16 %v993, %v989
  %v1766 = vpack.c.b16 %v994, %v990
  %v1767 = vpack.c.b16 %v995, %v991
  %v1768 = vpack.c.b16 %v996, %v992
  %v1769 = vpack.c.b16 %v1001, %v997
  %v1770 = vpack.c.b16 %v1002, %v998
  %v1771 = vpack.c.b16 %v1003, %v999
  %v1772 = vpack.c.b16 %v1004, %v1000
  %v1773 = vpack.c.b16 %v1009, %v1005
  %v1774 = vpack.c.b16 %v1010, %v1006
  %v1775 = vpack.c.b16 %v1011, %v1007
  %v1776 = vpack.c.b16 %v1012, %v1008
  %v1777 = vpack.c.b16 %v1017, %v1013
  %v1778 = vpack.c.b16 %v1018, %v1014
  %v1779 = vpack.c.b16 %v1019, %v1015
  %v1780 = vpack.c.b16 %v1020, %v1016
  %v1781 = vpack.c.b16 %v1025, %v1021
  %v1782 = vpack.c.b16 %v1026, %v1022
  %v1783 = vpack.c.b16 %v1027, %v1023
  %v1784 = vpack.c.b16 %v1028, %v1024
  %v1785 = vpack.c.b16 %v1033, %v1029
  %v1786 = vpack.c.b16 %v1034, %v1030
  %v1787 = vpack.c.b16 %v1035, %v1031
  %v1788 = vpack.c.b16 %v1036, %v1032
  %v1789 = vpack.c.b16 %v1041, %v1037
  %v1790 = vpack.c.b16 %v1042, %v1038
  %v1791 = vpack.c.b16 %v1043, %v1039
  %v1792 = vpack.c.b16 %v1044, %v1040
  %v1793 = vpack.c.b16 %v1049, %v1045
  %v1794 = vpack.c.b16 %v1050, %v1046
  %v1795 = vpack.c.b16 %v1051, %v1047
  %v1796 = vpack.c.b16 %v1052, %v1048
  %v1797 = vpack.c.b16 %v1057, %v1053
  %v1798 = vpack.c.b16 %v1058, %v1054
  %v1799 = vpack.c.b16 %v1059, %v1055
  %v1800 = vpack.c.b16 %v1060, %v1056
  %v1801 = vpack.c.b16 %v1065, %v1061
  %v1802 = vpack.c.b16 %v1066, %v1062
  %v1803 = vpack.c.b16 %v1067, %v1063
  %v1804 = vpack.c.b16 %v1068, %v1064
  %v1805 = vpack.c.b16 %v1073, %v1069
  %v1806 = vpack.c.b16 %v1074, %v1070
  %v1807 = vpack.c.b16 %v1075, %v1071
  %v1808 = vpack.c.b16 %v1076, %v1072
  %v1809 = vpack.c.b16 %v1081, %v1077
  %v1810 = vpack.c.b16 %v1082, %v1078
  %v1811 = vpack.c.b16 %v1083, %v1079
  %v1812 = vpack.c.b16 %v1084, %v1080
  %v1813 = vpack.c.b16 %v1089, %v1085
  %v1814 = vpack.c.b16 %v1090, %v1086
  %v1815 = vpack.c.b16 %v1091, %v1087
  %v1816 = vpack.c.b16 %v1092, %v1088
  %v1817 = vpack.c.b16 %v1097, %v1093
  %v1818 = vpack.c.b16 %v1098, %v1094
  %v1819 = vpack.c.b16 %v1099, %v1095
  %v1820 = vpack.c.b16 %v1100, %v1096
  %v1821 = vpack.c.b16 %v1105, %v1101
  %v1822 = vpack.c.b16 %v1106, %v1102
  %v1823 = vpack.c.b16 %v1107, %v1103
  %v1824 = vpack.c.b16 %v1108, %v1104
  %v1825 = vpack.c.b16 %v1113, %v1109
  %v1826 = vpack.c.b16 %v1114, %v1110
  %v1827 = vpack.c.b16 %v1115, %v1111
  %v1828 = vpack.c.b16 %v1116, %v1112
  %v1829 = vpack.c.b16 %v1121, %v1117
  %v1830 = vpack.c.b16 %v1122, %v1118
  %v1831 = vpack.c.b16 %v1123, %v1119
  %v1832 = vpack.c.b16 %v1124, %v1120
  %v1833 = vpack.c.b16 %v1129, %v1125
  %v1834 = vpack.c.b16 %v1130, %v1126
  %v1835 = vpack.c.b16 %v1131, %v1127
  %v1836 = vpack.c.b16 %v1132, %v1128
  %v1837 = vpack.c.b16 %v1137, %v1133
  %v1838 = vpack.c.b16 %v1138, %v1134
  %v1839 = vpack.c.b16 %v1139, %v1135
  %v1840 = vpack.c.b16 %v1140, %v1136
  %v1841 = vpack.c.b16 %v1145, %v1141
  %v1842 = vpack.c.b16 %v1146, %v1142
  %v1843 = vpack.c.b16 %v1147, %v1143
  %v1844 = vpack.c.b16 %v1148, %v1144
  %v1845 = vpack.c.b16 %v1153, %v1149
  %v1846 = vpack.c.b16 %v1154, %v1150
  %v1847 = vpack.c.b16 %v1155, %v1151
  %v1848 = vpack.c.b16 %v1156, %v1152
  %v1849 = vpack.c.b16 %v1161, %v1157
  %v1850 = vpack.c.b16 %v1162, %v1158
  %v1851 = vpack.c.b16 %v1163, %v1159
  %v1852 = vpack.c.b16 %v1164, %v1160
  %v1853 = vpack.c.b16 %v1169, %v1165
  %v1854 = vpack.c.b16 %v1170, %v1166
  %v1855 = vpack.c.b16 %v1171, %v1167
  %v1856 = vpack.c.b16 %v1172, %v1168
  %v1857 = vpack.c.b16 %v1177, %v1173
  %v1858 = vpack.c.b16 %v1178, %v1174
  %v1859 = vpack.c.b16 %v1179, %v1175
  %v1860 = vpack.c.b16 %v1180, %v1176
  %v1861 = vpack.c.b16 %v1185, %v1181
  %v1862 = vpack.c.b16 %v1186, %v1182
  %v1863 = vpack.c.b16 %v1187, %v1183
  %v1864 = vpack.c.b16 %v1188, %v1184
  %v1865 = vpack.c.b16 %v1193, %v1189
  %v1866 = vpack.c.b16 %v1194, %v1190
  %v1867 = vpack.c.b16 %v1195, %v1191
  %v1868 = vpack.c.b16 %v1196, %v1192
  %v1869 = vpack.c.b16 %v1201, %v1197
  %v1870 = vpack.c.b16 %v1202, %v1198
  %v1871 = vpack.c.b16 %v1203, %v1199
  %v1872 = vpack.c.b16 %v1204, %v1200
  %v1873 = vpack.c.b16 %v1209, %v1205
  %v1874 = vpack.c.b16 %v1210, %v1206
  %v1875 = vpack.c.b16 %v1211, %v1207
  %v1876 = vpack.c.b16 %v1212, %v1208
  %v1877 = vpack.c.b16 %v1217, %v1213
  %v1878 = vpack.c.b16 %v1218, %v1214
  %v1879 = vpack.c.b16 %v1219, %v1215
  %v1880 = vpack.c.b16 %v1220, %v1216
  %v1881 = vpack.c.b16 %v1225, %v1221
  %v1882 = vpack.c.b16 %v1226, %v1222
  %v1883 = vpack.c.b16 %v1227, %v1223
  %v1884 = vpack.c.b16 %v1228, %v1224
  %v1885 = vpack.c.b16 %v1233, %v1229
  %v1886 = vpack.c.b16 %v1234, %v1230
  %v1887 = vpack.c.b16 %v1235, %v1231
  %v1888 = vpack.c.b16 %v1236, %v1232
  %v1889 = vpack.c.b16 %v1241, %v1237
  %v1890 = vpack.c.b16 %v1242, %v1238
  %v1891 = vpack.c.b16 %v1243, %v1239
  %v1892 = vpack.c.b16 %v1244, %v1240
  %v1893 = vpack.c.b16 %v1249, %v1245
  %v1894 = vpack.c.b16 %v1250, %v1246
  %v1895 = vpack.c.b16 %v1251, %v1247
  %v1896 = vpack.c.b16 %v1252, %v1248
  %v1897 = vpack.c.b16 %v1257, %v1253
  %v1898 = vpack.c.b16 %v1258, %v1254
  %v1899 = vpack.c.b16 %v1259, %v1255
  %v1900 = vpack.c.b16 %v1260, %v1256
  %v1901 = vpack.c.b16 %v1265, %v1261
  %v1902 = vpack.c.b16 %v1266, %v1262
  %v1903 = vpack.c.b16 %v1267, %v1263
  %v1904 = vpack.c.b16 %v1268, %v1264
  %v1905 = vpack.c.b16 %v1273, %v1269
  %v1906 = vpack.c.b16 %v1274, %v1270
  %v1907 = vpack.c.b16 %v1275, %v1271
  %v1908 = vpack.c.b16 %v1276, %v1272
  %v1909 = vpack.c.b16 %v1281, %v1277
  %v1910 = vpack.c.b16 %v1282, %v1278
  %v1911 = vpack.c.b16 %v1283, %v1279
  %v1912 = vpack.c.b16 %v1284, %v1280
  %v1913 = vpack.c.b16 %v1289, %v1285
  %v1914 = vpack.c.b16 %v1290, %v1286
  %v1915 = vpack.c.b16 %v1291, %v1287
  %v1916 = vpack.c.b16 %v1292, %v1288
  %v1917 = vpack.c.b16 %v1297, %v1293
  %v1918 = vpack.c.b16 %v1298, %v1294
  %v1919 = vpack.c.b16 %v1299, %v1295
  %v1920 = vpack.c.b16 %v1300, %v1296
  %v1921 = vpack.c.b16 %v1305, %v1301
  %v1922 = vpack.c.b16 %v1306, %v1302
  %v1923 = vpack.c.b16 %v1307, %v1303
  %v1924 = vpack.c.b16 %v1308, %v1304
  %v1925 = vpack.c.b16 %v1313, %v1309
  %v1926 = vpack.c.b16 %v1314, %v1310
  %v1927 = vpack.c.b16 %v1315, %v1311
  %v1928 = vpack.c.b16 %v1316, %v1312
  %v1929 = vpack.c.b16 %v1321, %v1317
  %v1930 = vpack.c.b16 %v1322, %v1318
  %v1931 = vpack.c.b16 %v1323, %v1319
  %v1932 = vpack.c.b16 %v1324, %v1320
  %v1933 = vpack.c.b16 %v1329, %v1325
  %v1934 = vpack.c.b16 %v1330, %v1326
  %v1935 = vpack.c.b16 %v1331, %v1327
  %v1936 = vpack.c.b16 %v1332, %v1328
  %v1937 = vpack.c.b16 %v1337, %v1333
  %v1938 = vpack.c.b16 %v1338, %v1334
  %v1939 = vpack.c.b16 %v1339, %v1335
  %v1940 = vpack.c.b16 %v1340, %v1336
  %v1941 = vpack.c.b16 %v1345, %v1341
  %v1942 = vpack.c.b16 %v1346, %v1342
  %v1943 = vpack.c.b16 %v1347, %v1343
  %v1944 = vpack.c.b16 %v1348, %v1344
  %v1945 = vpack.c.b16 %v1353, %v1349
  %v1946 = vpack.c.b16 %v1354, %v1350
  %v1947 = vpack.c.b16 %v1355, %v1351
  %v1948 = vpack.c.b16 %v1356, %v1352
  %v1949 = vpack.c.b16 %v1361, %v1357
  %v1950 = vpack.c.b16 %v1362, %v1358
  %v1951 = vpack.c.b16 %v1363, %v1359
  %v1952 = vpack.c.b16 %v1364, %v1360
  %v1953 = vpack.c.b16 %v1369, %v1365
  %v1954 = vpack.c.b16 %v1370, %v1366
  %v1955 = vpack.c.b16 %v1371, %v1367
  %v1956 = vpack.c.b16 %v1372, %v1368
  %v1957 = vpack.c.b16 %v1377, %v1373
  %v1958 = vpack.c.b16 %v1378, %v1374
  %v1959 = vpack.c.b16 %v1379, %v1375
  %v1960 = vpack.c.b16 %v1380, %v1376
  %v1961 = vpack.c.b16 %v1385, %v1381
  %v1962 = vpack.c.b16 %v1386, %v1382
  %v1963 = vpack.c.b16 %v1387, %v1383
  %v1964 = vpack.c.b16 %v1388, %v1384
  %v1965 = vpack.c.b16 %v1393, %v1389
  %v1966 = vpack.c.b16 %v1394, %v1390
  %v1967 = vpack.c.b16 %v1395, %v1391
  %v1968 = vpack.c.b16 %v1396, %v1392
  %v1969 = vpack.c.b16 %v1401, %v1397
  %v1970 = vpack.c.b16 %v1402, %v1398
  %v1971 = vpack.c.b16 %v1403, %v1399
  %v1972 = vpack.c.b16 %v1404, %v1400
  %v1973 = vpack.c.b16 %v1409, %v1405
  %v1974 = vpack.c.b16 %v1410, %v1406
  %v1975 = vpack.c.b16 %v1411, %v1407
  %v1976 = vpack.c.b16 %v1412, %v1408
  %v1977 = vpack.c.b16 %v1417, %v1413
  %v1978 = vpack.c.b16 %v1418, %v1414
  %v1979 = vpack.c.b16 %v1419, %v1415
  %v1980 = vpack.c.b16 %v1420, %v1416
  %v1981 = vpack.c.b16 %v1425, %v1421
  %v1982 = vpack.c.b16 %v1426, %v1422
  %v1983 = vpack.c.b16 %v1427, %v1423
  %v1984 = vpack.c.b16 %v1428, %v1424
  %v1985 = vpack.c.b16 %v1433, %v1429
  %v1986 = vpack.c.b16 %v1434, %v1430
  %v1987 = vpack.c.b16 %v1435, %v1431
  %v1988 = vpack.c.b16 %v1436, %v1432
  %v1989 = vpack.c.b16 %v1441, %v1437
  %v1990 = vpack.c.b16 %v1442, %v1438
  %v1991 = vpack.c.b16 %v1443, %v1439
  %v1992 = vpack.c.b16 %v1444, %v1440
  %v1993 = vpack.c.b16 %v1449, %v1445
  %v1994 = vpack.c.b16 %v1450, %v1446
  %v1995 = vpack.c.b16 %v1451, %v1447
  %v1996 = vpack.c.b16 %v1452, %v1448
  %v1997 = vpack.c.b16 %v1457, %v1453
  %v1998 = vpack.c.b16 %v1458, %v1454
  %v1999 = vpack.c.b16 %v1459, %v1455
  %v2000 = vpack.c.b16 %v1460, %v1456
  %v2001 = vpack.c.b16 %v1465, %v1461
  %v2002 = vpack.c.b16 %v1466, %v1462
  %v2003 = vpack.c.b16 %v1467, %v1463
  %v2004 = vpack.c.b16 %v1468, %v1464
  %v2005 = vpack.c.b16 %v1473, %v1469
  %v2006 = vpack.c.b16 %v1474, %v1470
  %v2007 = vpack.c.b16 %v1475, %v1471
  %v2008 = vpack.c.b16 %v1476, %v1472
  %v2009 = vpack.c.b16 %v1481, %v1477
  %v2010 = vpack.c.b16 %v1482, %v1478
  %v2011 = vpack.c.b16 %v1483, %v1479
  %v2012 = vpack.c.b16 %v1484, %v1480
  %v2013 = vpack.c.b16 %v1489, %v1485
  %v2014 = vpack.c.b16 %v1490, %v1486
  %v2015 = vpack.c.b16 %v1491, %v1487
  %v2016 = vpack.c.b16 %v1492, %v1488
  %v2017 = vpack.c.b16 %v1497, %v1493
  %v2018 = vpack.c.b16 %v1498, %v1494
  %v2019 = vpack.c.b16 %v1499, %v1495
  %v2020 = vpack.c.b16 %v1500, %v1496
  %v2021 = vpack.c.b16 %v1505, %v1501
  %v2022 = vpack.c.b16 %v1506, %v1502
  %v2023 = vpack.c.b16 %v1507, %v1503
  %v2024 = vpack.c.b16 %v1508, %v1504
  %v2025 = vpack.c.b16 %v1513, %v1509
  %v2026 = vpack.c.b16 %v1514, %v1510
  %v2027 = vpack.c.b16 %v1515, %v1511
  %v2028 = vpack.c.b16 %v1516, %v1512
  %v2029 = vpack.c.b16 %v1521, %v1517
  %v2030 = vpack.c.b16 %v1522, %v1518
  %v2031 = vpack.c.b16 %v1523, %v1519
  %v2032 = vpack.c.b16 %v1524, %v1520
  %v2033 = vpack.c.b16 %v1529, %v1525
  %v2034 = vpack.c.b16 %v1530, %v1526
  %v2035 = vpack.c.b16 %v1531, %v1527
  %v2036 = vpack.c.b16 %v1532, %v1528
  %v2037 = vpack.c.b16 %v1537, %v1533
  %v2038 = vpack.c.b16 %v1538, %v1534
  %v2039 = vpack.c.b16 %v1539, %v1535
  %v2040 = vpack.c.b16 %v1540, %v1536
  %v2041 = vpack.c.b16 %v1545, %v1541
  %v2042 = vpack.c.b16 %v1546, %v1542
  %v2043 = vpack.c.b16 %v1547, %v1543
  %v2044 = vpack.c.b16 %v1548, %v1544
  %v2045 = vpack.c.b16 %v1553, %v1549
  %v2046 = vpack.c.b16 %v1554, %v1550
  %v2047 = vpack.c.b16 %v1555, %v1551
  %v2048 = vpack.c.b16 %v1556, %v1552
  %v2049 = vpack.c.b16 %v1561, %v1557
  %v2050 = vpack.c.b16 %v1562, %v1558
  %v2051 = vpack.c.b16 %v1563, %v1559
  %v2052 = vpack.c.b16 %v1564, %v1560
  %v2053 = vpack.c.b16 %v1569, %v1565
  %v2054 = vpack.c.b16 %v1570, %v1566
  %v2055 = vpack.c.b16 %v1571, %v1567
  %v2056 = vpack.c.b16 %v1572, %v1568
  %v2057 = vpack.c.b16 %v1577, %v1573
  %v2058 = vpack.c.b16 %v1578, %v1574
  %v2059 = vpack.c.b16 %v1579, %v1575
  %v2060 = vpack.c.b16 %v1580, %v1576
  %v2061 = vpack.c.b16 %v1585, %v1581
  %v2062 = vpack.c.b16 %v1586, %v1582
  %v2063 = vpack.c.b16 %v1587, %v1583
  %v2064 = vpack.c.b16 %v1588, %v1584
  %v2065 = vpack.c.b16 %v1593, %v1589
  %v2066 = vpack.c.b16 %v1594, %v1590
  %v2067 = vpack.c.b16 %v1595, %v1591
  %v2068 = vpack.c.b16 %v1596, %v1592
  %v2069 = vpack.c.b16 %v1601, %v1597
  %v2070 = vpack.c.b16 %v1602, %v1598
  %v2071 = vpack.c.b16 %v1603, %v1599
  %v2072 = vpack.c.b16 %v1604, %v1600
  %v2073 = vpack.c.b16 %v1609, %v1605
  %v2074 = vpack.c.b16 %v1610, %v1606
  %v2075 = vpack.c.b16 %v1611, %v1607
  %v2076 = vpack.c.b16 %v1612, %v1608
  %v2077 = vpack.c.b16 %v1617, %v1613
  %v2078 = vpack.c.b16 %v1618, %v1614
  %v2079 = vpack.c.b16 %v1619, %v1615
  %v2080 = vpack.c.b16 %v1620, %v1616
  %v2081 = vpack.c.b16 %v1625, %v1621
  %v2082 = vpack.c.b16 %v1626, %v1622
  %v2083 = vpack.c.b16 %v1627, %v1623
  %v2084 = vpack.c.b16 %v1628, %v1624
  %v2085 = vpack.c.b16 %v1633, %v1629
  %v2086 = vpack.c.b16 %v1634, %v1630
  %v2087 = vpack.c.b16 %v1635, %v1631
  %v2088 = vpack.c.b16 %v1636, %v1632
  %v2089 = vpack.c.b16 %v1641, %v1637
  %v2090 = vpack.c.b16 %v1642, %v1638
  %v2091 = vpack.c.b16 %v1643, %v1639
  %v2092 = vpack.c.b16 %v1644, %v1640
  %v2093 = vpack.c.b16 %v1649, %v1645
  %v2094 = vpack.c.b16 %v1650, %v1646
  %v2095 = vpack.c.b16 %v1651, %v1647
  %v2096 = vpack.c.b16 %v1652, %v1648
  %v2097 = vpack.c.b16 %v1657, %v1653
  %v2098 = vpack.c.b16 %v1658, %v1654
  %v2099 = vpack.c.b16 %v1659, %v1655
  %v2100 = vpack.c.b16 %v1660, %v1656
  %v2101 = vpack.c.b16 %v1665, %v1661
  %v2102 = vpack.c.b16 %v1666, %v1662
  %v2103 = vpack.c.b16 %v1667, %v1663
  %v2104 = vpack.c.b16 %v1668, %v1664
  %v2105 = vpack.c.b16 %v1673, %v1669
  %v2106 = vpack.c.b16 %v1674, %v1670
  %v2107 = vpack.c.b16 %v1675, %v1671
  %v2108 = vpack.c.b16 %v1676, %v1672
  %v2109 = vpack.c.b16 %v1681, %v1677
  %v2110 = vpack.c.b16 %v1682, %v1678
  %v2111 = vpack.c.b16 %v1683, %v1679
  %v2112 = vpack.c.b16 %v1684, %v1680
  %v2113 = vpack.c.b16 %v1689, %v1685
  %v2114 = vpack.c.b16 %v1690, %v1686
  %v2115 = vpack.c.b16 %v1691, %v1687
  %v2116 = vpack.c.b16 %v1692, %v1688
  %v2117 = vpack.c.b16 %v1697, %v1693
  %v2118 = vpack.c.b16 %v1698, %v1694
  %v2119 = vpack.c.b16 %v1699, %v1695
  %v2120 = vpack.c.b16 %v1700, %v1696
  %v2121 = vpack.c.b16 %v1705, %v1701
  %v2122 = vpack.c.b16 %v1706, %v1702
  %v2123 = vpack.c.b16 %v1707, %v1703
  %v2124 = vpack.c.b16 %v1708, %v1704
  %v2125 = vpack.c.b16 %v1713, %v1709
  %v2126 = vpack.c.b16 %v1714, %v1710
  %v2127 = vpack.c.b16 %v1715, %v1711
  %v2128 = vpack.c.b16 %v1716, %v1712
  %v2129 = vpack.c.b16 %v1721, %v1717
  %v2130 = vpack.c.b16 %v1722, %v1718
  %v2131 = vpack.c.b16 %v1723, %v1719
  %v2132 = vpack.c.b16 %v1724, %v1720
  %v2133 = vpack.c.b16 %v1729, %v1725
  %v2134 = vpack.c.b16 %v1730, %v1726
  %v2135 = vpack.c.b16 %v1731, %v1727
  %v2136 = vpack.c.b16 %v1732, %v1728
  %v2137 = vpack.c.b16 %v1737, %v1733
  %v2138 = vpack.c.b16 %v1738, %v1734
  %v2139 = vpack.c.b16 %v1739, %v1735
  %v2140 = vpack.c.b16 %v1740, %v1736
  %v2141 = vpack.c.b16 %v1745, %v1741
  %v2142 = vpack.c.b16 %v1746, %v1742
  %v2143 = vpack.c.b16 %v1747, %v1743
  %v2144 = vpack.c.b16 %v1748, %v1744
  %v2145 = vpack.c.b16 %v1753, %v1749
  %v2146 = vpack.c.b16 %v1754, %v1750
  %v2147 = vpack.c.b16 %v1755, %v1751
  %v2148 = vpack.c.b16 %v1756, %v1752
  %vm2541 = vcmask 261120
  %v2543 = vsel %vm2541, %v543, 0
  %v2546 = vsel %vm2541, %v556, 0
  %2548 = vmatpush.bf16.msra.mxu0 %v1785
  %2549 = vmatpush.bf16.msra.mxu0 %v1781
  %2550 = vmatpush.bf16.msra.mxu0 %v1777
  %2551 = vmatpush.bf16.msra.mxu0 %v1773
  %2552 = vmatpush.bf16.msra.mxu0 %v1769
  %2553 = vmatpush.bf16.msra.mxu0 %v1765
  %2554 = vmatpush.bf16.msra.mxu0 %v1761
  %2555 = vmatpush.bf16.msra.mxu0 %v1757
  %2556 = vmatmul.bf16.gmra.mxu0 %v531
  %v2557 = vpop.f32.mrf.mxu0
  %v2558 = vadd.f32 %v443, %v2557
  %v2559 = vpop.f32.mrf.mxu0
  %v2560 = vadd.f32 %v443, %v2559
  %2561 = vmatmul.bf16.gmra.mxu0 %v544
  %v2562 = vpop.f32.mrf.mxu0
  %v2563 = vadd.f32 %v443, %v2562
  %v2564 = vpop.f32.mrf.mxu0
  %v2565 = vadd.f32 %v443, %v2564
  %2566 = vdwg.mxu0
  %2567 = vmatpush.bf16.msra.mxu0 %v1817
  %2568 = vmatpush.bf16.msra.mxu0 %v1813
  %2569 = vmatpush.bf16.msra.mxu0 %v1809
  %2570 = vmatpush.bf16.msra.mxu0 %v1805
  %2571 = vmatpush.bf16.msra.mxu0 %v1801
  %2572 = vmatpush.bf16.msra.mxu0 %v1797
  %2573 = vmatpush.bf16.msra.mxu0 %v1793
  %2574 = vmatpush.bf16.msra.mxu0 %v1789
  %2575 = vmatmul.bf16.gmra.mxu0 %v532
  %v2576 = vpop.f32.mrf.mxu0
  %v2577 = vadd.f32 %v2558, %v2576
  %v2578 = vpop.f32.mrf.mxu0
  %v2579 = vadd.f32 %v2560, %v2578
  %2580 = vmatmul.bf16.gmra.mxu0 %v545
  %v2581 = vpop.f32.mrf.mxu0
  %v2582 = vadd.f32 %v2563, %v2581
  %v2583 = vpop.f32.mrf.mxu0
  %v2584 = vadd.f32 %v2565, %v2583
  %2585 = vdwg.mxu0
  %2586 = vmatpush.bf16.msra.mxu0 %v1849
  %2587 = vmatpush.bf16.msra.mxu0 %v1845
  %2588 = vmatpush.bf16.msra.mxu0 %v1841
  %2589 = vmatpush.bf16.msra.mxu0 %v1837
  %2590 = vmatpush.bf16.msra.mxu0 %v1833
  %2591 = vmatpush.bf16.msra.mxu0 %v1829
  %2592 = vmatpush.bf16.msra.mxu0 %v1825
  %2593 = vmatpush.bf16.msra.mxu0 %v1821
  %2594 = vmatmul.bf16.gmra.mxu0 %v533
  %v2595 = vpop.f32.mrf.mxu0
  %v2596 = vadd.f32 %v2577, %v2595
  %v2597 = vpop.f32.mrf.mxu0
  %v2598 = vadd.f32 %v2579, %v2597
  %2599 = vmatmul.bf16.gmra.mxu0 %v546
  %v2600 = vpop.f32.mrf.mxu0
  %v2601 = vadd.f32 %v2582, %v2600
  %v2602 = vpop.f32.mrf.mxu0
  %v2603 = vadd.f32 %v2584, %v2602
  %2604 = vdwg.mxu0
  %2605 = vmatpush.bf16.msra.mxu0 %v1881
  %2606 = vmatpush.bf16.msra.mxu0 %v1877
  %2607 = vmatpush.bf16.msra.mxu0 %v1873
  %2608 = vmatpush.bf16.msra.mxu0 %v1869
  %2609 = vmatpush.bf16.msra.mxu0 %v1865
  %2610 = vmatpush.bf16.msra.mxu0 %v1861
  %2611 = vmatpush.bf16.msra.mxu0 %v1857
  %2612 = vmatpush.bf16.msra.mxu0 %v1853
  %2613 = vmatmul.bf16.gmra.mxu0 %v534
  %v2614 = vpop.f32.mrf.mxu0
  %v2615 = vadd.f32 %v2596, %v2614
  %v2616 = vpop.f32.mrf.mxu0
  %v2617 = vadd.f32 %v2598, %v2616
  %2618 = vmatmul.bf16.gmra.mxu0 %v547
  %v2619 = vpop.f32.mrf.mxu0
  %v2620 = vadd.f32 %v2601, %v2619
  %v2621 = vpop.f32.mrf.mxu0
  %v2622 = vadd.f32 %v2603, %v2621
  %2623 = vdwg.mxu0
  %2624 = vmatpush.bf16.msra.mxu0 %v1913
  %2625 = vmatpush.bf16.msra.mxu0 %v1909
  %2626 = vmatpush.bf16.msra.mxu0 %v1905
  %2627 = vmatpush.bf16.msra.mxu0 %v1901
  %2628 = vmatpush.bf16.msra.mxu0 %v1897
  %2629 = vmatpush.bf16.msra.mxu0 %v1893
  %2630 = vmatpush.bf16.msra.mxu0 %v1889
  %2631 = vmatpush.bf16.msra.mxu0 %v1885
  %2632 = vmatmul.bf16.gmra.mxu0 %v535
  %v2633 = vpop.f32.mrf.mxu0
  %v2634 = vadd.f32 %v2615, %v2633
  %v2635 = vpop.f32.mrf.mxu0
  %v2636 = vadd.f32 %v2617, %v2635
  %2637 = vmatmul.bf16.gmra.mxu0 %v548
  %v2638 = vpop.f32.mrf.mxu0
  %v2639 = vadd.f32 %v2620, %v2638
  %v2640 = vpop.f32.mrf.mxu0
  %v2641 = vadd.f32 %v2622, %v2640
  %2642 = vdwg.mxu0
  %2643 = vmatpush.bf16.msra.mxu0 %v1945
  %2644 = vmatpush.bf16.msra.mxu0 %v1941
  %2645 = vmatpush.bf16.msra.mxu0 %v1937
  %2646 = vmatpush.bf16.msra.mxu0 %v1933
  %2647 = vmatpush.bf16.msra.mxu0 %v1929
  %2648 = vmatpush.bf16.msra.mxu0 %v1925
  %2649 = vmatpush.bf16.msra.mxu0 %v1921
  %2650 = vmatpush.bf16.msra.mxu0 %v1917
  %2651 = vmatmul.bf16.gmra.mxu0 %v536
  %v2652 = vpop.f32.mrf.mxu0
  %v2653 = vadd.f32 %v2634, %v2652
  %v2654 = vpop.f32.mrf.mxu0
  %v2655 = vadd.f32 %v2636, %v2654
  %2656 = vmatmul.bf16.gmra.mxu0 %v549
  %v2657 = vpop.f32.mrf.mxu0
  %v2658 = vadd.f32 %v2639, %v2657
  %v2659 = vpop.f32.mrf.mxu0
  %v2660 = vadd.f32 %v2641, %v2659
  %2661 = vdwg.mxu0
  %2662 = vmatpush.bf16.msra.mxu0 %v1977
  %2663 = vmatpush.bf16.msra.mxu0 %v1973
  %2664 = vmatpush.bf16.msra.mxu0 %v1969
  %2665 = vmatpush.bf16.msra.mxu0 %v1965
  %2666 = vmatpush.bf16.msra.mxu0 %v1961
  %2667 = vmatpush.bf16.msra.mxu0 %v1957
  %2668 = vmatpush.bf16.msra.mxu0 %v1953
  %2669 = vmatpush.bf16.msra.mxu0 %v1949
  %2670 = vmatmul.bf16.gmra.mxu0 %v537
  %v2671 = vpop.f32.mrf.mxu0
  %v2672 = vadd.f32 %v2653, %v2671
  %v2673 = vpop.f32.mrf.mxu0
  %v2674 = vadd.f32 %v2655, %v2673
  %2675 = vmatmul.bf16.gmra.mxu0 %v550
  %v2676 = vpop.f32.mrf.mxu0
  %v2677 = vadd.f32 %v2658, %v2676
  %v2678 = vpop.f32.mrf.mxu0
  %v2679 = vadd.f32 %v2660, %v2678
  %2680 = vdwg.mxu0
  %2681 = vmatpush.bf16.msra.mxu0 %v2009
  %2682 = vmatpush.bf16.msra.mxu0 %v2005
  %2683 = vmatpush.bf16.msra.mxu0 %v2001
  %2684 = vmatpush.bf16.msra.mxu0 %v1997
  %2685 = vmatpush.bf16.msra.mxu0 %v1993
  %2686 = vmatpush.bf16.msra.mxu0 %v1989
  %2687 = vmatpush.bf16.msra.mxu0 %v1985
  %2688 = vmatpush.bf16.msra.mxu0 %v1981
  %2689 = vmatmul.bf16.gmra.mxu0 %v538
  %v2690 = vpop.f32.mrf.mxu0
  %v2691 = vadd.f32 %v2672, %v2690
  %v2692 = vpop.f32.mrf.mxu0
  %v2693 = vadd.f32 %v2674, %v2692
  %2694 = vmatmul.bf16.gmra.mxu0 %v551
  %v2695 = vpop.f32.mrf.mxu0
  %v2696 = vadd.f32 %v2677, %v2695
  %v2697 = vpop.f32.mrf.mxu0
  %v2698 = vadd.f32 %v2679, %v2697
  %2699 = vdwg.mxu0
  %2700 = vmatpush.bf16.msra.mxu0 %v2041
  %2701 = vmatpush.bf16.msra.mxu0 %v2037
  %2702 = vmatpush.bf16.msra.mxu0 %v2033
  %2703 = vmatpush.bf16.msra.mxu0 %v2029
  %2704 = vmatpush.bf16.msra.mxu0 %v2025
  %2705 = vmatpush.bf16.msra.mxu0 %v2021
  %2706 = vmatpush.bf16.msra.mxu0 %v2017
  %2707 = vmatpush.bf16.msra.mxu0 %v2013
  %2708 = vmatmul.bf16.gmra.mxu0 %v539
  %v2709 = vpop.f32.mrf.mxu0
  %v2710 = vadd.f32 %v2691, %v2709
  %v2711 = vpop.f32.mrf.mxu0
  %v2712 = vadd.f32 %v2693, %v2711
  %2713 = vmatmul.bf16.gmra.mxu0 %v552
  %v2714 = vpop.f32.mrf.mxu0
  %v2715 = vadd.f32 %v2696, %v2714
  %v2716 = vpop.f32.mrf.mxu0
  %v2717 = vadd.f32 %v2698, %v2716
  %2718 = vdwg.mxu0
  %2719 = vmatpush.bf16.msra.mxu0 %v2073
  %2720 = vmatpush.bf16.msra.mxu0 %v2069
  %2721 = vmatpush.bf16.msra.mxu0 %v2065
  %2722 = vmatpush.bf16.msra.mxu0 %v2061
  %2723 = vmatpush.bf16.msra.mxu0 %v2057
  %2724 = vmatpush.bf16.msra.mxu0 %v2053
  %2725 = vmatpush.bf16.msra.mxu0 %v2049
  %2726 = vmatpush.bf16.msra.mxu0 %v2045
  %2727 = vmatmul.bf16.gmra.mxu0 %v540
  %v2728 = vpop.f32.mrf.mxu0
  %v2729 = vadd.f32 %v2710, %v2728
  %v2730 = vpop.f32.mrf.mxu0
  %v2731 = vadd.f32 %v2712, %v2730
  %2732 = vmatmul.bf16.gmra.mxu0 %v553
  %v2733 = vpop.f32.mrf.mxu0
  %v2734 = vadd.f32 %v2715, %v2733
  %v2735 = vpop.f32.mrf.mxu0
  %v2736 = vadd.f32 %v2717, %v2735
  %2737 = vdwg.mxu0
  %2738 = vmatpush.bf16.msra.mxu0 %v2105
  %2739 = vmatpush.bf16.msra.mxu0 %v2101
  %2740 = vmatpush.bf16.msra.mxu0 %v2097
  %2741 = vmatpush.bf16.msra.mxu0 %v2093
  %2742 = vmatpush.bf16.msra.mxu0 %v2089
  %2743 = vmatpush.bf16.msra.mxu0 %v2085
  %2744 = vmatpush.bf16.msra.mxu0 %v2081
  %2745 = vmatpush.bf16.msra.mxu0 %v2077
  %2746 = vmatmul.bf16.gmra.mxu0 %v541
  %v2747 = vpop.f32.mrf.mxu0
  %v2748 = vadd.f32 %v2729, %v2747
  %v2749 = vpop.f32.mrf.mxu0
  %v2750 = vadd.f32 %v2731, %v2749
  %2751 = vmatmul.bf16.gmra.mxu0 %v554
  %v2752 = vpop.f32.mrf.mxu0
  %v2753 = vadd.f32 %v2734, %v2752
  %v2754 = vpop.f32.mrf.mxu0
  %v2755 = vadd.f32 %v2736, %v2754
  %2756 = vdwg.mxu0
  %2757 = vmatpush.bf16.msra.mxu0 %v2137
  %2758 = vmatpush.bf16.msra.mxu0 %v2133
  %2759 = vmatpush.bf16.msra.mxu0 %v2129
  %2760 = vmatpush.bf16.msra.mxu0 %v2125
  %2761 = vmatpush.bf16.msra.mxu0 %v2121
  %2762 = vmatpush.bf16.msra.mxu0 %v2117
  %2763 = vmatpush.bf16.msra.mxu0 %v2113
  %2764 = vmatpush.bf16.msra.mxu0 %v2109
  %2765 = vmatmul.bf16.gmra.mxu0 %v542
  %v2766 = vpop.f32.mrf.mxu0
  %v2767 = vadd.f32 %v2748, %v2766
  %v2768 = vpop.f32.mrf.mxu0
  %v2769 = vadd.f32 %v2750, %v2768
  %2770 = vmatmul.bf16.gmra.mxu0 %v555
  %v2771 = vpop.f32.mrf.mxu0
  %v2772 = vadd.f32 %v2753, %v2771
  %v2773 = vpop.f32.mrf.mxu0
  %v2774 = vadd.f32 %v2755, %v2773
  %2775 = vdwg.mxu0
  %2776 = vmatpush.bf16.msra.mxu0 0
  %2777 = vmatpush.bf16.msra.mxu0 0
  %2778 = vmatpush.bf16.msra.mxu0 0
  %2779 = vmatpush.bf16.msra.mxu0 0
  %2780 = vmatpush.bf16.msra.mxu0 0
  %2781 = vmatpush.bf16.msra.mxu0 0
  %2782 = vmatpush.bf16.msra.mxu0 %v2145
  %2783 = vmatpush.bf16.msra.mxu0 %v2141
  %2784 = vmatmul.bf16.gmra.mxu0 %v2543
  %v2785 = vpop.f32.mrf.mxu0
  %v2786 = vadd.f32 %v2767, %v2785
  %v2787 = vpop.f32.mrf.mxu0
  %v2788 = vadd.f32 %v2769, %v2787
  %2789 = vmatmul.bf16.gmra.mxu0 %v2546
  %v2790 = vpop.f32.mrf.mxu0
  %v2791 = vadd.f32 %v2772, %v2790
  %v2792 = vpop.f32.mrf.mxu0
  %v2793 = vadd.f32 %v2774, %v2792
  %2794 = vdwg.mxu0
  %2795 = vmatpush.bf16.msra.mxu0 %v1786
  %2796 = vmatpush.bf16.msra.mxu0 %v1782
  %2797 = vmatpush.bf16.msra.mxu0 %v1778
  %2798 = vmatpush.bf16.msra.mxu0 %v1774
  %2799 = vmatpush.bf16.msra.mxu0 %v1770
  %2800 = vmatpush.bf16.msra.mxu0 %v1766
  %2801 = vmatpush.bf16.msra.mxu0 %v1762
  %2802 = vmatpush.bf16.msra.mxu0 %v1758
  %2803 = vmatmul.bf16.gmra.mxu0 %v531
  %v2804 = vpop.f32.mrf.mxu0
  %v2805 = vadd.f32 %v444, %v2804
  %v2806 = vpop.f32.mrf.mxu0
  %v2807 = vadd.f32 %v444, %v2806
  %2808 = vmatmul.bf16.gmra.mxu0 %v544
  %v2809 = vpop.f32.mrf.mxu0
  %v2810 = vadd.f32 %v444, %v2809
  %v2811 = vpop.f32.mrf.mxu0
  %v2812 = vadd.f32 %v444, %v2811
  %2813 = vdwg.mxu0
  %2814 = vmatpush.bf16.msra.mxu0 %v1818
  %2815 = vmatpush.bf16.msra.mxu0 %v1814
  %2816 = vmatpush.bf16.msra.mxu0 %v1810
  %2817 = vmatpush.bf16.msra.mxu0 %v1806
  %2818 = vmatpush.bf16.msra.mxu0 %v1802
  %2819 = vmatpush.bf16.msra.mxu0 %v1798
  %2820 = vmatpush.bf16.msra.mxu0 %v1794
  %2821 = vmatpush.bf16.msra.mxu0 %v1790
  %2822 = vmatmul.bf16.gmra.mxu0 %v532
  %v2823 = vpop.f32.mrf.mxu0
  %v2824 = vadd.f32 %v2805, %v2823
  %v2825 = vpop.f32.mrf.mxu0
  %v2826 = vadd.f32 %v2807, %v2825
  %2827 = vmatmul.bf16.gmra.mxu0 %v545
  %v2828 = vpop.f32.mrf.mxu0
  %v2829 = vadd.f32 %v2810, %v2828
  %v2830 = vpop.f32.mrf.mxu0
  %v2831 = vadd.f32 %v2812, %v2830
  %2832 = vdwg.mxu0
  %2833 = vmatpush.bf16.msra.mxu0 %v1850
  %2834 = vmatpush.bf16.msra.mxu0 %v1846
  %2835 = vmatpush.bf16.msra.mxu0 %v1842
  %2836 = vmatpush.bf16.msra.mxu0 %v1838
  %2837 = vmatpush.bf16.msra.mxu0 %v1834
  %2838 = vmatpush.bf16.msra.mxu0 %v1830
  %2839 = vmatpush.bf16.msra.mxu0 %v1826
  %2840 = vmatpush.bf16.msra.mxu0 %v1822
  %2841 = vmatmul.bf16.gmra.mxu0 %v533
  %v2842 = vpop.f32.mrf.mxu0
  %v2843 = vadd.f32 %v2824, %v2842
  %v2844 = vpop.f32.mrf.mxu0
  %v2845 = vadd.f32 %v2826, %v2844
  %2846 = vmatmul.bf16.gmra.mxu0 %v546
  %v2847 = vpop.f32.mrf.mxu0
  %v2848 = vadd.f32 %v2829, %v2847
  %v2849 = vpop.f32.mrf.mxu0
  %v2850 = vadd.f32 %v2831, %v2849
  %2851 = vdwg.mxu0
  %2852 = vmatpush.bf16.msra.mxu0 %v1882
  %2853 = vmatpush.bf16.msra.mxu0 %v1878
  %2854 = vmatpush.bf16.msra.mxu0 %v1874
  %2855 = vmatpush.bf16.msra.mxu0 %v1870
  %2856 = vmatpush.bf16.msra.mxu0 %v1866
  %2857 = vmatpush.bf16.msra.mxu0 %v1862
  %2858 = vmatpush.bf16.msra.mxu0 %v1858
  %2859 = vmatpush.bf16.msra.mxu0 %v1854
  %2860 = vmatmul.bf16.gmra.mxu0 %v534
  %v2861 = vpop.f32.mrf.mxu0
  %v2862 = vadd.f32 %v2843, %v2861
  %v2863 = vpop.f32.mrf.mxu0
  %v2864 = vadd.f32 %v2845, %v2863
  %2865 = vmatmul.bf16.gmra.mxu0 %v547
  %v2866 = vpop.f32.mrf.mxu0
  %v2867 = vadd.f32 %v2848, %v2866
  %v2868 = vpop.f32.mrf.mxu0
  %v2869 = vadd.f32 %v2850, %v2868
  %2870 = vdwg.mxu0
  %2871 = vmatpush.bf16.msra.mxu0 %v1914
  %2872 = vmatpush.bf16.msra.mxu0 %v1910
  %2873 = vmatpush.bf16.msra.mxu0 %v1906
  %2874 = vmatpush.bf16.msra.mxu0 %v1902
  %2875 = vmatpush.bf16.msra.mxu0 %v1898
  %2876 = vmatpush.bf16.msra.mxu0 %v1894
  %2877 = vmatpush.bf16.msra.mxu0 %v1890
  %2878 = vmatpush.bf16.msra.mxu0 %v1886
  %2879 = vmatmul.bf16.gmra.mxu0 %v535
  %v2880 = vpop.f32.mrf.mxu0
  %v2881 = vadd.f32 %v2862, %v2880
  %v2882 = vpop.f32.mrf.mxu0
  %v2883 = vadd.f32 %v2864, %v2882
  %2884 = vmatmul.bf16.gmra.mxu0 %v548
  %v2885 = vpop.f32.mrf.mxu0
  %v2886 = vadd.f32 %v2867, %v2885
  %v2887 = vpop.f32.mrf.mxu0
  %v2888 = vadd.f32 %v2869, %v2887
  %2889 = vdwg.mxu0
  %2890 = vmatpush.bf16.msra.mxu0 %v1946
  %2891 = vmatpush.bf16.msra.mxu0 %v1942
  %2892 = vmatpush.bf16.msra.mxu0 %v1938
  %2893 = vmatpush.bf16.msra.mxu0 %v1934
  %2894 = vmatpush.bf16.msra.mxu0 %v1930
  %2895 = vmatpush.bf16.msra.mxu0 %v1926
  %2896 = vmatpush.bf16.msra.mxu0 %v1922
  %2897 = vmatpush.bf16.msra.mxu0 %v1918
  %2898 = vmatmul.bf16.gmra.mxu0 %v536
  %v2899 = vpop.f32.mrf.mxu0
  %v2900 = vadd.f32 %v2881, %v2899
  %v2901 = vpop.f32.mrf.mxu0
  %v2902 = vadd.f32 %v2883, %v2901
  %2903 = vmatmul.bf16.gmra.mxu0 %v549
  %v2904 = vpop.f32.mrf.mxu0
  %v2905 = vadd.f32 %v2886, %v2904
  %v2906 = vpop.f32.mrf.mxu0
  %v2907 = vadd.f32 %v2888, %v2906
  %2908 = vdwg.mxu0
  %2909 = vmatpush.bf16.msra.mxu0 %v1978
  %2910 = vmatpush.bf16.msra.mxu0 %v1974
  %2911 = vmatpush.bf16.msra.mxu0 %v1970
  %2912 = vmatpush.bf16.msra.mxu0 %v1966
  %2913 = vmatpush.bf16.msra.mxu0 %v1962
  %2914 = vmatpush.bf16.msra.mxu0 %v1958
  %2915 = vmatpush.bf16.msra.mxu0 %v1954
  %2916 = vmatpush.bf16.msra.mxu0 %v1950
  %2917 = vmatmul.bf16.gmra.mxu0 %v537
  %v2918 = vpop.f32.mrf.mxu0
  %v2919 = vadd.f32 %v2900, %v2918
  %v2920 = vpop.f32.mrf.mxu0
  %v2921 = vadd.f32 %v2902, %v2920
  %2922 = vmatmul.bf16.gmra.mxu0 %v550
  %v2923 = vpop.f32.mrf.mxu0
  %v2924 = vadd.f32 %v2905, %v2923
  %v2925 = vpop.f32.mrf.mxu0
  %v2926 = vadd.f32 %v2907, %v2925
  %2927 = vdwg.mxu0
  %2928 = vmatpush.bf16.msra.mxu0 %v2010
  %2929 = vmatpush.bf16.msra.mxu0 %v2006
  %2930 = vmatpush.bf16.msra.mxu0 %v2002
  %2931 = vmatpush.bf16.msra.mxu0 %v1998
  %2932 = vmatpush.bf16.msra.mxu0 %v1994
  %2933 = vmatpush.bf16.msra.mxu0 %v1990
  %2934 = vmatpush.bf16.msra.mxu0 %v1986
  %2935 = vmatpush.bf16.msra.mxu0 %v1982
  %2936 = vmatmul.bf16.gmra.mxu0 %v538
  %v2937 = vpop.f32.mrf.mxu0
  %v2938 = vadd.f32 %v2919, %v2937
  %v2939 = vpop.f32.mrf.mxu0
  %v2940 = vadd.f32 %v2921, %v2939
  %2941 = vmatmul.bf16.gmra.mxu0 %v551
  %v2942 = vpop.f32.mrf.mxu0
  %v2943 = vadd.f32 %v2924, %v2942
  %v2944 = vpop.f32.mrf.mxu0
  %v2945 = vadd.f32 %v2926, %v2944
  %2946 = vdwg.mxu0
  %2947 = vmatpush.bf16.msra.mxu0 %v2042
  %2948 = vmatpush.bf16.msra.mxu0 %v2038
  %2949 = vmatpush.bf16.msra.mxu0 %v2034
  %2950 = vmatpush.bf16.msra.mxu0 %v2030
  %2951 = vmatpush.bf16.msra.mxu0 %v2026
  %2952 = vmatpush.bf16.msra.mxu0 %v2022
  %2953 = vmatpush.bf16.msra.mxu0 %v2018
  %2954 = vmatpush.bf16.msra.mxu0 %v2014
  %2955 = vmatmul.bf16.gmra.mxu0 %v539
  %v2956 = vpop.f32.mrf.mxu0
  %v2957 = vadd.f32 %v2938, %v2956
  %v2958 = vpop.f32.mrf.mxu0
  %v2959 = vadd.f32 %v2940, %v2958
  %2960 = vmatmul.bf16.gmra.mxu0 %v552
  %v2961 = vpop.f32.mrf.mxu0
  %v2962 = vadd.f32 %v2943, %v2961
  %v2963 = vpop.f32.mrf.mxu0
  %v2964 = vadd.f32 %v2945, %v2963
  %2965 = vdwg.mxu0
  %2966 = vmatpush.bf16.msra.mxu0 %v2074
  %2967 = vmatpush.bf16.msra.mxu0 %v2070
  %2968 = vmatpush.bf16.msra.mxu0 %v2066
  %2969 = vmatpush.bf16.msra.mxu0 %v2062
  %2970 = vmatpush.bf16.msra.mxu0 %v2058
  %2971 = vmatpush.bf16.msra.mxu0 %v2054
  %2972 = vmatpush.bf16.msra.mxu0 %v2050
  %2973 = vmatpush.bf16.msra.mxu0 %v2046
  %2974 = vmatmul.bf16.gmra.mxu0 %v540
  %v2975 = vpop.f32.mrf.mxu0
  %v2976 = vadd.f32 %v2957, %v2975
  %v2977 = vpop.f32.mrf.mxu0
  %v2978 = vadd.f32 %v2959, %v2977
  %2979 = vmatmul.bf16.gmra.mxu0 %v553
  %v2980 = vpop.f32.mrf.mxu0
  %v2981 = vadd.f32 %v2962, %v2980
  %v2982 = vpop.f32.mrf.mxu0
  %v2983 = vadd.f32 %v2964, %v2982
  %2984 = vdwg.mxu0
  %2985 = vmatpush.bf16.msra.mxu0 %v2106
  %2986 = vmatpush.bf16.msra.mxu0 %v2102
  %2987 = vmatpush.bf16.msra.mxu0 %v2098
  %2988 = vmatpush.bf16.msra.mxu0 %v2094
  %2989 = vmatpush.bf16.msra.mxu0 %v2090
  %2990 = vmatpush.bf16.msra.mxu0 %v2086
  %2991 = vmatpush.bf16.msra.mxu0 %v2082
  %2992 = vmatpush.bf16.msra.mxu0 %v2078
  %2993 = vmatmul.bf16.gmra.mxu0 %v541
  %v2994 = vpop.f32.mrf.mxu0
  %v2995 = vadd.f32 %v2976, %v2994
  %v2996 = vpop.f32.mrf.mxu0
  %v2997 = vadd.f32 %v2978, %v2996
  %2998 = vmatmul.bf16.gmra.mxu0 %v554
  %v2999 = vpop.f32.mrf.mxu0
  %v3000 = vadd.f32 %v2981, %v2999
  %v3001 = vpop.f32.mrf.mxu0
  %v3002 = vadd.f32 %v2983, %v3001
  %3003 = vdwg.mxu0
  %3004 = vmatpush.bf16.msra.mxu0 %v2138
  %3005 = vmatpush.bf16.msra.mxu0 %v2134
  %3006 = vmatpush.bf16.msra.mxu0 %v2130
  %3007 = vmatpush.bf16.msra.mxu0 %v2126
  %3008 = vmatpush.bf16.msra.mxu0 %v2122
  %3009 = vmatpush.bf16.msra.mxu0 %v2118
  %3010 = vmatpush.bf16.msra.mxu0 %v2114
  %3011 = vmatpush.bf16.msra.mxu0 %v2110
  %3012 = vmatmul.bf16.gmra.mxu0 %v542
  %v3013 = vpop.f32.mrf.mxu0
  %v3014 = vadd.f32 %v2995, %v3013
  %v3015 = vpop.f32.mrf.mxu0
  %v3016 = vadd.f32 %v2997, %v3015
  %3017 = vmatmul.bf16.gmra.mxu0 %v555
  %v3018 = vpop.f32.mrf.mxu0
  %v3019 = vadd.f32 %v3000, %v3018
  %v3020 = vpop.f32.mrf.mxu0
  %v3021 = vadd.f32 %v3002, %v3020
  %3022 = vdwg.mxu0
  %3023 = vmatpush.bf16.msra.mxu0 0
  %3024 = vmatpush.bf16.msra.mxu0 0
  %3025 = vmatpush.bf16.msra.mxu0 0
  %3026 = vmatpush.bf16.msra.mxu0 0
  %3027 = vmatpush.bf16.msra.mxu0 0
  %3028 = vmatpush.bf16.msra.mxu0 0
  %3029 = vmatpush.bf16.msra.mxu0 %v2146
  %3030 = vmatpush.bf16.msra.mxu0 %v2142
  %3031 = vmatmul.bf16.gmra.mxu0 %v2543
  %v3032 = vpop.f32.mrf.mxu0
  %v3033 = vadd.f32 %v3014, %v3032
  %v3034 = vpop.f32.mrf.mxu0
  %v3035 = vadd.f32 %v3016, %v3034
  %3036 = vmatmul.bf16.gmra.mxu0 %v2546
  %v3037 = vpop.f32.mrf.mxu0
  %v3038 = vadd.f32 %v3019, %v3037
  %v3039 = vpop.f32.mrf.mxu0
  %v3040 = vadd.f32 %v3021, %v3039
  %3041 = vdwg.mxu0
  %3042 = vmatpush.bf16.msra.mxu0 %v1787
  %3043 = vmatpush.bf16.msra.mxu0 %v1783
  %3044 = vmatpush.bf16.msra.mxu0 %v1779
  %3045 = vmatpush.bf16.msra.mxu0 %v1775
  %3046 = vmatpush.bf16.msra.mxu0 %v1771
  %3047 = vmatpush.bf16.msra.mxu0 %v1767
  %3048 = vmatpush.bf16.msra.mxu0 %v1763
  %3049 = vmatpush.bf16.msra.mxu0 %v1759
  %3050 = vmatmul.bf16.gmra.mxu0 %v531
  %v3051 = vpop.f32.mrf.mxu0
  %v3052 = vadd.f32 %v445, %v3051
  %v3053 = vpop.f32.mrf.mxu0
  %v3054 = vadd.f32 %v445, %v3053
  %3055 = vmatmul.bf16.gmra.mxu0 %v544
  %v3056 = vpop.f32.mrf.mxu0
  %v3057 = vadd.f32 %v445, %v3056
  %v3058 = vpop.f32.mrf.mxu0
  %v3059 = vadd.f32 %v445, %v3058
  %3060 = vdwg.mxu0
  %3061 = vmatpush.bf16.msra.mxu0 %v1819
  %3062 = vmatpush.bf16.msra.mxu0 %v1815
  %3063 = vmatpush.bf16.msra.mxu0 %v1811
  %3064 = vmatpush.bf16.msra.mxu0 %v1807
  %3065 = vmatpush.bf16.msra.mxu0 %v1803
  %3066 = vmatpush.bf16.msra.mxu0 %v1799
  %3067 = vmatpush.bf16.msra.mxu0 %v1795
  %3068 = vmatpush.bf16.msra.mxu0 %v1791
  %3069 = vmatmul.bf16.gmra.mxu0 %v532
  %v3070 = vpop.f32.mrf.mxu0
  %v3071 = vadd.f32 %v3052, %v3070
  %v3072 = vpop.f32.mrf.mxu0
  %v3073 = vadd.f32 %v3054, %v3072
  %3074 = vmatmul.bf16.gmra.mxu0 %v545
  %v3075 = vpop.f32.mrf.mxu0
  %v3076 = vadd.f32 %v3057, %v3075
  %v3077 = vpop.f32.mrf.mxu0
  %v3078 = vadd.f32 %v3059, %v3077
  %3079 = vdwg.mxu0
  %3080 = vmatpush.bf16.msra.mxu0 %v1851
  %3081 = vmatpush.bf16.msra.mxu0 %v1847
  %3082 = vmatpush.bf16.msra.mxu0 %v1843
  %3083 = vmatpush.bf16.msra.mxu0 %v1839
  %3084 = vmatpush.bf16.msra.mxu0 %v1835
  %3085 = vmatpush.bf16.msra.mxu0 %v1831
  %3086 = vmatpush.bf16.msra.mxu0 %v1827
  %3087 = vmatpush.bf16.msra.mxu0 %v1823
  %3088 = vmatmul.bf16.gmra.mxu0 %v533
  %v3089 = vpop.f32.mrf.mxu0
  %v3090 = vadd.f32 %v3071, %v3089
  %v3091 = vpop.f32.mrf.mxu0
  %v3092 = vadd.f32 %v3073, %v3091
  %3093 = vmatmul.bf16.gmra.mxu0 %v546
  %v3094 = vpop.f32.mrf.mxu0
  %v3095 = vadd.f32 %v3076, %v3094
  %v3096 = vpop.f32.mrf.mxu0
  %v3097 = vadd.f32 %v3078, %v3096
  %3098 = vdwg.mxu0
  %3099 = vmatpush.bf16.msra.mxu0 %v1883
  %3100 = vmatpush.bf16.msra.mxu0 %v1879
  %3101 = vmatpush.bf16.msra.mxu0 %v1875
  %3102 = vmatpush.bf16.msra.mxu0 %v1871
  %3103 = vmatpush.bf16.msra.mxu0 %v1867
  %3104 = vmatpush.bf16.msra.mxu0 %v1863
  %3105 = vmatpush.bf16.msra.mxu0 %v1859
  %3106 = vmatpush.bf16.msra.mxu0 %v1855
  %3107 = vmatmul.bf16.gmra.mxu0 %v534
  %v3108 = vpop.f32.mrf.mxu0
  %v3109 = vadd.f32 %v3090, %v3108
  %v3110 = vpop.f32.mrf.mxu0
  %v3111 = vadd.f32 %v3092, %v3110
  %3112 = vmatmul.bf16.gmra.mxu0 %v547
  %v3113 = vpop.f32.mrf.mxu0
  %v3114 = vadd.f32 %v3095, %v3113
  %v3115 = vpop.f32.mrf.mxu0
  %v3116 = vadd.f32 %v3097, %v3115
  %3117 = vdwg.mxu0
  %3118 = vmatpush.bf16.msra.mxu0 %v1915
  %3119 = vmatpush.bf16.msra.mxu0 %v1911
  %3120 = vmatpush.bf16.msra.mxu0 %v1907
  %3121 = vmatpush.bf16.msra.mxu0 %v1903
  %3122 = vmatpush.bf16.msra.mxu0 %v1899
  %3123 = vmatpush.bf16.msra.mxu0 %v1895
  %3124 = vmatpush.bf16.msra.mxu0 %v1891
  %3125 = vmatpush.bf16.msra.mxu0 %v1887
  %3126 = vmatmul.bf16.gmra.mxu0 %v535
  %v3127 = vpop.f32.mrf.mxu0
  %v3128 = vadd.f32 %v3109, %v3127
  %v3129 = vpop.f32.mrf.mxu0
  %v3130 = vadd.f32 %v3111, %v3129
  %3131 = vmatmul.bf16.gmra.mxu0 %v548
  %v3132 = vpop.f32.mrf.mxu0
  %v3133 = vadd.f32 %v3114, %v3132
  %v3134 = vpop.f32.mrf.mxu0
  %v3135 = vadd.f32 %v3116, %v3134
  %3136 = vdwg.mxu0
  %3137 = vmatpush.bf16.msra.mxu0 %v1947
  %3138 = vmatpush.bf16.msra.mxu0 %v1943
  %3139 = vmatpush.bf16.msra.mxu0 %v1939
  %3140 = vmatpush.bf16.msra.mxu0 %v1935
  %3141 = vmatpush.bf16.msra.mxu0 %v1931
  %3142 = vmatpush.bf16.msra.mxu0 %v1927
  %3143 = vmatpush.bf16.msra.mxu0 %v1923
  %3144 = vmatpush.bf16.msra.mxu0 %v1919
  %3145 = vmatmul.bf16.gmra.mxu0 %v536
  %v3146 = vpop.f32.mrf.mxu0
  %v3147 = vadd.f32 %v3128, %v3146
  %v3148 = vpop.f32.mrf.mxu0
  %v3149 = vadd.f32 %v3130, %v3148
  %3150 = vmatmul.bf16.gmra.mxu0 %v549
  %v3151 = vpop.f32.mrf.mxu0
  %v3152 = vadd.f32 %v3133, %v3151
  %v3153 = vpop.f32.mrf.mxu0
  %v3154 = vadd.f32 %v3135, %v3153
  %3155 = vdwg.mxu0
  %3156 = vmatpush.bf16.msra.mxu0 %v1979
  %3157 = vmatpush.bf16.msra.mxu0 %v1975
  %3158 = vmatpush.bf16.msra.mxu0 %v1971
  %3159 = vmatpush.bf16.msra.mxu0 %v1967
  %3160 = vmatpush.bf16.msra.mxu0 %v1963
  %3161 = vmatpush.bf16.msra.mxu0 %v1959
  %3162 = vmatpush.bf16.msra.mxu0 %v1955
  %3163 = vmatpush.bf16.msra.mxu0 %v1951
  %3164 = vmatmul.bf16.gmra.mxu0 %v537
  %v3165 = vpop.f32.mrf.mxu0
  %v3166 = vadd.f32 %v3147, %v3165
  %v3167 = vpop.f32.mrf.mxu0
  %v3168 = vadd.f32 %v3149, %v3167
  %3169 = vmatmul.bf16.gmra.mxu0 %v550
  %v3170 = vpop.f32.mrf.mxu0
  %v3171 = vadd.f32 %v3152, %v3170
  %v3172 = vpop.f32.mrf.mxu0
  %v3173 = vadd.f32 %v3154, %v3172
  %3174 = vdwg.mxu0
  %3175 = vmatpush.bf16.msra.mxu0 %v2011
  %3176 = vmatpush.bf16.msra.mxu0 %v2007
  %3177 = vmatpush.bf16.msra.mxu0 %v2003
  %3178 = vmatpush.bf16.msra.mxu0 %v1999
  %3179 = vmatpush.bf16.msra.mxu0 %v1995
  %3180 = vmatpush.bf16.msra.mxu0 %v1991
  %3181 = vmatpush.bf16.msra.mxu0 %v1987
  %3182 = vmatpush.bf16.msra.mxu0 %v1983
  %3183 = vmatmul.bf16.gmra.mxu0 %v538
  %v3184 = vpop.f32.mrf.mxu0
  %v3185 = vadd.f32 %v3166, %v3184
  %v3186 = vpop.f32.mrf.mxu0
  %v3187 = vadd.f32 %v3168, %v3186
  %3188 = vmatmul.bf16.gmra.mxu0 %v551
  %v3189 = vpop.f32.mrf.mxu0
  %v3190 = vadd.f32 %v3171, %v3189
  %v3191 = vpop.f32.mrf.mxu0
  %v3192 = vadd.f32 %v3173, %v3191
  %3193 = vdwg.mxu0
  %3194 = vmatpush.bf16.msra.mxu0 %v2043
  %3195 = vmatpush.bf16.msra.mxu0 %v2039
  %3196 = vmatpush.bf16.msra.mxu0 %v2035
  %3197 = vmatpush.bf16.msra.mxu0 %v2031
  %3198 = vmatpush.bf16.msra.mxu0 %v2027
  %3199 = vmatpush.bf16.msra.mxu0 %v2023
  %3200 = vmatpush.bf16.msra.mxu0 %v2019
  %3201 = vmatpush.bf16.msra.mxu0 %v2015
  %3202 = vmatmul.bf16.gmra.mxu0 %v539
  %v3203 = vpop.f32.mrf.mxu0
  %v3204 = vadd.f32 %v3185, %v3203
  %v3205 = vpop.f32.mrf.mxu0
  %v3206 = vadd.f32 %v3187, %v3205
  %3207 = vmatmul.bf16.gmra.mxu0 %v552
  %v3208 = vpop.f32.mrf.mxu0
  %v3209 = vadd.f32 %v3190, %v3208
  %v3210 = vpop.f32.mrf.mxu0
  %v3211 = vadd.f32 %v3192, %v3210
  %3212 = vdwg.mxu0
  %3213 = vmatpush.bf16.msra.mxu0 %v2075
  %3214 = vmatpush.bf16.msra.mxu0 %v2071
  %3215 = vmatpush.bf16.msra.mxu0 %v2067
  %3216 = vmatpush.bf16.msra.mxu0 %v2063
  %3217 = vmatpush.bf16.msra.mxu0 %v2059
  %3218 = vmatpush.bf16.msra.mxu0 %v2055
  %3219 = vmatpush.bf16.msra.mxu0 %v2051
  %3220 = vmatpush.bf16.msra.mxu0 %v2047
  %3221 = vmatmul.bf16.gmra.mxu0 %v540
  %v3222 = vpop.f32.mrf.mxu0
  %v3223 = vadd.f32 %v3204, %v3222
  %v3224 = vpop.f32.mrf.mxu0
  %v3225 = vadd.f32 %v3206, %v3224
  %3226 = vmatmul.bf16.gmra.mxu0 %v553
  %v3227 = vpop.f32.mrf.mxu0
  %v3228 = vadd.f32 %v3209, %v3227
  %v3229 = vpop.f32.mrf.mxu0
  %v3230 = vadd.f32 %v3211, %v3229
  %3231 = vdwg.mxu0
  %3232 = vmatpush.bf16.msra.mxu0 %v2107
  %3233 = vmatpush.bf16.msra.mxu0 %v2103
  %3234 = vmatpush.bf16.msra.mxu0 %v2099
  %3235 = vmatpush.bf16.msra.mxu0 %v2095
  %3236 = vmatpush.bf16.msra.mxu0 %v2091
  %3237 = vmatpush.bf16.msra.mxu0 %v2087
  %3238 = vmatpush.bf16.msra.mxu0 %v2083
  %3239 = vmatpush.bf16.msra.mxu0 %v2079
  %3240 = vmatmul.bf16.gmra.mxu0 %v541
  %v3241 = vpop.f32.mrf.mxu0
  %v3242 = vadd.f32 %v3223, %v3241
  %v3243 = vpop.f32.mrf.mxu0
  %v3244 = vadd.f32 %v3225, %v3243
  %3245 = vmatmul.bf16.gmra.mxu0 %v554
  %v3246 = vpop.f32.mrf.mxu0
  %v3247 = vadd.f32 %v3228, %v3246
  %v3248 = vpop.f32.mrf.mxu0
  %v3249 = vadd.f32 %v3230, %v3248
  %3250 = vdwg.mxu0
  %3251 = vmatpush.bf16.msra.mxu0 %v2139
  %3252 = vmatpush.bf16.msra.mxu0 %v2135
  %3253 = vmatpush.bf16.msra.mxu0 %v2131
  %3254 = vmatpush.bf16.msra.mxu0 %v2127
  %3255 = vmatpush.bf16.msra.mxu0 %v2123
  %3256 = vmatpush.bf16.msra.mxu0 %v2119
  %3257 = vmatpush.bf16.msra.mxu0 %v2115
  %3258 = vmatpush.bf16.msra.mxu0 %v2111
  %3259 = vmatmul.bf16.gmra.mxu0 %v542
  %v3260 = vpop.f32.mrf.mxu0
  %v3261 = vadd.f32 %v3242, %v3260
  %v3262 = vpop.f32.mrf.mxu0
  %v3263 = vadd.f32 %v3244, %v3262
  %3264 = vmatmul.bf16.gmra.mxu0 %v555
  %v3265 = vpop.f32.mrf.mxu0
  %v3266 = vadd.f32 %v3247, %v3265
  %v3267 = vpop.f32.mrf.mxu0
  %v3268 = vadd.f32 %v3249, %v3267
  %3269 = vdwg.mxu0
  %3270 = vmatpush.bf16.msra.mxu0 0
  %3271 = vmatpush.bf16.msra.mxu0 0
  %3272 = vmatpush.bf16.msra.mxu0 0
  %3273 = vmatpush.bf16.msra.mxu0 0
  %3274 = vmatpush.bf16.msra.mxu0 0
  %3275 = vmatpush.bf16.msra.mxu0 0
  %3276 = vmatpush.bf16.msra.mxu0 %v2147
  %3277 = vmatpush.bf16.msra.mxu0 %v2143
  %3278 = vmatmul.bf16.gmra.mxu0 %v2543
  %v3279 = vpop.f32.mrf.mxu0
  %v3280 = vadd.f32 %v3261, %v3279
  %v3281 = vpop.f32.mrf.mxu0
  %v3282 = vadd.f32 %v3263, %v3281
  %3283 = vmatmul.bf16.gmra.mxu0 %v2546
  %v3284 = vpop.f32.mrf.mxu0
  %v3285 = vadd.f32 %v3266, %v3284
  %v3286 = vpop.f32.mrf.mxu0
  %v3287 = vadd.f32 %v3268, %v3286
  %3288 = vdwg.mxu0
  %3289 = vmatpush.bf16.msra.mxu0 %v1788
  %3290 = vmatpush.bf16.msra.mxu0 %v1784
  %3291 = vmatpush.bf16.msra.mxu0 %v1780
  %3292 = vmatpush.bf16.msra.mxu0 %v1776
  %3293 = vmatpush.bf16.msra.mxu0 %v1772
  %3294 = vmatpush.bf16.msra.mxu0 %v1768
  %3295 = vmatpush.bf16.msra.mxu0 %v1764
  %3296 = vmatpush.bf16.msra.mxu0 %v1760
  %3297 = vmatmul.bf16.gmra.mxu0 %v531
  %v3298 = vpop.f32.mrf.mxu0
  %v3299 = vadd.f32 %v446, %v3298
  %v3300 = vpop.f32.mrf.mxu0
  %v3301 = vadd.f32 %v446, %v3300
  %3302 = vmatmul.bf16.gmra.mxu0 %v544
  %v3303 = vpop.f32.mrf.mxu0
  %v3304 = vadd.f32 %v446, %v3303
  %v3305 = vpop.f32.mrf.mxu0
  %v3306 = vadd.f32 %v446, %v3305
  %3307 = vdwg.mxu0
  %3308 = vmatpush.bf16.msra.mxu0 %v1820
  %3309 = vmatpush.bf16.msra.mxu0 %v1816
  %3310 = vmatpush.bf16.msra.mxu0 %v1812
  %3311 = vmatpush.bf16.msra.mxu0 %v1808
  %3312 = vmatpush.bf16.msra.mxu0 %v1804
  %3313 = vmatpush.bf16.msra.mxu0 %v1800
  %3314 = vmatpush.bf16.msra.mxu0 %v1796
  %3315 = vmatpush.bf16.msra.mxu0 %v1792
  %3316 = vmatmul.bf16.gmra.mxu0 %v532
  %v3317 = vpop.f32.mrf.mxu0
  %v3318 = vadd.f32 %v3299, %v3317
  %v3319 = vpop.f32.mrf.mxu0
  %v3320 = vadd.f32 %v3301, %v3319
  %3321 = vmatmul.bf16.gmra.mxu0 %v545
  %v3322 = vpop.f32.mrf.mxu0
  %v3323 = vadd.f32 %v3304, %v3322
  %v3324 = vpop.f32.mrf.mxu0
  %v3325 = vadd.f32 %v3306, %v3324
  %3326 = vdwg.mxu0
  %3327 = vmatpush.bf16.msra.mxu0 %v1852
  %3328 = vmatpush.bf16.msra.mxu0 %v1848
  %3329 = vmatpush.bf16.msra.mxu0 %v1844
  %3330 = vmatpush.bf16.msra.mxu0 %v1840
  %3331 = vmatpush.bf16.msra.mxu0 %v1836
  %3332 = vmatpush.bf16.msra.mxu0 %v1832
  %3333 = vmatpush.bf16.msra.mxu0 %v1828
  %3334 = vmatpush.bf16.msra.mxu0 %v1824
  %3335 = vmatmul.bf16.gmra.mxu0 %v533
  %v3336 = vpop.f32.mrf.mxu0
  %v3337 = vadd.f32 %v3318, %v3336
  %v3338 = vpop.f32.mrf.mxu0
  %v3339 = vadd.f32 %v3320, %v3338
  %3340 = vmatmul.bf16.gmra.mxu0 %v546
  %v3341 = vpop.f32.mrf.mxu0
  %v3342 = vadd.f32 %v3323, %v3341
  %v3343 = vpop.f32.mrf.mxu0
  %v3344 = vadd.f32 %v3325, %v3343
  %3345 = vdwg.mxu0
  %3346 = vmatpush.bf16.msra.mxu0 %v1884
  %3347 = vmatpush.bf16.msra.mxu0 %v1880
  %3348 = vmatpush.bf16.msra.mxu0 %v1876
  %3349 = vmatpush.bf16.msra.mxu0 %v1872
  %3350 = vmatpush.bf16.msra.mxu0 %v1868
  %3351 = vmatpush.bf16.msra.mxu0 %v1864
  %3352 = vmatpush.bf16.msra.mxu0 %v1860
  %3353 = vmatpush.bf16.msra.mxu0 %v1856
  %3354 = vmatmul.bf16.gmra.mxu0 %v534
  %v3355 = vpop.f32.mrf.mxu0
  %v3356 = vadd.f32 %v3337, %v3355
  %v3357 = vpop.f32.mrf.mxu0
  %v3358 = vadd.f32 %v3339, %v3357
  %3359 = vmatmul.bf16.gmra.mxu0 %v547
  %v3360 = vpop.f32.mrf.mxu0
  %v3361 = vadd.f32 %v3342, %v3360
  %v3362 = vpop.f32.mrf.mxu0
  %v3363 = vadd.f32 %v3344, %v3362
  %3364 = vdwg.mxu0
  %3365 = vmatpush.bf16.msra.mxu0 %v1916
  %3366 = vmatpush.bf16.msra.mxu0 %v1912
  %3367 = vmatpush.bf16.msra.mxu0 %v1908
  %3368 = vmatpush.bf16.msra.mxu0 %v1904
  %3369 = vmatpush.bf16.msra.mxu0 %v1900
  %3370 = vmatpush.bf16.msra.mxu0 %v1896
  %3371 = vmatpush.bf16.msra.mxu0 %v1892
  %3372 = vmatpush.bf16.msra.mxu0 %v1888
  %3373 = vmatmul.bf16.gmra.mxu0 %v535
  %v3374 = vpop.f32.mrf.mxu0
  %v3375 = vadd.f32 %v3356, %v3374
  %v3376 = vpop.f32.mrf.mxu0
  %v3377 = vadd.f32 %v3358, %v3376
  %3378 = vmatmul.bf16.gmra.mxu0 %v548
  %v3379 = vpop.f32.mrf.mxu0
  %v3380 = vadd.f32 %v3361, %v3379
  %v3381 = vpop.f32.mrf.mxu0
  %v3382 = vadd.f32 %v3363, %v3381
  %3383 = vdwg.mxu0
  %3384 = vmatpush.bf16.msra.mxu0 %v1948
  %3385 = vmatpush.bf16.msra.mxu0 %v1944
  %3386 = vmatpush.bf16.msra.mxu0 %v1940
  %3387 = vmatpush.bf16.msra.mxu0 %v1936
  %3388 = vmatpush.bf16.msra.mxu0 %v1932
  %3389 = vmatpush.bf16.msra.mxu0 %v1928
  %3390 = vmatpush.bf16.msra.mxu0 %v1924
  %3391 = vmatpush.bf16.msra.mxu0 %v1920
  %3392 = vmatmul.bf16.gmra.mxu0 %v536
  %v3393 = vpop.f32.mrf.mxu0
  %v3394 = vadd.f32 %v3375, %v3393
  %v3395 = vpop.f32.mrf.mxu0
  %v3396 = vadd.f32 %v3377, %v3395
  %3397 = vmatmul.bf16.gmra.mxu0 %v549
  %v3398 = vpop.f32.mrf.mxu0
  %v3399 = vadd.f32 %v3380, %v3398
  %v3400 = vpop.f32.mrf.mxu0
  %v3401 = vadd.f32 %v3382, %v3400
  %3402 = vdwg.mxu0
  %3403 = vmatpush.bf16.msra.mxu0 %v1980
  %3404 = vmatpush.bf16.msra.mxu0 %v1976
  %3405 = vmatpush.bf16.msra.mxu0 %v1972
  %3406 = vmatpush.bf16.msra.mxu0 %v1968
  %3407 = vmatpush.bf16.msra.mxu0 %v1964
  %3408 = vmatpush.bf16.msra.mxu0 %v1960
  %3409 = vmatpush.bf16.msra.mxu0 %v1956
  %3410 = vmatpush.bf16.msra.mxu0 %v1952
  %3411 = vmatmul.bf16.gmra.mxu0 %v537
  %v3412 = vpop.f32.mrf.mxu0
  %v3413 = vadd.f32 %v3394, %v3412
  %v3414 = vpop.f32.mrf.mxu0
  %v3415 = vadd.f32 %v3396, %v3414
  %3416 = vmatmul.bf16.gmra.mxu0 %v550
  %v3417 = vpop.f32.mrf.mxu0
  %v3418 = vadd.f32 %v3399, %v3417
  %v3419 = vpop.f32.mrf.mxu0
  %v3420 = vadd.f32 %v3401, %v3419
  %3421 = vdwg.mxu0
  %3422 = vmatpush.bf16.msra.mxu0 %v2012
  %3423 = vmatpush.bf16.msra.mxu0 %v2008
  %3424 = vmatpush.bf16.msra.mxu0 %v2004
  %3425 = vmatpush.bf16.msra.mxu0 %v2000
  %3426 = vmatpush.bf16.msra.mxu0 %v1996
  %3427 = vmatpush.bf16.msra.mxu0 %v1992
  %3428 = vmatpush.bf16.msra.mxu0 %v1988
  %3429 = vmatpush.bf16.msra.mxu0 %v1984
  %3430 = vmatmul.bf16.gmra.mxu0 %v538
  %v3431 = vpop.f32.mrf.mxu0
  %v3432 = vadd.f32 %v3413, %v3431
  %v3433 = vpop.f32.mrf.mxu0
  %v3434 = vadd.f32 %v3415, %v3433
  %3435 = vmatmul.bf16.gmra.mxu0 %v551
  %v3436 = vpop.f32.mrf.mxu0
  %v3437 = vadd.f32 %v3418, %v3436
  %v3438 = vpop.f32.mrf.mxu0
  %v3439 = vadd.f32 %v3420, %v3438
  %3440 = vdwg.mxu0
  %3441 = vmatpush.bf16.msra.mxu0 %v2044
  %3442 = vmatpush.bf16.msra.mxu0 %v2040
  %3443 = vmatpush.bf16.msra.mxu0 %v2036
  %3444 = vmatpush.bf16.msra.mxu0 %v2032
  %3445 = vmatpush.bf16.msra.mxu0 %v2028
  %3446 = vmatpush.bf16.msra.mxu0 %v2024
  %3447 = vmatpush.bf16.msra.mxu0 %v2020
  %3448 = vmatpush.bf16.msra.mxu0 %v2016
  %3449 = vmatmul.bf16.gmra.mxu0 %v539
  %v3450 = vpop.f32.mrf.mxu0
  %v3451 = vadd.f32 %v3432, %v3450
  %v3452 = vpop.f32.mrf.mxu0
  %v3453 = vadd.f32 %v3434, %v3452
  %3454 = vmatmul.bf16.gmra.mxu0 %v552
  %v3455 = vpop.f32.mrf.mxu0
  %v3456 = vadd.f32 %v3437, %v3455
  %v3457 = vpop.f32.mrf.mxu0
  %v3458 = vadd.f32 %v3439, %v3457
  %3459 = vdwg.mxu0
  %3460 = vmatpush.bf16.msra.mxu0 %v2076
  %3461 = vmatpush.bf16.msra.mxu0 %v2072
  %3462 = vmatpush.bf16.msra.mxu0 %v2068
  %3463 = vmatpush.bf16.msra.mxu0 %v2064
  %3464 = vmatpush.bf16.msra.mxu0 %v2060
  %3465 = vmatpush.bf16.msra.mxu0 %v2056
  %3466 = vmatpush.bf16.msra.mxu0 %v2052
  %3467 = vmatpush.bf16.msra.mxu0 %v2048
  %3468 = vmatmul.bf16.gmra.mxu0 %v540
  %v3469 = vpop.f32.mrf.mxu0
  %v3470 = vadd.f32 %v3451, %v3469
  %v3471 = vpop.f32.mrf.mxu0
  %v3472 = vadd.f32 %v3453, %v3471
  %3473 = vmatmul.bf16.gmra.mxu0 %v553
  %v3474 = vpop.f32.mrf.mxu0
  %v3475 = vadd.f32 %v3456, %v3474
  %v3476 = vpop.f32.mrf.mxu0
  %v3477 = vadd.f32 %v3458, %v3476
  %3478 = vdwg.mxu0
  %3479 = vmatpush.bf16.msra.mxu0 %v2108
  %3480 = vmatpush.bf16.msra.mxu0 %v2104
  %3481 = vmatpush.bf16.msra.mxu0 %v2100
  %3482 = vmatpush.bf16.msra.mxu0 %v2096
  %3483 = vmatpush.bf16.msra.mxu0 %v2092
  %3484 = vmatpush.bf16.msra.mxu0 %v2088
  %3485 = vmatpush.bf16.msra.mxu0 %v2084
  %3486 = vmatpush.bf16.msra.mxu0 %v2080
  %3487 = vmatmul.bf16.gmra.mxu0 %v541
  %v3488 = vpop.f32.mrf.mxu0
  %v3489 = vadd.f32 %v3470, %v3488
  %v3490 = vpop.f32.mrf.mxu0
  %v3491 = vadd.f32 %v3472, %v3490
  %3492 = vmatmul.bf16.gmra.mxu0 %v554
  %v3493 = vpop.f32.mrf.mxu0
  %v3494 = vadd.f32 %v3475, %v3493
  %v3495 = vpop.f32.mrf.mxu0
  %v3496 = vadd.f32 %v3477, %v3495
  %3497 = vdwg.mxu0
  %3498 = vmatpush.bf16.msra.mxu0 %v2140
  %3499 = vmatpush.bf16.msra.mxu0 %v2136
  %3500 = vmatpush.bf16.msra.mxu0 %v2132
  %3501 = vmatpush.bf16.msra.mxu0 %v2128
  %3502 = vmatpush.bf16.msra.mxu0 %v2124
  %3503 = vmatpush.bf16.msra.mxu0 %v2120
  %3504 = vmatpush.bf16.msra.mxu0 %v2116
  %3505 = vmatpush.bf16.msra.mxu0 %v2112
  %3506 = vmatmul.bf16.gmra.mxu0 %v542
  %v3507 = vpop.f32.mrf.mxu0
  %v3508 = vadd.f32 %v3489, %v3507
  %v3509 = vpop.f32.mrf.mxu0
  %v3510 = vadd.f32 %v3491, %v3509
  %3511 = vmatmul.bf16.gmra.mxu0 %v555
  %v3512 = vpop.f32.mrf.mxu0
  %v3513 = vadd.f32 %v3494, %v3512
  %v3514 = vpop.f32.mrf.mxu0
  %v3515 = vadd.f32 %v3496, %v3514
  %3516 = vdwg.mxu0
  %3517 = vmatpush.bf16.msra.mxu0 0
  %3518 = vmatpush.bf16.msra.mxu0 0
  %3519 = vmatpush.bf16.msra.mxu0 0
  %3520 = vmatpush.bf16.msra.mxu0 0
  %3521 = vmatpush.bf16.msra.mxu0 0
  %3522 = vmatpush.bf16.msra.mxu0 0
  %3523 = vmatpush.bf16.msra.mxu0 %v2148
  %3524 = vmatpush.bf16.msra.mxu0 %v2144
  %3525 = vmatmul.bf16.gmra.mxu0 %v2543
  %v3526 = vpop.f32.mrf.mxu0
  %v3527 = vadd.f32 %v3508, %v3526
  %v3528 = vpop.f32.mrf.mxu0
  %v3529 = vadd.f32 %v3510, %v3528
  %3530 = vmatmul.bf16.gmra.mxu0 %v2546
  %v3531 = vpop.f32.mrf.mxu0
  %v3532 = vadd.f32 %v3513, %v3531
  %v3533 = vpop.f32.mrf.mxu0
  %v3534 = vadd.f32 %v3515, %v3533
  %3535 = vdwg.mxu0
  %v3536 = vmax.f32 %v2786, 0.0
  %v3537 = vmax.f32 %v3033, 0.0
  %v3538 = vmax.f32 %v3280, 0.0
  %v3539 = vmax.f32 %v3527, 0.0
  %v3540 = vmax.f32 %v2788, 0.0
  %v3541 = vmax.f32 %v3035, 0.0
  %v3542 = vmax.f32 %v3282, 0.0
  %v3543 = vmax.f32 %v3529, 0.0
  %v3544 = vmax.f32 %v2791, 0.0
  %v3545 = vmax.f32 %v3038, 0.0
  %v3546 = vmax.f32 %v3285, 0.0
  %v3547 = vmax.f32 %v3532, 0.0
  %v3548 = vmax.f32 %v2793, 0.0
  %v3549 = vmax.f32 %v3040, 0.0
  %v3550 = vmax.f32 %v3287, 0.0
  %v3551 = vmax.f32 %v3534, 0.0
  %v3552 = vpack.c.bf16 %v3540, %v3536
  %v3553 = vpack.c.bf16 %v3541, %v3537
  %v3554 = vpack.c.bf16 %v3542, %v3538
  %v3555 = vpack.c.bf16 %v3543, %v3539
  %v3556 = vpack.c.bf16 %v3548, %v3544
  %v3557 = vpack.c.bf16 %v3549, %v3545
  %v3558 = vpack.c.bf16 %v3550, %v3546
  %v3559 = vpack.c.bf16 %v3551, %v3547
  %v3560 = vld [vmem:[%s3] sm:$0xf]
  %v3561 = vld [vmem:[%s3 + $0x4] sm:$0xf]
  %v3562 = vld [vmem:[%s3 + $0x8] sm:$0xf]
  %v3563 = vld [vmem:[%s3 + $0xc] sm:$0xf]
  %v3564 = vld [vmem:[%s3 + $0x10] sm:$0xf]
  %v3565 = vld [vmem:[%s3 + $0x14] sm:$0xf]
  %v3566 = vld [vmem:[%s3 + $0x18] sm:$0xf]
  %v3567 = vld [vmem:[%s3 + $0x1c] sm:$0xf]
  %v3568 = vld [vmem:[%s3 + $0x20] sm:$0xf]
  %v3569 = vld [vmem:[%s3 + $0x24] sm:$0xf]
  %v3570 = vld [vmem:[%s3 + $0x28] sm:$0xf]
  %v3571 = vld [vmem:[%s3 + $0x2c] sm:$0xf]
  %v3572 = vld [vmem:[%s3 + $0x30] sm:$0xf]
  %v3573 = vld [vmem:[%s3 + $0x34] sm:$0xf]
  %v3574 = vld [vmem:[%s3 + $0x38] sm:$0xf]
  %v3575 = vld [vmem:[%s3 + $0x3c] sm:$0xf]
  %v3576 = vld [vmem:[%s3 + $0x40] sm:$0xf]
  %v3577 = vld [vmem:[%s3 + $0x44] sm:$0xf]
  %v3578 = vld [vmem:[%s3 + $0x48] sm:$0xf]
  %v3579 = vld [vmem:[%s3 + $0x4c] sm:$0xf]
  %v3580 = vld [vmem:[%s3 + $0x50] sm:$0xf]
  %v3581 = vld [vmem:[%s3 + $0x54] sm:$0xf]
  %v3582 = vld [vmem:[%s3 + $0x58] sm:$0xf]
  %v3583 = vld [vmem:[%s3 + $0x5c] sm:$0xf]
  %v3584 = vld [vmem:[%s3 + $0x60] sm:$0xf]
  %v3585 = vld [vmem:[%s3 + $0x64] sm:$0xf]
  %v3586 = vld [vmem:[%s3 + $0x68] sm:$0xf]
  %v3587 = vld [vmem:[%s3 + $0x6c] sm:$0xf]
  %v3588 = vld [vmem:[%s3 + $0x70] sm:$0xf]
  %v3589 = vld [vmem:[%s3 + $0x74] sm:$0xf]
  %v3590 = vld [vmem:[%s3 + $0x78] sm:$0xf]
  %v3591 = vld [vmem:[%s3 + $0x7c] sm:$0xf]
  %v3592 = vld [vmem:[%s3 + $0x80] sm:$0xf]
  %v3593 = vld [vmem:[%s3 + $0x84] sm:$0xf]
  %v3594 = vld [vmem:[%s3 + $0x88] sm:$0xf]
  %v3595 = vld [vmem:[%s3 + $0x8c] sm:$0xf]
  %v3596 = vld [vmem:[%s3 + $0x90] sm:$0xf]
  %v3597 = vld [vmem:[%s3 + $0x94] sm:$0xf]
  %v3598 = vld [vmem:[%s3 + $0x98] sm:$0xf]
  %v3599 = vld [vmem:[%s3 + $0x9c] sm:$0xf]
  %v3600 = vld [vmem:[%s3 + $0xa0] sm:$0xf]
  %v3601 = vld [vmem:[%s3 + $0xa4] sm:$0xf]
  %v3602 = vld [vmem:[%s3 + $0xa8] sm:$0xf]
  %v3603 = vld [vmem:[%s3 + $0xac] sm:$0xf]
  %v3604 = vld [vmem:[%s3 + $0xb0] sm:$0xf]
  %v3605 = vld [vmem:[%s3 + $0xb4] sm:$0xf]
  %v3606 = vld [vmem:[%s3 + $0xb8] sm:$0xf]
  %v3607 = vld [vmem:[%s3 + $0xbc] sm:$0xf]
  %v3608 = vld [vmem:[%s3 + $0xc0] sm:$0xf]
  %v3609 = vld [vmem:[%s3 + $0xc4] sm:$0xf]
  %v3610 = vld [vmem:[%s3 + $0xc8] sm:$0xf]
  %v3611 = vld [vmem:[%s3 + $0xcc] sm:$0xf]
  %v3612 = vld [vmem:[%s3 + $0xd0] sm:$0xf]
  %v3613 = vld [vmem:[%s3 + $0xd4] sm:$0xf]
  %v3614 = vld [vmem:[%s3 + $0xd8] sm:$0xf]
  %v3615 = vld [vmem:[%s3 + $0xdc] sm:$0xf]
  %v3616 = vld [vmem:[%s3 + $0xe0] sm:$0xf]
  %v3617 = vld [vmem:[%s3 + $0xe4] sm:$0xf]
  %v3618 = vld [vmem:[%s3 + $0xe8] sm:$0xf]
  %v3619 = vld [vmem:[%s3 + $0xec] sm:$0xf]
  %v3620 = vld [vmem:[%s3 + $0xf0] sm:$0xf]
  %v3621 = vld [vmem:[%s3 + $0xf4] sm:$0xf]
  %v3622 = vld [vmem:[%s3 + $0xf8] sm:$0xf]
  %v3623 = vld [vmem:[%s3 + $0xfc] sm:$0xf]
  %v3624 = vld [vmem:[%s4] sm:$0x1]
  %v3626 = vperm.slane %v3624, 0
  %v3692 = vunpack.c.l.b16 %v3560
  %v3693 = vunpack.c.l.b16 %v3561
  %v3694 = vunpack.c.l.b16 %v3562
  %v3695 = vunpack.c.l.b16 %v3563
  %v3696 = vunpack.c.l.b16 %v3564
  %v3697 = vunpack.c.l.b16 %v3565
  %v3698 = vunpack.c.l.b16 %v3566
  %v3699 = vunpack.c.l.b16 %v3567
  %v3700 = vunpack.c.l.b16 %v3568
  %v3701 = vunpack.c.l.b16 %v3569
  %v3702 = vunpack.c.l.b16 %v3570
  %v3703 = vunpack.c.l.b16 %v3571
  %v3704 = vunpack.c.l.b16 %v3572
  %v3705 = vunpack.c.l.b16 %v3573
  %v3706 = vunpack.c.l.b16 %v3574
  %v3707 = vunpack.c.l.b16 %v3575
  %v3708 = vunpack.c.l.b16 %v3576
  %v3709 = vunpack.c.l.b16 %v3577
  %v3710 = vunpack.c.l.b16 %v3578
  %v3711 = vunpack.c.l.b16 %v3579
  %v3712 = vunpack.c.l.b16 %v3580
  %v3713 = vunpack.c.l.b16 %v3581
  %v3714 = vunpack.c.l.b16 %v3582
  %v3715 = vunpack.c.l.b16 %v3583
  %v3716 = vunpack.c.l.b16 %v3584
  %v3717 = vunpack.c.l.b16 %v3585
  %v3718 = vunpack.c.l.b16 %v3586
  %v3719 = vunpack.c.l.b16 %v3587
  %v3720 = vunpack.c.l.b16 %v3588
  %v3721 = vunpack.c.l.b16 %v3589
  %v3722 = vunpack.c.l.b16 %v3590
  %v3723 = vunpack.c.l.b16 %v3591
  %v3724 = vunpack.c.l.b16 %v3592
  %v3725 = vunpack.c.l.b16 %v3593
  %v3726 = vunpack.c.l.b16 %v3594
  %v3727 = vunpack.c.l.b16 %v3595
  %v3728 = vunpack.c.l.b16 %v3596
  %v3729 = vunpack.c.l.b16 %v3597
  %v3730 = vunpack.c.l.b16 %v3598
  %v3731 = vunpack.c.l.b16 %v3599
  %v3732 = vunpack.c.l.b16 %v3600
  %v3733 = vunpack.c.l.b16 %v3601
  %v3734 = vunpack.c.l.b16 %v3602
  %v3735 = vunpack.c.l.b16 %v3603
  %v3736 = vunpack.c.l.b16 %v3604
  %v3737 = vunpack.c.l.b16 %v3605
  %v3738 = vunpack.c.l.b16 %v3606
  %v3739 = vunpack.c.l.b16 %v3607
  %v3740 = vunpack.c.l.b16 %v3608
  %v3741 = vunpack.c.l.b16 %v3609
  %v3742 = vunpack.c.l.b16 %v3610
  %v3743 = vunpack.c.l.b16 %v3611
  %v3744 = vunpack.c.l.b16 %v3612
  %v3745 = vunpack.c.l.b16 %v3613
  %v3746 = vunpack.c.l.b16 %v3614
  %v3747 = vunpack.c.l.b16 %v3615
  %v3748 = vunpack.c.l.b16 %v3616
  %v3749 = vunpack.c.l.b16 %v3617
  %v3750 = vunpack.c.l.b16 %v3618
  %v3751 = vunpack.c.l.b16 %v3619
  %v3752 = vunpack.c.l.b16 %v3620
  %v3753 = vunpack.c.l.b16 %v3621
  %v3754 = vunpack.c.l.b16 %v3622
  %v3755 = vunpack.c.l.b16 %v3623
  %v3756 = vpack.c.b16 %v3693, %v3692
  %v3757 = vpack.c.b16 %v3695, %v3694
  %v3758 = vpack.c.b16 %v3697, %v3696
  %v3759 = vpack.c.b16 %v3699, %v3698
  %v3760 = vpack.c.b16 %v3701, %v3700
  %v3761 = vpack.c.b16 %v3703, %v3702
  %v3762 = vpack.c.b16 %v3705, %v3704
  %v3763 = vpack.c.b16 %v3707, %v3706
  %v3764 = vpack.c.b16 %v3709, %v3708
  %v3765 = vpack.c.b16 %v3711, %v3710
  %v3766 = vpack.c.b16 %v3713, %v3712
  %v3767 = vpack.c.b16 %v3715, %v3714
  %v3768 = vpack.c.b16 %v3717, %v3716
  %v3769 = vpack.c.b16 %v3719, %v3718
  %v3770 = vpack.c.b16 %v3721, %v3720
  %v3771 = vpack.c.b16 %v3723, %v3722
  %v3772 = vpack.c.b16 %v3725, %v3724
  %v3773 = vpack.c.b16 %v3727, %v3726
  %v3774 = vpack.c.b16 %v3729, %v3728
  %v3775 = vpack.c.b16 %v3731, %v3730
  %v3776 = vpack.c.b16 %v3733, %v3732
  %v3777 = vpack.c.b16 %v3735, %v3734
  %v3778 = vpack.c.b16 %v3737, %v3736
  %v3779 = vpack.c.b16 %v3739, %v3738
  %v3780 = vpack.c.b16 %v3741, %v3740
  %v3781 = vpack.c.b16 %v3743, %v3742
  %v3782 = vpack.c.b16 %v3745, %v3744
  %v3783 = vpack.c.b16 %v3747, %v3746
  %v3784 = vpack.c.b16 %v3749, %v3748
  %v3785 = vpack.c.b16 %v3751, %v3750
  %v3786 = vpack.c.b16 %v3753, %v3752
  %v3787 = vpack.c.b16 %v3755, %v3754
  %3820 = vmatpush.bf16.msra.mxu0 %v3763
  %3821 = vmatpush.bf16.msra.mxu0 %v3762
  %3822 = vmatpush.bf16.msra.mxu0 %v3761
  %3823 = vmatpush.bf16.msra.mxu0 %v3760
  %3824 = vmatpush.bf16.msra.mxu0 %v3759
  %3825 = vmatpush.bf16.msra.mxu0 %v3758
  %3826 = vmatpush.bf16.msra.mxu0 %v3757
  %3827 = vmatpush.bf16.msra.mxu0 %v3756
  %3828 = vmatmul.bf16.gmra.mxu0 %v3552
  %v3829 = vpop.f32.mrf.mxu0
  %v3830 = vadd.f32 %v3626, %v3829
  %v3831 = vpop.f32.mrf.mxu0
  %v3832 = vadd.f32 %v3626, %v3831
  %3833 = vmatmul.bf16.gmra.mxu0 %v3556
  %v3834 = vpop.f32.mrf.mxu0
  %v3835 = vadd.f32 %v3626, %v3834
  %v3836 = vpop.f32.mrf.mxu0
  %v3837 = vadd.f32 %v3626, %v3836
  %3838 = vdwg.mxu0
  %3839 = vmatpush.bf16.msra.mxu0 %v3771
  %3840 = vmatpush.bf16.msra.mxu0 %v3770
  %3841 = vmatpush.bf16.msra.mxu0 %v3769
  %3842 = vmatpush.bf16.msra.mxu0 %v3768
  %3843 = vmatpush.bf16.msra.mxu0 %v3767
  %3844 = vmatpush.bf16.msra.mxu0 %v3766
  %3845 = vmatpush.bf16.msra.mxu0 %v3765
  %3846 = vmatpush.bf16.msra.mxu0 %v3764
  %3847 = vmatmul.bf16.gmra.mxu0 %v3553
  %v3848 = vpop.f32.mrf.mxu0
  %v3849 = vadd.f32 %v3830, %v3848
  %v3850 = vpop.f32.mrf.mxu0
  %v3851 = vadd.f32 %v3832, %v3850
  %3852 = vmatmul.bf16.gmra.mxu0 %v3557
  %v3853 = vpop.f32.mrf.mxu0
  %v3854 = vadd.f32 %v3835, %v3853
  %v3855 = vpop.f32.mrf.mxu0
  %v3856 = vadd.f32 %v3837, %v3855
  %3857 = vdwg.mxu0
  %3858 = vmatpush.bf16.msra.mxu0 %v3779
  %3859 = vmatpush.bf16.msra.mxu0 %v3778
  %3860 = vmatpush.bf16.msra.mxu0 %v3777
  %3861 = vmatpush.bf16.msra.mxu0 %v3776
  %3862 = vmatpush.bf16.msra.mxu0 %v3775
  %3863 = vmatpush.bf16.msra.mxu0 %v3774
  %3864 = vmatpush.bf16.msra.mxu0 %v3773
  %3865 = vmatpush.bf16.msra.mxu0 %v3772
  %3866 = vmatmul.bf16.gmra.mxu0 %v3554
  %v3867 = vpop.f32.mrf.mxu0
  %v3868 = vadd.f32 %v3849, %v3867
  %v3869 = vpop.f32.mrf.mxu0
  %v3870 = vadd.f32 %v3851, %v3869
  %3871 = vmatmul.bf16.gmra.mxu0 %v3558
  %v3872 = vpop.f32.mrf.mxu0
  %v3873 = vadd.f32 %v3854, %v3872
  %v3874 = vpop.f32.mrf.mxu0
  %v3875 = vadd.f32 %v3856, %v3874
  %3876 = vdwg.mxu0
  %3877 = vmatpush.bf16.msra.mxu0 %v3787
  %3878 = vmatpush.bf16.msra.mxu0 %v3786
  %3879 = vmatpush.bf16.msra.mxu0 %v3785
  %3880 = vmatpush.bf16.msra.mxu0 %v3784
  %3881 = vmatpush.bf16.msra.mxu0 %v3783
  %3882 = vmatpush.bf16.msra.mxu0 %v3782
  %3883 = vmatpush.bf16.msra.mxu0 %v3781
  %3884 = vmatpush.bf16.msra.mxu0 %v3780
  %3885 = vmatmul.bf16.gmra.mxu0 %v3555
  %v3886 = vpop.f32.mrf.mxu0
  %v3887 = vadd.f32 %v3868, %v3886
  %v3888 = vpop.f32.mrf.mxu0
  %v3889 = vadd.f32 %v3870, %v3888
  %3890 = vmatmul.bf16.gmra.mxu0 %v3559
  %v3891 = vpop.f32.mrf.mxu0
  %v3892 = vadd.f32 %v3873, %v3891
  %v3893 = vpop.f32.mrf.mxu0
  %v3894 = vadd.f32 %v3875, %v3893
  %3895 = vdwg.mxu0
  %3896 = vst [vmem:[%s5] sm:$0xff] %v3887
  %3897 = vst [vmem:[%s5 + $0x8] sm:$0xff] %v3889
  %3898 = vst [vmem:[%s5 + $0x10] sm:$0xff] %v3892
  %3899 = vst [vmem:[%s5 + $0x18] sm:$0xff] %v3894
  // Predicated region
  $region22: #{_lambda_.7} parent=0 // pred_check
    _
  $region23: #{_lambda_.7} parent=0 // pred_check_branch
    %3901 = sbr.rel (0) target = $region25
  $region24: #{_lambda_.7} parent=0 // pred_region
    _
  $region25: #{_lambda_.7} parent=0 // pred_fallthru
    _
  // Predicated region
  $region26: #{_lambda_.7} parent=0 // pred_check
    _
  $region27: #{_lambda_.7} parent=0 // pred_check_branch
    %3903 = sbr.rel (0) target = $region29
  $region28: #{_lambda_.7} parent=0 // pred_region
    _
  $region29: #{_lambda_.7} parent=0 // pred_fallthru
    _

</llo_original>
